<compile_context>
chip_gen: v5e
topology: v5e:2x2
jax: 0.10.0
libtpu: 0.0.40
codegen_flags: <defaults>
</compile_context>

<pallas_src>
import jax
import jax.numpy as jnp
from jax.experimental import pallas as pl
from jax.experimental.pallas import tpu as pltpu

KH, KW = 2, 4          # both conv kernels are (2, 4)
C1, C2 = 3, 6          # conv1 / conv2 output channels
NT = KH * KW           # taps per (cout, cin)
LANES = 128            # vreg lane width
SUBLANES = 8           # f32 sublanes


def _round_up(x, m):
    return (x + m - 1) // m * m


def _tree_sum(terms):
    """Balanced-tree reduction: breaks the serial vadd dependency chain."""
    terms = list(terms)
    while len(terms) > 1:
        nxt = [terms[i] + terms[i + 1] for i in range(0, len(terms) - 1, 2)]
        if len(terms) % 2:
            nxt.append(terms[-1])
        terms = nxt
    return terms[0]


# --------------------------- shape bookkeeping --------------------------------

def encoder_dims(B, H, W, D, BT=SUBLANES):
    """All derived static sizes for the fused kernel (stride-W padded layout)."""
    Ho1, Wo1 = H - KH + 1, W - KW + 1
    Ho2, Wo2 = Ho1 - KH + 1, Wo1 - KW + 1
    HW = H * W
    maxoff = (KH - 1) * W + (KW - 1)           # largest tap lane offset
    L2P = _round_up(Ho2 * W, LANES)            # conv2 slab, whole-vreg in lanes
    assert L2P % W == 0
    L1P = maxoff + L2P                         # conv1 slab covers all conv2 taps
    LX = _round_up(maxoff + L1P, LANES)        # padded flat-input length
    NP = _round_up(2 * D, LANES)               # lane-dense fc output width
    BT = max(SUBLANES, _round_up(BT, SUBLANES))
    BP = _round_up(max(B, BT), BT)             # padded batch
    # NOTE(v7x): with real batches, size BT against 64 MiB VMEM (<= ~1K rows) and
    # raise vmem_limit_bytes; v5e/v6e (128 MiB) allow larger row tiles.
    return dict(B=B, H=H, W=W, D=D, HW=HW, Ho1=Ho1, Wo1=Wo1, Ho2=Ho2, Wo2=Wo2,
                L1P=L1P, L2P=L2P, LX=LX, NP=NP, BT=BT, BP=BP,
                Kcat=C2 * L2P, F_in=C2 * Ho2 * Wo2)


# --------------------------- fused Pallas kernel -------------------------------

def _make_fused_kernel(dims):
    BT, W, D = dims["BT"], dims["W"], dims["D"]
    L1P, L2P, NP = dims["L1P"], dims["L2P"], dims["NP"]

    def kernel(x_ref, w1_ref, b1_ref, w2_ref, b2_ref, wfc_ref, bfc_ref, out_ref):
        # Input arrives already zero-padded in its final stride-W layout.
        x = x_ref[...]                                        # (BT, LX)

        # ---- conv1 (BN folded in) + ReLU: VPU MACs on lane-shifted views ------
        h1 = []
        for c in range(C1):
            terms = [w1_ref[c * NT + di * KW + dj]
                     * x[:, di * W + dj: di * W + dj + L1P]
                     for di in range(KH) for dj in range(KW)]
            h1.append(jnp.maximum(_tree_sum(terms) + b1_ref[c], 0.0))

        # ---- conv2 + ReLU ------------------------------------------------------
        h2 = []
        for co in range(C2):
            terms = []
            for ci in range(C1):
                base = (co * C1 + ci) * NT
                terms += [w2_ref[base + di * KW + dj]
                          * h1[ci][:, di * W + dj: di * W + dj + L2P]
                          for di in range(KH) for dj in range(KW)]
            h2.append(jnp.maximum(_tree_sum(terms) + b2_ref[co], 0.0))

        # ---- Dropout(p=0.1): eval-mode identity --------------------------------
        # TODO(synk): training-mode stochastic dropout mask not implemented.

        # ---- flatten + fc head: ONE lane-aligned matmul -------------------------
        # h2 slabs are 256-lane (whole-vreg) wide, so the concat is vreg-aligned
        # and the fc is a single K = C2*L2P MXU pass. Padded/garbage columns carry
        # zero fc weights (set once in prepare_params), so they never contribute.
        hcat = jnp.concatenate(h2, axis=1)                    # (BT, C2*L2P)
        p = jnp.dot(hcat, wfc_ref[...], preferred_element_type=jnp.float32)
        p = p + bfc_ref[...]                                  # (BT, NP)

        # exp() only on the log-std lanes; single unmasked lane-dense store.
        lane = jax.lax.broadcasted_iota(jnp.int32, (BT, NP), 1)
        is_std = jnp.logical_and(lane >= D, lane < 2 * D)
        out_ref[...] = jnp.where(is_std, jnp.exp(p), p)

    return kernel


def build_encoder_call(dims):
    BT, BP, LX, NP, Kcat = dims["BT"], dims["BP"], dims["LX"], dims["NP"], dims["Kcat"]
    L1P, L2P = dims["L1P"], dims["L2P"]

    smem = pl.BlockSpec(memory_space=pltpu.MemorySpace.SMEM)   # tiny scalar tables

    flops = BP * (2 * C1 * NT * L1P + 2 * C2 * C1 * NT * L2P + 2 * Kcat * NP)
    transcendentals = BP * NP
    bytes_accessed = 4 * (BP * LX + Kcat * NP + NP + BP * NP
                          + C1 * NT + C1 + C2 * C1 * NT + C2)

    return pl.pallas_call(
        _make_fused_kernel(dims),
        out_shape=jax.ShapeDtypeStruct((BP, NP), jnp.float32),
        grid=(BP // BT,),
        in_specs=[
            pl.BlockSpec((BT, LX), lambda b: (b, 0)),          # padded input rows
            smem, smem,                                        # conv1 w / b
            smem, smem,                                        # conv2 w / b
            pl.BlockSpec((Kcat, NP), lambda b: (0, 0)),        # fused fc weight
            pl.BlockSpec((1, NP), lambda b: (0, 0)),           # fc bias
        ],
        out_specs=pl.BlockSpec((BT, NP), lambda b: (b, 0)),
        compiler_params=pltpu.CompilerParams(
            dimension_semantics=("parallel",)),                # v7x 2nd TC
        cost_estimate=pl.CostEstimate(flops=flops,
                                      transcendentals=transcendentals,
                                      bytes_accessed=bytes_accessed),
    )


# --------------------------- one-time parameter prep ---------------------------

def prepare_params(params, dims):
    """Hoisted off the forward path: BN fold, weight flattening, fc pad/reshape."""
    W, D = dims["W"], dims["D"]
    Ho2, Wo2 = dims["Ho2"], dims["Wo2"]
    L2P, NP, F_in = dims["L2P"], dims["NP"], dims["F_in"]

    gamma, beta, rmean, rvar, eps = params["bn"]
    scale = (gamma / jnp.sqrt(rvar + eps))[0]
    shift = (beta - rmean * gamma / jnp.sqrt(rvar + eps))[0]
    # fold eval-mode BatchNorm2d(1) into conv1 (valid because Cin == 1).
    w1 = params["w1"] * scale
    b1 = params["b1"] + shift * params["w1"].sum(axis=(1, 2, 3))

    w_fc, b_fc = params["w_fc"], params["b_fc"]
    assert w_fc.shape == (2 * D, F_in)
    # (2D, F) -> (C2, Ho2, Wo2, 2D); zero-pad Wo2->W and Ho2->L2P//W rows;
    # flatten to a single (C2*L2P, 2D) matrix; zero-pad lanes 2D -> NP.
    wfc = w_fc.T.reshape(C2, Ho2, Wo2, 2 * D)
    wfc = jnp.pad(wfc, ((0, 0), (0, L2P // W - Ho2), (0, W - Wo2), (0, 0)))
    wfc = wfc.reshape(C2 * L2P, 2 * D)
    wfc = jnp.pad(wfc, ((0, 0), (0, NP - 2 * D))).astype(jnp.float32)
    bfc = jnp.pad(b_fc, (0, NP - 2 * D)).reshape(1, NP).astype(jnp.float32)

    return {
        "w1": w1.reshape(-1).astype(jnp.float32),              # (C1*KH*KW,)
        "b1": b1.astype(jnp.float32),                          # (C1,)
        "w2": params["w2"].reshape(-1).astype(jnp.float32),    # (C2*C1*KH*KW,)
        "b2": params["b2"].astype(jnp.float32),                # (C2,)
        "wfc": wfc,                                            # (C2*L2P, NP)
        "bfc": bfc,                                            # (1, NP)
    }


# --------------------------- forward path --------------------------------------

def conv_encoder_forward(X_nchw, prep, encoder_call, dims):
    """X_nchw: (B, 1, H, W) float32. Returns (mu, std), each (B, D_latent)."""
    B, D, HW = X_nchw.shape[0], dims["D"], dims["HW"]
    x = X_nchw.astype(jnp.float32).reshape(B, HW)              # Cin == 1 -> flat
    # One XLA pad outside the kernel: rows to BP (sublane-dense batch tile),
    # lanes to LX (stride-W conv layout). No in-kernel copy needed.
    xp = jnp.pad(x, ((0, dims["BP"] - B), (0, dims["LX"] - HW)))
    out = encoder_call(xp, prep["w1"], prep["b1"], prep["w2"], prep["b2"],
                       prep["wfc"], prep["bfc"])
    mu = out[:B, :D]
    std = out[:B, D:2 * D]                                     # exp() done in-kernel
    return mu, std


# --------------------------- pure-JAX reference ---------------------------------

def _reference(X, params, d_latent):
    gamma, beta, rmean, rvar, eps = params["bn"]
    s = (X - rmean.reshape(1, 1, 1, 1)) / jnp.sqrt(rvar.reshape(1, 1, 1, 1) + eps)
    s = s * gamma.reshape(1, 1, 1, 1) + beta.reshape(1, 1, 1, 1)
    dn = ("NCHW", "OIHW", "NCHW")
    s = jax.lax.conv_general_dilated(s, params["w1"], (1, 1), "VALID", dimension_numbers=dn)
    s = jax.nn.relu(s + params["b1"].reshape(1, -1, 1, 1))
    s = jax.lax.conv_general_dilated(s, params["w2"], (1, 1), "VALID", dimension_numbers=dn)
    s = jax.nn.relu(s + params["b2"].reshape(1, -1, 1, 1))
    flat = s.reshape(s.shape[0], -1)
    p = flat @ params["w_fc"].T + params["b_fc"]
    return p[:, :d_latent], jnp.exp(p[:, d_latent:])


# --------------------------- main -----------------------------------------------

if __name__ == "__main__":
    B, H, W = 2, 16, 16
    D_latent = 8

    key = jax.random.PRNGKey(0)
    kx, k1, k2, k3, k4, k5, k6 = jax.random.split(key, 7)

    # input: zeros and ones, shape (B, 1, H, W)
    X = jax.random.bernoulli(kx, 0.5, (B, 1, H, W)).astype(jnp.float32)

    dims = encoder_dims(B, H, W, D_latent)
    # flatten dim from actual shapes (the module's hard-coded 2592 is inconsistent
    # with its documented 28x28 input; we compute it from the real conv outputs)
    F_in = dims["F_in"]

    params = {
        "bn": (jnp.ones((1,), jnp.float32), jnp.zeros((1,), jnp.float32),
               jnp.zeros((1,), jnp.float32), jnp.ones((1,), jnp.float32), 1e-5),
        "w1": 0.1 * jax.random.normal(k1, (C1, 1, KH, KW), jnp.float32),
        "b1": 0.1 * jax.random.normal(k2, (C1,), jnp.float32),
        "w2": 0.1 * jax.random.normal(k3, (C2, C1, KH, KW), jnp.float32),
        "b2": 0.1 * jax.random.normal(k4, (C2,), jnp.float32),
        "w_fc": 0.05 * jax.random.normal(k5, (2 * D_latent, F_in), jnp.float32),
        "b_fc": 0.05 * jax.random.normal(k6, (2 * D_latent,), jnp.float32),
    }

    # One-time prep (off the forward path) + fused kernel build.
    prep = prepare_params(params, dims)
    encoder_call = build_encoder_call(dims)

    mu, std = conv_encoder_forward(X, prep, encoder_call, dims)
    jax.block_until_ready((mu, std))

    mu_ref, std_ref = _reference(X, params, D_latent)
    assert mu.shape == (B, D_latent) and std.shape == (B, D_latent)
    assert jnp.allclose(mu, mu_ref, atol=1e-3, rtol=1e-3)
    assert jnp.allclose(std, std_ref, atol=1e-3, rtol=1e-3)

    print("KERNEL_OK")
</pallas_src>

<mosaic_0001>
module attributes {stable_mosaic.version = 11 : i64} {
  func.func @kernel(%arg0: i32, %arg1: memref<8x384xf32, #tpu.memory_space<vmem>>, %arg2: memref<24xf32, #tpu.memory_space<smem>>, %arg3: memref<3xf32, #tpu.memory_space<smem>>, %arg4: memref<144xf32, #tpu.memory_space<smem>>, %arg5: memref<6xf32, #tpu.memory_space<smem>>, %arg6: memref<1536x128xf32, #tpu.memory_space<vmem>>, %arg7: memref<1x128xf32, #tpu.memory_space<vmem>>, %arg8: memref<8x128xf32, #tpu.memory_space<vmem>>) attributes {dimension_semantics = [#tpu.dimension_semantics<parallel>], iteration_bounds = array<i64: 1>, scalar_prefetch = 0 : i64, scratch_operands = 0 : i64, tpu.core_type = #tpu.core_type<tc>, window_params = [{transform_indices = @transform_0, window_bounds = array<i64: 8, 384>}, {transform_indices = @transform_1, window_bounds = array<i64: 24>}, {transform_indices = @transform_2, window_bounds = array<i64: 3>}, {transform_indices = @transform_3, window_bounds = array<i64: 144>}, {transform_indices = @transform_4, window_bounds = array<i64: 6>}, {pipeline_mode = #tpu.pipeline_mode<synchronous>, transform_indices = @transform_5, window_bounds = array<i64: 1536, 128>}, {pipeline_mode = #tpu.pipeline_mode<synchronous>, transform_indices = @transform_6, window_bounds = array<i64: 1, 128>}, {transform_indices = @transform_7, window_bounds = array<i64: 8, 128>}]} {
    %c0 = arith.constant 0 : index
    %c0_0 = arith.constant 0 : index
    %0 = vector.load %arg1[%c0, %c0_0] : memref<8x384xf32, #tpu.memory_space<vmem>>, vector<8x384xf32>
    %c0_1 = arith.constant 0 : index
    %1 = memref.load %arg2[%c0_1] : memref<24xf32, #tpu.memory_space<smem>>
    %2 = vector.extract_strided_slice %0 {offsets = [0, 0], sizes = [8, 275], strides = [1, 1]} : vector<8x384xf32> to vector<8x275xf32>
    %3 = vector.broadcast %1 : f32 to vector<8x275xf32>
    %4 = arith.mulf %3, %2 : vector<8x275xf32>
    %c1 = arith.constant 1 : index
    %5 = memref.load %arg2[%c1] : memref<24xf32, #tpu.memory_space<smem>>
    %6 = vector.extract_strided_slice %0 {offsets = [0, 1], sizes = [8, 275], strides = [1, 1]} : vector<8x384xf32> to vector<8x275xf32>
    %7 = vector.broadcast %5 : f32 to vector<8x275xf32>
    %8 = arith.mulf %7, %6 : vector<8x275xf32>
    %c2 = arith.constant 2 : index
    %9 = memref.load %arg2[%c2] : memref<24xf32, #tpu.memory_space<smem>>
    %10 = vector.extract_strided_slice %0 {offsets = [0, 2], sizes = [8, 275], strides = [1, 1]} : vector<8x384xf32> to vector<8x275xf32>
    %11 = vector.broadcast %9 : f32 to vector<8x275xf32>
    %12 = arith.mulf %11, %10 : vector<8x275xf32>
    %c3 = arith.constant 3 : index
    %13 = memref.load %arg2[%c3] : memref<24xf32, #tpu.memory_space<smem>>
    %14 = vector.extract_strided_slice %0 {offsets = [0, 3], sizes = [8, 275], strides = [1, 1]} : vector<8x384xf32> to vector<8x275xf32>
    %15 = vector.broadcast %13 : f32 to vector<8x275xf32>
    %16 = arith.mulf %15, %14 : vector<8x275xf32>
    %c4 = arith.constant 4 : index
    %17 = memref.load %arg2[%c4] : memref<24xf32, #tpu.memory_space<smem>>
    %18 = vector.extract_strided_slice %0 {offsets = [0, 16], sizes = [8, 275], strides = [1, 1]} : vector<8x384xf32> to vector<8x275xf32>
    %19 = vector.broadcast %17 : f32 to vector<8x275xf32>
    %20 = arith.mulf %19, %18 : vector<8x275xf32>
    %c5 = arith.constant 5 : index
    %21 = memref.load %arg2[%c5] : memref<24xf32, #tpu.memory_space<smem>>
    %22 = vector.extract_strided_slice %0 {offsets = [0, 17], sizes = [8, 275], strides = [1, 1]} : vector<8x384xf32> to vector<8x275xf32>
    %23 = vector.broadcast %21 : f32 to vector<8x275xf32>
    %24 = arith.mulf %23, %22 : vector<8x275xf32>
    %c6 = arith.constant 6 : index
    %25 = memref.load %arg2[%c6] : memref<24xf32, #tpu.memory_space<smem>>
    %26 = vector.extract_strided_slice %0 {offsets = [0, 18], sizes = [8, 275], strides = [1, 1]} : vector<8x384xf32> to vector<8x275xf32>
    %27 = vector.broadcast %25 : f32 to vector<8x275xf32>
    %28 = arith.mulf %27, %26 : vector<8x275xf32>
    %c7 = arith.constant 7 : index
    %29 = memref.load %arg2[%c7] : memref<24xf32, #tpu.memory_space<smem>>
    %30 = vector.extract_strided_slice %0 {offsets = [0, 19], sizes = [8, 275], strides = [1, 1]} : vector<8x384xf32> to vector<8x275xf32>
    %31 = vector.broadcast %29 : f32 to vector<8x275xf32>
    %32 = arith.mulf %31, %30 : vector<8x275xf32>
    %33 = arith.addf %4, %8 : vector<8x275xf32>
    %34 = arith.addf %12, %16 : vector<8x275xf32>
    %35 = arith.addf %20, %24 : vector<8x275xf32>
    %36 = arith.addf %28, %32 : vector<8x275xf32>
    %37 = arith.addf %33, %34 : vector<8x275xf32>
    %38 = arith.addf %35, %36 : vector<8x275xf32>
    %39 = arith.addf %37, %38 : vector<8x275xf32>
    %c0_2 = arith.constant 0 : index
    %40 = memref.load %arg3[%c0_2] : memref<3xf32, #tpu.memory_space<smem>>
    %41 = vector.broadcast %40 : f32 to vector<8x275xf32>
    %42 = arith.addf %39, %41 : vector<8x275xf32>
    %cst = arith.constant 0.000000e+00 : f32
    %43 = vector.broadcast %cst : f32 to vector<8x275xf32>
    %44 = arith.maximumf %42, %43 : vector<8x275xf32>
    %c8 = arith.constant 8 : index
    %45 = memref.load %arg2[%c8] : memref<24xf32, #tpu.memory_space<smem>>
    %46 = vector.extract_strided_slice %0 {offsets = [0, 0], sizes = [8, 275], strides = [1, 1]} : vector<8x384xf32> to vector<8x275xf32>
    %47 = vector.broadcast %45 : f32 to vector<8x275xf32>
    %48 = arith.mulf %47, %46 : vector<8x275xf32>
    %c9 = arith.constant 9 : index
    %49 = memref.load %arg2[%c9] : memref<24xf32, #tpu.memory_space<smem>>
    %50 = vector.extract_strided_slice %0 {offsets = [0, 1], sizes = [8, 275], strides = [1, 1]} : vector<8x384xf32> to vector<8x275xf32>
    %51 = vector.broadcast %49 : f32 to vector<8x275xf32>
    %52 = arith.mulf %51, %50 : vector<8x275xf32>
    %c10 = arith.constant 10 : index
    %53 = memref.load %arg2[%c10] : memref<24xf32, #tpu.memory_space<smem>>
    %54 = vector.extract_strided_slice %0 {offsets = [0, 2], sizes = [8, 275], strides = [1, 1]} : vector<8x384xf32> to vector<8x275xf32>
    %55 = vector.broadcast %53 : f32 to vector<8x275xf32>
    %56 = arith.mulf %55, %54 : vector<8x275xf32>
    %c11 = arith.constant 11 : index
    %57 = memref.load %arg2[%c11] : memref<24xf32, #tpu.memory_space<smem>>
    %58 = vector.extract_strided_slice %0 {offsets = [0, 3], sizes = [8, 275], strides = [1, 1]} : vector<8x384xf32> to vector<8x275xf32>
    %59 = vector.broadcast %57 : f32 to vector<8x275xf32>
    %60 = arith.mulf %59, %58 : vector<8x275xf32>
    %c12 = arith.constant 12 : index
    %61 = memref.load %arg2[%c12] : memref<24xf32, #tpu.memory_space<smem>>
    %62 = vector.extract_strided_slice %0 {offsets = [0, 16], sizes = [8, 275], strides = [1, 1]} : vector<8x384xf32> to vector<8x275xf32>
    %63 = vector.broadcast %61 : f32 to vector<8x275xf32>
    %64 = arith.mulf %63, %62 : vector<8x275xf32>
    %c13 = arith.constant 13 : index
    %65 = memref.load %arg2[%c13] : memref<24xf32, #tpu.memory_space<smem>>
    %66 = vector.extract_strided_slice %0 {offsets = [0, 17], sizes = [8, 275], strides = [1, 1]} : vector<8x384xf32> to vector<8x275xf32>
    %67 = vector.broadcast %65 : f32 to vector<8x275xf32>
    %68 = arith.mulf %67, %66 : vector<8x275xf32>
    %c14 = arith.constant 14 : index
    %69 = memref.load %arg2[%c14] : memref<24xf32, #tpu.memory_space<smem>>
    %70 = vector.extract_strided_slice %0 {offsets = [0, 18], sizes = [8, 275], strides = [1, 1]} : vector<8x384xf32> to vector<8x275xf32>
    %71 = vector.broadcast %69 : f32 to vector<8x275xf32>
    %72 = arith.mulf %71, %70 : vector<8x275xf32>
    %c15 = arith.constant 15 : index
    %73 = memref.load %arg2[%c15] : memref<24xf32, #tpu.memory_space<smem>>
    %74 = vector.extract_strided_slice %0 {offsets = [0, 19], sizes = [8, 275], strides = [1, 1]} : vector<8x384xf32> to vector<8x275xf32>
    %75 = vector.broadcast %73 : f32 to vector<8x275xf32>
    %76 = arith.mulf %75, %74 : vector<8x275xf32>
    %77 = arith.addf %48, %52 : vector<8x275xf32>
    %78 = arith.addf %56, %60 : vector<8x275xf32>
    %79 = arith.addf %64, %68 : vector<8x275xf32>
    %80 = arith.addf %72, %76 : vector<8x275xf32>
    %81 = arith.addf %77, %78 : vector<8x275xf32>
    %82 = arith.addf %79, %80 : vector<8x275xf32>
    %83 = arith.addf %81, %82 : vector<8x275xf32>
    %c1_3 = arith.constant 1 : index
    %84 = memref.load %arg3[%c1_3] : memref<3xf32, #tpu.memory_space<smem>>
    %85 = vector.broadcast %84 : f32 to vector<8x275xf32>
    %86 = arith.addf %83, %85 : vector<8x275xf32>
    %cst_4 = arith.constant 0.000000e+00 : f32
    %87 = vector.broadcast %cst_4 : f32 to vector<8x275xf32>
    %88 = arith.maximumf %86, %87 : vector<8x275xf32>
    %c16 = arith.constant 16 : index
    %89 = memref.load %arg2[%c16] : memref<24xf32, #tpu.memory_space<smem>>
    %90 = vector.extract_strided_slice %0 {offsets = [0, 0], sizes = [8, 275], strides = [1, 1]} : vector<8x384xf32> to vector<8x275xf32>
    %91 = vector.broadcast %89 : f32 to vector<8x275xf32>
    %92 = arith.mulf %91, %90 : vector<8x275xf32>
    %c17 = arith.constant 17 : index
    %93 = memref.load %arg2[%c17] : memref<24xf32, #tpu.memory_space<smem>>
    %94 = vector.extract_strided_slice %0 {offsets = [0, 1], sizes = [8, 275], strides = [1, 1]} : vector<8x384xf32> to vector<8x275xf32>
    %95 = vector.broadcast %93 : f32 to vector<8x275xf32>
    %96 = arith.mulf %95, %94 : vector<8x275xf32>
    %c18 = arith.constant 18 : index
    %97 = memref.load %arg2[%c18] : memref<24xf32, #tpu.memory_space<smem>>
    %98 = vector.extract_strided_slice %0 {offsets = [0, 2], sizes = [8, 275], strides = [1, 1]} : vector<8x384xf32> to vector<8x275xf32>
    %99 = vector.broadcast %97 : f32 to vector<8x275xf32>
    %100 = arith.mulf %99, %98 : vector<8x275xf32>
    %c19 = arith.constant 19 : index
    %101 = memref.load %arg2[%c19] : memref<24xf32, #tpu.memory_space<smem>>
    %102 = vector.extract_strided_slice %0 {offsets = [0, 3], sizes = [8, 275], strides = [1, 1]} : vector<8x384xf32> to vector<8x275xf32>
    %103 = vector.broadcast %101 : f32 to vector<8x275xf32>
    %104 = arith.mulf %103, %102 : vector<8x275xf32>
    %c20 = arith.constant 20 : index
    %105 = memref.load %arg2[%c20] : memref<24xf32, #tpu.memory_space<smem>>
    %106 = vector.extract_strided_slice %0 {offsets = [0, 16], sizes = [8, 275], strides = [1, 1]} : vector<8x384xf32> to vector<8x275xf32>
    %107 = vector.broadcast %105 : f32 to vector<8x275xf32>
    %108 = arith.mulf %107, %106 : vector<8x275xf32>
    %c21 = arith.constant 21 : index
    %109 = memref.load %arg2[%c21] : memref<24xf32, #tpu.memory_space<smem>>
    %110 = vector.extract_strided_slice %0 {offsets = [0, 17], sizes = [8, 275], strides = [1, 1]} : vector<8x384xf32> to vector<8x275xf32>
    %111 = vector.broadcast %109 : f32 to vector<8x275xf32>
    %112 = arith.mulf %111, %110 : vector<8x275xf32>
    %c22 = arith.constant 22 : index
    %113 = memref.load %arg2[%c22] : memref<24xf32, #tpu.memory_space<smem>>
    %114 = vector.extract_strided_slice %0 {offsets = [0, 18], sizes = [8, 275], strides = [1, 1]} : vector<8x384xf32> to vector<8x275xf32>
    %115 = vector.broadcast %113 : f32 to vector<8x275xf32>
    %116 = arith.mulf %115, %114 : vector<8x275xf32>
    %c23 = arith.constant 23 : index
    %117 = memref.load %arg2[%c23] : memref<24xf32, #tpu.memory_space<smem>>
    %118 = vector.extract_strided_slice %0 {offsets = [0, 19], sizes = [8, 275], strides = [1, 1]} : vector<8x384xf32> to vector<8x275xf32>
    %119 = vector.broadcast %117 : f32 to vector<8x275xf32>
    %120 = arith.mulf %119, %118 : vector<8x275xf32>
    %121 = arith.addf %92, %96 : vector<8x275xf32>
    %122 = arith.addf %100, %104 : vector<8x275xf32>
    %123 = arith.addf %108, %112 : vector<8x275xf32>
    %124 = arith.addf %116, %120 : vector<8x275xf32>
    %125 = arith.addf %121, %122 : vector<8x275xf32>
    %126 = arith.addf %123, %124 : vector<8x275xf32>
    %127 = arith.addf %125, %126 : vector<8x275xf32>
    %c2_5 = arith.constant 2 : index
    %128 = memref.load %arg3[%c2_5] : memref<3xf32, #tpu.memory_space<smem>>
    %129 = vector.broadcast %128 : f32 to vector<8x275xf32>
    %130 = arith.addf %127, %129 : vector<8x275xf32>
    %cst_6 = arith.constant 0.000000e+00 : f32
    %131 = vector.broadcast %cst_6 : f32 to vector<8x275xf32>
    %132 = arith.maximumf %130, %131 : vector<8x275xf32>
    %c0_7 = arith.constant 0 : index
    %133 = memref.load %arg4[%c0_7] : memref<144xf32, #tpu.memory_space<smem>>
    %134 = vector.extract_strided_slice %44 {offsets = [0, 0], sizes = [8, 256], strides = [1, 1]} : vector<8x275xf32> to vector<8x256xf32>
    %135 = vector.broadcast %133 : f32 to vector<8x256xf32>
    %136 = arith.mulf %135, %134 : vector<8x256xf32>
    %c1_8 = arith.constant 1 : index
    %137 = memref.load %arg4[%c1_8] : memref<144xf32, #tpu.memory_space<smem>>
    %138 = vector.extract_strided_slice %44 {offsets = [0, 1], sizes = [8, 256], strides = [1, 1]} : vector<8x275xf32> to vector<8x256xf32>
    %139 = vector.broadcast %137 : f32 to vector<8x256xf32>
    %140 = arith.mulf %139, %138 : vector<8x256xf32>
    %c2_9 = arith.constant 2 : index
    %141 = memref.load %arg4[%c2_9] : memref<144xf32, #tpu.memory_space<smem>>
    %142 = vector.extract_strided_slice %44 {offsets = [0, 2], sizes = [8, 256], strides = [1, 1]} : vector<8x275xf32> to vector<8x256xf32>
    %143 = vector.broadcast %141 : f32 to vector<8x256xf32>
    %144 = arith.mulf %143, %142 : vector<8x256xf32>
    %c3_10 = arith.constant 3 : index
    %145 = memref.load %arg4[%c3_10] : memref<144xf32, #tpu.memory_space<smem>>
    %146 = vector.extract_strided_slice %44 {offsets = [0, 3], sizes = [8, 256], strides = [1, 1]} : vector<8x275xf32> to vector<8x256xf32>
    %147 = vector.broadcast %145 : f32 to vector<8x256xf32>
    %148 = arith.mulf %147, %146 : vector<8x256xf32>
    %c4_11 = arith.constant 4 : index
    %149 = memref.load %arg4[%c4_11] : memref<144xf32, #tpu.memory_space<smem>>
    %150 = vector.extract_strided_slice %44 {offsets = [0, 16], sizes = [8, 256], strides = [1, 1]} : vector<8x275xf32> to vector<8x256xf32>
    %151 = vector.broadcast %149 : f32 to vector<8x256xf32>
    %152 = arith.mulf %151, %150 : vector<8x256xf32>
    %c5_12 = arith.constant 5 : index
    %153 = memref.load %arg4[%c5_12] : memref<144xf32, #tpu.memory_space<smem>>
    %154 = vector.extract_strided_slice %44 {offsets = [0, 17], sizes = [8, 256], strides = [1, 1]} : vector<8x275xf32> to vector<8x256xf32>
    %155 = vector.broadcast %153 : f32 to vector<8x256xf32>
    %156 = arith.mulf %155, %154 : vector<8x256xf32>
    %c6_13 = arith.constant 6 : index
    %157 = memref.load %arg4[%c6_13] : memref<144xf32, #tpu.memory_space<smem>>
    %158 = vector.extract_strided_slice %44 {offsets = [0, 18], sizes = [8, 256], strides = [1, 1]} : vector<8x275xf32> to vector<8x256xf32>
    %159 = vector.broadcast %157 : f32 to vector<8x256xf32>
    %160 = arith.mulf %159, %158 : vector<8x256xf32>
    %c7_14 = arith.constant 7 : index
    %161 = memref.load %arg4[%c7_14] : memref<144xf32, #tpu.memory_space<smem>>
    %162 = vector.extract_strided_slice %44 {offsets = [0, 19], sizes = [8, 256], strides = [1, 1]} : vector<8x275xf32> to vector<8x256xf32>
    %163 = vector.broadcast %161 : f32 to vector<8x256xf32>
    %164 = arith.mulf %163, %162 : vector<8x256xf32>
    %c8_15 = arith.constant 8 : index
    %165 = memref.load %arg4[%c8_15] : memref<144xf32, #tpu.memory_space<smem>>
    %166 = vector.extract_strided_slice %88 {offsets = [0, 0], sizes = [8, 256], strides = [1, 1]} : vector<8x275xf32> to vector<8x256xf32>
    %167 = vector.broadcast %165 : f32 to vector<8x256xf32>
    %168 = arith.mulf %167, %166 : vector<8x256xf32>
    %c9_16 = arith.constant 9 : index
    %169 = memref.load %arg4[%c9_16] : memref<144xf32, #tpu.memory_space<smem>>
    %170 = vector.extract_strided_slice %88 {offsets = [0, 1], sizes = [8, 256], strides = [1, 1]} : vector<8x275xf32> to vector<8x256xf32>
    %171 = vector.broadcast %169 : f32 to vector<8x256xf32>
    %172 = arith.mulf %171, %170 : vector<8x256xf32>
    %c10_17 = arith.constant 10 : index
    %173 = memref.load %arg4[%c10_17] : memref<144xf32, #tpu.memory_space<smem>>
    %174 = vector.extract_strided_slice %88 {offsets = [0, 2], sizes = [8, 256], strides = [1, 1]} : vector<8x275xf32> to vector<8x256xf32>
    %175 = vector.broadcast %173 : f32 to vector<8x256xf32>
    %176 = arith.mulf %175, %174 : vector<8x256xf32>
    %c11_18 = arith.constant 11 : index
    %177 = memref.load %arg4[%c11_18] : memref<144xf32, #tpu.memory_space<smem>>
    %178 = vector.extract_strided_slice %88 {offsets = [0, 3], sizes = [8, 256], strides = [1, 1]} : vector<8x275xf32> to vector<8x256xf32>
    %179 = vector.broadcast %177 : f32 to vector<8x256xf32>
    %180 = arith.mulf %179, %178 : vector<8x256xf32>
    %c12_19 = arith.constant 12 : index
    %181 = memref.load %arg4[%c12_19] : memref<144xf32, #tpu.memory_space<smem>>
    %182 = vector.extract_strided_slice %88 {offsets = [0, 16], sizes = [8, 256], strides = [1, 1]} : vector<8x275xf32> to vector<8x256xf32>
    %183 = vector.broadcast %181 : f32 to vector<8x256xf32>
    %184 = arith.mulf %183, %182 : vector<8x256xf32>
    %c13_20 = arith.constant 13 : index
    %185 = memref.load %arg4[%c13_20] : memref<144xf32, #tpu.memory_space<smem>>
    %186 = vector.extract_strided_slice %88 {offsets = [0, 17], sizes = [8, 256], strides = [1, 1]} : vector<8x275xf32> to vector<8x256xf32>
    %187 = vector.broadcast %185 : f32 to vector<8x256xf32>
    %188 = arith.mulf %187, %186 : vector<8x256xf32>
    %c14_21 = arith.constant 14 : index
    %189 = memref.load %arg4[%c14_21] : memref<144xf32, #tpu.memory_space<smem>>
    %190 = vector.extract_strided_slice %88 {offsets = [0, 18], sizes = [8, 256], strides = [1, 1]} : vector<8x275xf32> to vector<8x256xf32>
    %191 = vector.broadcast %189 : f32 to vector<8x256xf32>
    %192 = arith.mulf %191, %190 : vector<8x256xf32>
    %c15_22 = arith.constant 15 : index
    %193 = memref.load %arg4[%c15_22] : memref<144xf32, #tpu.memory_space<smem>>
    %194 = vector.extract_strided_slice %88 {offsets = [0, 19], sizes = [8, 256], strides = [1, 1]} : vector<8x275xf32> to vector<8x256xf32>
    %195 = vector.broadcast %193 : f32 to vector<8x256xf32>
    %196 = arith.mulf %195, %194 : vector<8x256xf32>
    %c16_23 = arith.constant 16 : index
    %197 = memref.load %arg4[%c16_23] : memref<144xf32, #tpu.memory_space<smem>>
    %198 = vector.extract_strided_slice %132 {offsets = [0, 0], sizes = [8, 256], strides = [1, 1]} : vector<8x275xf32> to vector<8x256xf32>
    %199 = vector.broadcast %197 : f32 to vector<8x256xf32>
    %200 = arith.mulf %199, %198 : vector<8x256xf32>
    %c17_24 = arith.constant 17 : index
    %201 = memref.load %arg4[%c17_24] : memref<144xf32, #tpu.memory_space<smem>>
    %202 = vector.extract_strided_slice %132 {offsets = [0, 1], sizes = [8, 256], strides = [1, 1]} : vector<8x275xf32> to vector<8x256xf32>
    %203 = vector.broadcast %201 : f32 to vector<8x256xf32>
    %204 = arith.mulf %203, %202 : vector<8x256xf32>
    %c18_25 = arith.constant 18 : index
    %205 = memref.load %arg4[%c18_25] : memref<144xf32, #tpu.memory_space<smem>>
    %206 = vector.extract_strided_slice %132 {offsets = [0, 2], sizes = [8, 256], strides = [1, 1]} : vector<8x275xf32> to vector<8x256xf32>
    %207 = vector.broadcast %205 : f32 to vector<8x256xf32>
    %208 = arith.mulf %207, %206 : vector<8x256xf32>
    %c19_26 = arith.constant 19 : index
    %209 = memref.load %arg4[%c19_26] : memref<144xf32, #tpu.memory_space<smem>>
    %210 = vector.extract_strided_slice %132 {offsets = [0, 3], sizes = [8, 256], strides = [1, 1]} : vector<8x275xf32> to vector<8x256xf32>
    %211 = vector.broadcast %209 : f32 to vector<8x256xf32>
    %212 = arith.mulf %211, %210 : vector<8x256xf32>
    %c20_27 = arith.constant 20 : index
    %213 = memref.load %arg4[%c20_27] : memref<144xf32, #tpu.memory_space<smem>>
    %214 = vector.extract_strided_slice %132 {offsets = [0, 16], sizes = [8, 256], strides = [1, 1]} : vector<8x275xf32> to vector<8x256xf32>
    %215 = vector.broadcast %213 : f32 to vector<8x256xf32>
    %216 = arith.mulf %215, %214 : vector<8x256xf32>
    %c21_28 = arith.constant 21 : index
    %217 = memref.load %arg4[%c21_28] : memref<144xf32, #tpu.memory_space<smem>>
    %218 = vector.extract_strided_slice %132 {offsets = [0, 17], sizes = [8, 256], strides = [1, 1]} : vector<8x275xf32> to vector<8x256xf32>
    %219 = vector.broadcast %217 : f32 to vector<8x256xf32>
    %220 = arith.mulf %219, %218 : vector<8x256xf32>
    %c22_29 = arith.constant 22 : index
    %221 = memref.load %arg4[%c22_29] : memref<144xf32, #tpu.memory_space<smem>>
    %222 = vector.extract_strided_slice %132 {offsets = [0, 18], sizes = [8, 256], strides = [1, 1]} : vector<8x275xf32> to vector<8x256xf32>
    %223 = vector.broadcast %221 : f32 to vector<8x256xf32>
    %224 = arith.mulf %223, %222 : vector<8x256xf32>
    %c23_30 = arith.constant 23 : index
    %225 = memref.load %arg4[%c23_30] : memref<144xf32, #tpu.memory_space<smem>>
    %226 = vector.extract_strided_slice %132 {offsets = [0, 19], sizes = [8, 256], strides = [1, 1]} : vector<8x275xf32> to vector<8x256xf32>
    %227 = vector.broadcast %225 : f32 to vector<8x256xf32>
    %228 = arith.mulf %227, %226 : vector<8x256xf32>
    %229 = arith.addf %136, %140 : vector<8x256xf32>
    %230 = arith.addf %144, %148 : vector<8x256xf32>
    %231 = arith.addf %152, %156 : vector<8x256xf32>
    %232 = arith.addf %160, %164 : vector<8x256xf32>
    %233 = arith.addf %168, %172 : vector<8x256xf32>
    %234 = arith.addf %176, %180 : vector<8x256xf32>
    %235 = arith.addf %184, %188 : vector<8x256xf32>
    %236 = arith.addf %192, %196 : vector<8x256xf32>
    %237 = arith.addf %200, %204 : vector<8x256xf32>
    %238 = arith.addf %208, %212 : vector<8x256xf32>
    %239 = arith.addf %216, %220 : vector<8x256xf32>
    %240 = arith.addf %224, %228 : vector<8x256xf32>
    %241 = arith.addf %229, %230 : vector<8x256xf32>
    %242 = arith.addf %231, %232 : vector<8x256xf32>
    %243 = arith.addf %233, %234 : vector<8x256xf32>
    %244 = arith.addf %235, %236 : vector<8x256xf32>
    %245 = arith.addf %237, %238 : vector<8x256xf32>
    %246 = arith.addf %239, %240 : vector<8x256xf32>
    %247 = arith.addf %241, %242 : vector<8x256xf32>
    %248 = arith.addf %243, %244 : vector<8x256xf32>
    %249 = arith.addf %245, %246 : vector<8x256xf32>
    %250 = arith.addf %247, %248 : vector<8x256xf32>
    %251 = arith.addf %250, %249 : vector<8x256xf32>
    %c0_31 = arith.constant 0 : index
    %252 = memref.load %arg5[%c0_31] : memref<6xf32, #tpu.memory_space<smem>>
    %253 = vector.broadcast %252 : f32 to vector<8x256xf32>
    %254 = arith.addf %251, %253 : vector<8x256xf32>
    %cst_32 = arith.constant 0.000000e+00 : f32
    %255 = vector.broadcast %cst_32 : f32 to vector<8x256xf32>
    %256 = arith.maximumf %254, %255 : vector<8x256xf32>
    %c24 = arith.constant 24 : index
    %257 = memref.load %arg4[%c24] : memref<144xf32, #tpu.memory_space<smem>>
    %258 = vector.extract_strided_slice %44 {offsets = [0, 0], sizes = [8, 256], strides = [1, 1]} : vector<8x275xf32> to vector<8x256xf32>
    %259 = vector.broadcast %257 : f32 to vector<8x256xf32>
    %260 = arith.mulf %259, %258 : vector<8x256xf32>
    %c25 = arith.constant 25 : index
    %261 = memref.load %arg4[%c25] : memref<144xf32, #tpu.memory_space<smem>>
    %262 = vector.extract_strided_slice %44 {offsets = [0, 1], sizes = [8, 256], strides = [1, 1]} : vector<8x275xf32> to vector<8x256xf32>
    %263 = vector.broadcast %261 : f32 to vector<8x256xf32>
    %264 = arith.mulf %263, %262 : vector<8x256xf32>
    %c26 = arith.constant 26 : index
    %265 = memref.load %arg4[%c26] : memref<144xf32, #tpu.memory_space<smem>>
    %266 = vector.extract_strided_slice %44 {offsets = [0, 2], sizes = [8, 256], strides = [1, 1]} : vector<8x275xf32> to vector<8x256xf32>
    %267 = vector.broadcast %265 : f32 to vector<8x256xf32>
    %268 = arith.mulf %267, %266 : vector<8x256xf32>
    %c27 = arith.constant 27 : index
    %269 = memref.load %arg4[%c27] : memref<144xf32, #tpu.memory_space<smem>>
    %270 = vector.extract_strided_slice %44 {offsets = [0, 3], sizes = [8, 256], strides = [1, 1]} : vector<8x275xf32> to vector<8x256xf32>
    %271 = vector.broadcast %269 : f32 to vector<8x256xf32>
    %272 = arith.mulf %271, %270 : vector<8x256xf32>
    %c28 = arith.constant 28 : index
    %273 = memref.load %arg4[%c28] : memref<144xf32, #tpu.memory_space<smem>>
    %274 = vector.extract_strided_slice %44 {offsets = [0, 16], sizes = [8, 256], strides = [1, 1]} : vector<8x275xf32> to vector<8x256xf32>
    %275 = vector.broadcast %273 : f32 to vector<8x256xf32>
    %276 = arith.mulf %275, %274 : vector<8x256xf32>
    %c29 = arith.constant 29 : index
    %277 = memref.load %arg4[%c29] : memref<144xf32, #tpu.memory_space<smem>>
    %278 = vector.extract_strided_slice %44 {offsets = [0, 17], sizes = [8, 256], strides = [1, 1]} : vector<8x275xf32> to vector<8x256xf32>
    %279 = vector.broadcast %277 : f32 to vector<8x256xf32>
    %280 = arith.mulf %279, %278 : vector<8x256xf32>
    %c30 = arith.constant 30 : index
    %281 = memref.load %arg4[%c30] : memref<144xf32, #tpu.memory_space<smem>>
    %282 = vector.extract_strided_slice %44 {offsets = [0, 18], sizes = [8, 256], strides = [1, 1]} : vector<8x275xf32> to vector<8x256xf32>
    %283 = vector.broadcast %281 : f32 to vector<8x256xf32>
    %284 = arith.mulf %283, %282 : vector<8x256xf32>
    %c31 = arith.constant 31 : index
    %285 = memref.load %arg4[%c31] : memref<144xf32, #tpu.memory_space<smem>>
    %286 = vector.extract_strided_slice %44 {offsets = [0, 19], sizes = [8, 256], strides = [1, 1]} : vector<8x275xf32> to vector<8x256xf32>
    %287 = vector.broadcast %285 : f32 to vector<8x256xf32>
    %288 = arith.mulf %287, %286 : vector<8x256xf32>
    %c32 = arith.constant 32 : index
    %289 = memref.load %arg4[%c32] : memref<144xf32, #tpu.memory_space<smem>>
    %290 = vector.extract_strided_slice %88 {offsets = [0, 0], sizes = [8, 256], strides = [1, 1]} : vector<8x275xf32> to vector<8x256xf32>
    %291 = vector.broadcast %289 : f32 to vector<8x256xf32>
    %292 = arith.mulf %291, %290 : vector<8x256xf32>
    %c33 = arith.constant 33 : index
    %293 = memref.load %arg4[%c33] : memref<144xf32, #tpu.memory_space<smem>>
    %294 = vector.extract_strided_slice %88 {offsets = [0, 1], sizes = [8, 256], strides = [1, 1]} : vector<8x275xf32> to vector<8x256xf32>
    %295 = vector.broadcast %293 : f32 to vector<8x256xf32>
    %296 = arith.mulf %295, %294 : vector<8x256xf32>
    %c34 = arith.constant 34 : index
    %297 = memref.load %arg4[%c34] : memref<144xf32, #tpu.memory_space<smem>>
    %298 = vector.extract_strided_slice %88 {offsets = [0, 2], sizes = [8, 256], strides = [1, 1]} : vector<8x275xf32> to vector<8x256xf32>
    %299 = vector.broadcast %297 : f32 to vector<8x256xf32>
    %300 = arith.mulf %299, %298 : vector<8x256xf32>
    %c35 = arith.constant 35 : index
    %301 = memref.load %arg4[%c35] : memref<144xf32, #tpu.memory_space<smem>>
    %302 = vector.extract_strided_slice %88 {offsets = [0, 3], sizes = [8, 256], strides = [1, 1]} : vector<8x275xf32> to vector<8x256xf32>
    %303 = vector.broadcast %301 : f32 to vector<8x256xf32>
    %304 = arith.mulf %303, %302 : vector<8x256xf32>
    %c36 = arith.constant 36 : index
    %305 = memref.load %arg4[%c36] : memref<144xf32, #tpu.memory_space<smem>>
    %306 = vector.extract_strided_slice %88 {offsets = [0, 16], sizes = [8, 256], strides = [1, 1]} : vector<8x275xf32> to vector<8x256xf32>
    %307 = vector.broadcast %305 : f32 to vector<8x256xf32>
    %308 = arith.mulf %307, %306 : vector<8x256xf32>
    %c37 = arith.constant 37 : index
    %309 = memref.load %arg4[%c37] : memref<144xf32, #tpu.memory_space<smem>>
    %310 = vector.extract_strided_slice %88 {offsets = [0, 17], sizes = [8, 256], strides = [1, 1]} : vector<8x275xf32> to vector<8x256xf32>
    %311 = vector.broadcast %309 : f32 to vector<8x256xf32>
    %312 = arith.mulf %311, %310 : vector<8x256xf32>
    %c38 = arith.constant 38 : index
    %313 = memref.load %arg4[%c38] : memref<144xf32, #tpu.memory_space<smem>>
    %314 = vector.extract_strided_slice %88 {offsets = [0, 18], sizes = [8, 256], strides = [1, 1]} : vector<8x275xf32> to vector<8x256xf32>
    %315 = vector.broadcast %313 : f32 to vector<8x256xf32>
    %316 = arith.mulf %315, %314 : vector<8x256xf32>
    %c39 = arith.constant 39 : index
    %317 = memref.load %arg4[%c39] : memref<144xf32, #tpu.memory_space<smem>>
    %318 = vector.extract_strided_slice %88 {offsets = [0, 19], sizes = [8, 256], strides = [1, 1]} : vector<8x275xf32> to vector<8x256xf32>
    %319 = vector.broadcast %317 : f32 to vector<8x256xf32>
    %320 = arith.mulf %319, %318 : vector<8x256xf32>
    %c40 = arith.constant 40 : index
    %321 = memref.load %arg4[%c40] : memref<144xf32, #tpu.memory_space<smem>>
    %322 = vector.extract_strided_slice %132 {offsets = [0, 0], sizes = [8, 256], strides = [1, 1]} : vector<8x275xf32> to vector<8x256xf32>
    %323 = vector.broadcast %321 : f32 to vector<8x256xf32>
    %324 = arith.mulf %323, %322 : vector<8x256xf32>
    %c41 = arith.constant 41 : index
    %325 = memref.load %arg4[%c41] : memref<144xf32, #tpu.memory_space<smem>>
    %326 = vector.extract_strided_slice %132 {offsets = [0, 1], sizes = [8, 256], strides = [1, 1]} : vector<8x275xf32> to vector<8x256xf32>
    %327 = vector.broadcast %325 : f32 to vector<8x256xf32>
    %328 = arith.mulf %327, %326 : vector<8x256xf32>
    %c42 = arith.constant 42 : index
    %329 = memref.load %arg4[%c42] : memref<144xf32, #tpu.memory_space<smem>>
    %330 = vector.extract_strided_slice %132 {offsets = [0, 2], sizes = [8, 256], strides = [1, 1]} : vector<8x275xf32> to vector<8x256xf32>
    %331 = vector.broadcast %329 : f32 to vector<8x256xf32>
    %332 = arith.mulf %331, %330 : vector<8x256xf32>
    %c43 = arith.constant 43 : index
    %333 = memref.load %arg4[%c43] : memref<144xf32, #tpu.memory_space<smem>>
    %334 = vector.extract_strided_slice %132 {offsets = [0, 3], sizes = [8, 256], strides = [1, 1]} : vector<8x275xf32> to vector<8x256xf32>
    %335 = vector.broadcast %333 : f32 to vector<8x256xf32>
    %336 = arith.mulf %335, %334 : vector<8x256xf32>
    %c44 = arith.constant 44 : index
    %337 = memref.load %arg4[%c44] : memref<144xf32, #tpu.memory_space<smem>>
    %338 = vector.extract_strided_slice %132 {offsets = [0, 16], sizes = [8, 256], strides = [1, 1]} : vector<8x275xf32> to vector<8x256xf32>
    %339 = vector.broadcast %337 : f32 to vector<8x256xf32>
    %340 = arith.mulf %339, %338 : vector<8x256xf32>
    %c45 = arith.constant 45 : index
    %341 = memref.load %arg4[%c45] : memref<144xf32, #tpu.memory_space<smem>>
    %342 = vector.extract_strided_slice %132 {offsets = [0, 17], sizes = [8, 256], strides = [1, 1]} : vector<8x275xf32> to vector<8x256xf32>
    %343 = vector.broadcast %341 : f32 to vector<8x256xf32>
    %344 = arith.mulf %343, %342 : vector<8x256xf32>
    %c46 = arith.constant 46 : index
    %345 = memref.load %arg4[%c46] : memref<144xf32, #tpu.memory_space<smem>>
    %346 = vector.extract_strided_slice %132 {offsets = [0, 18], sizes = [8, 256], strides = [1, 1]} : vector<8x275xf32> to vector<8x256xf32>
    %347 = vector.broadcast %345 : f32 to vector<8x256xf32>
    %348 = arith.mulf %347, %346 : vector<8x256xf32>
    %c47 = arith.constant 47 : index
    %349 = memref.load %arg4[%c47] : memref<144xf32, #tpu.memory_space<smem>>
    %350 = vector.extract_strided_slice %132 {offsets = [0, 19], sizes = [8, 256], strides = [1, 1]} : vector<8x275xf32> to vector<8x256xf32>
    %351 = vector.broadcast %349 : f32 to vector<8x256xf32>
    %352 = arith.mulf %351, %350 : vector<8x256xf32>
    %353 = arith.addf %260, %264 : vector<8x256xf32>
    %354 = arith.addf %268, %272 : vector<8x256xf32>
    %355 = arith.addf %276, %280 : vector<8x256xf32>
    %356 = arith.addf %284, %288 : vector<8x256xf32>
    %357 = arith.addf %292, %296 : vector<8x256xf32>
    %358 = arith.addf %300, %304 : vector<8x256xf32>
    %359 = arith.addf %308, %312 : vector<8x256xf32>
    %360 = arith.addf %316, %320 : vector<8x256xf32>
    %361 = arith.addf %324, %328 : vector<8x256xf32>
    %362 = arith.addf %332, %336 : vector<8x256xf32>
    %363 = arith.addf %340, %344 : vector<8x256xf32>
    %364 = arith.addf %348, %352 : vector<8x256xf32>
    %365 = arith.addf %353, %354 : vector<8x256xf32>
    %366 = arith.addf %355, %356 : vector<8x256xf32>
    %367 = arith.addf %357, %358 : vector<8x256xf32>
    %368 = arith.addf %359, %360 : vector<8x256xf32>
    %369 = arith.addf %361, %362 : vector<8x256xf32>
    %370 = arith.addf %363, %364 : vector<8x256xf32>
    %371 = arith.addf %365, %366 : vector<8x256xf32>
    %372 = arith.addf %367, %368 : vector<8x256xf32>
    %373 = arith.addf %369, %370 : vector<8x256xf32>
    %374 = arith.addf %371, %372 : vector<8x256xf32>
    %375 = arith.addf %374, %373 : vector<8x256xf32>
    %c1_33 = arith.constant 1 : index
    %376 = memref.load %arg5[%c1_33] : memref<6xf32, #tpu.memory_space<smem>>
    %377 = vector.broadcast %376 : f32 to vector<8x256xf32>
    %378 = arith.addf %375, %377 : vector<8x256xf32>
    %cst_34 = arith.constant 0.000000e+00 : f32
    %379 = vector.broadcast %cst_34 : f32 to vector<8x256xf32>
    %380 = arith.maximumf %378, %379 : vector<8x256xf32>
    %c48 = arith.constant 48 : index
    %381 = memref.load %arg4[%c48] : memref<144xf32, #tpu.memory_space<smem>>
    %382 = vector.extract_strided_slice %44 {offsets = [0, 0], sizes = [8, 256], strides = [1, 1]} : vector<8x275xf32> to vector<8x256xf32>
    %383 = vector.broadcast %381 : f32 to vector<8x256xf32>
    %384 = arith.mulf %383, %382 : vector<8x256xf32>
    %c49 = arith.constant 49 : index
    %385 = memref.load %arg4[%c49] : memref<144xf32, #tpu.memory_space<smem>>
    %386 = vector.extract_strided_slice %44 {offsets = [0, 1], sizes = [8, 256], strides = [1, 1]} : vector<8x275xf32> to vector<8x256xf32>
    %387 = vector.broadcast %385 : f32 to vector<8x256xf32>
    %388 = arith.mulf %387, %386 : vector<8x256xf32>
    %c50 = arith.constant 50 : index
    %389 = memref.load %arg4[%c50] : memref<144xf32, #tpu.memory_space<smem>>
    %390 = vector.extract_strided_slice %44 {offsets = [0, 2], sizes = [8, 256], strides = [1, 1]} : vector<8x275xf32> to vector<8x256xf32>
    %391 = vector.broadcast %389 : f32 to vector<8x256xf32>
    %392 = arith.mulf %391, %390 : vector<8x256xf32>
    %c51 = arith.constant 51 : index
    %393 = memref.load %arg4[%c51] : memref<144xf32, #tpu.memory_space<smem>>
    %394 = vector.extract_strided_slice %44 {offsets = [0, 3], sizes = [8, 256], strides = [1, 1]} : vector<8x275xf32> to vector<8x256xf32>
    %395 = vector.broadcast %393 : f32 to vector<8x256xf32>
    %396 = arith.mulf %395, %394 : vector<8x256xf32>
    %c52 = arith.constant 52 : index
    %397 = memref.load %arg4[%c52] : memref<144xf32, #tpu.memory_space<smem>>
    %398 = vector.extract_strided_slice %44 {offsets = [0, 16], sizes = [8, 256], strides = [1, 1]} : vector<8x275xf32> to vector<8x256xf32>
    %399 = vector.broadcast %397 : f32 to vector<8x256xf32>
    %400 = arith.mulf %399, %398 : vector<8x256xf32>
    %c53 = arith.constant 53 : index
    %401 = memref.load %arg4[%c53] : memref<144xf32, #tpu.memory_space<smem>>
    %402 = vector.extract_strided_slice %44 {offsets = [0, 17], sizes = [8, 256], strides = [1, 1]} : vector<8x275xf32> to vector<8x256xf32>
    %403 = vector.broadcast %401 : f32 to vector<8x256xf32>
    %404 = arith.mulf %403, %402 : vector<8x256xf32>
    %c54 = arith.constant 54 : index
    %405 = memref.load %arg4[%c54] : memref<144xf32, #tpu.memory_space<smem>>
    %406 = vector.extract_strided_slice %44 {offsets = [0, 18], sizes = [8, 256], strides = [1, 1]} : vector<8x275xf32> to vector<8x256xf32>
    %407 = vector.broadcast %405 : f32 to vector<8x256xf32>
    %408 = arith.mulf %407, %406 : vector<8x256xf32>
    %c55 = arith.constant 55 : index
    %409 = memref.load %arg4[%c55] : memref<144xf32, #tpu.memory_space<smem>>
    %410 = vector.extract_strided_slice %44 {offsets = [0, 19], sizes = [8, 256], strides = [1, 1]} : vector<8x275xf32> to vector<8x256xf32>
    %411 = vector.broadcast %409 : f32 to vector<8x256xf32>
    %412 = arith.mulf %411, %410 : vector<8x256xf32>
    %c56 = arith.constant 56 : index
    %413 = memref.load %arg4[%c56] : memref<144xf32, #tpu.memory_space<smem>>
    %414 = vector.extract_strided_slice %88 {offsets = [0, 0], sizes = [8, 256], strides = [1, 1]} : vector<8x275xf32> to vector<8x256xf32>
    %415 = vector.broadcast %413 : f32 to vector<8x256xf32>
    %416 = arith.mulf %415, %414 : vector<8x256xf32>
    %c57 = arith.constant 57 : index
    %417 = memref.load %arg4[%c57] : memref<144xf32, #tpu.memory_space<smem>>
    %418 = vector.extract_strided_slice %88 {offsets = [0, 1], sizes = [8, 256], strides = [1, 1]} : vector<8x275xf32> to vector<8x256xf32>
    %419 = vector.broadcast %417 : f32 to vector<8x256xf32>
    %420 = arith.mulf %419, %418 : vector<8x256xf32>
    %c58 = arith.constant 58 : index
    %421 = memref.load %arg4[%c58] : memref<144xf32, #tpu.memory_space<smem>>
    %422 = vector.extract_strided_slice %88 {offsets = [0, 2], sizes = [8, 256], strides = [1, 1]} : vector<8x275xf32> to vector<8x256xf32>
    %423 = vector.broadcast %421 : f32 to vector<8x256xf32>
    %424 = arith.mulf %423, %422 : vector<8x256xf32>
    %c59 = arith.constant 59 : index
    %425 = memref.load %arg4[%c59] : memref<144xf32, #tpu.memory_space<smem>>
    %426 = vector.extract_strided_slice %88 {offsets = [0, 3], sizes = [8, 256], strides = [1, 1]} : vector<8x275xf32> to vector<8x256xf32>
    %427 = vector.broadcast %425 : f32 to vector<8x256xf32>
    %428 = arith.mulf %427, %426 : vector<8x256xf32>
    %c60 = arith.constant 60 : index
    %429 = memref.load %arg4[%c60] : memref<144xf32, #tpu.memory_space<smem>>
    %430 = vector.extract_strided_slice %88 {offsets = [0, 16], sizes = [8, 256], strides = [1, 1]} : vector<8x275xf32> to vector<8x256xf32>
    %431 = vector.broadcast %429 : f32 to vector<8x256xf32>
    %432 = arith.mulf %431, %430 : vector<8x256xf32>
    %c61 = arith.constant 61 : index
    %433 = memref.load %arg4[%c61] : memref<144xf32, #tpu.memory_space<smem>>
    %434 = vector.extract_strided_slice %88 {offsets = [0, 17], sizes = [8, 256], strides = [1, 1]} : vector<8x275xf32> to vector<8x256xf32>
    %435 = vector.broadcast %433 : f32 to vector<8x256xf32>
    %436 = arith.mulf %435, %434 : vector<8x256xf32>
    %c62 = arith.constant 62 : index
    %437 = memref.load %arg4[%c62] : memref<144xf32, #tpu.memory_space<smem>>
    %438 = vector.extract_strided_slice %88 {offsets = [0, 18], sizes = [8, 256], strides = [1, 1]} : vector<8x275xf32> to vector<8x256xf32>
    %439 = vector.broadcast %437 : f32 to vector<8x256xf32>
    %440 = arith.mulf %439, %438 : vector<8x256xf32>
    %c63 = arith.constant 63 : index
    %441 = memref.load %arg4[%c63] : memref<144xf32, #tpu.memory_space<smem>>
    %442 = vector.extract_strided_slice %88 {offsets = [0, 19], sizes = [8, 256], strides = [1, 1]} : vector<8x275xf32> to vector<8x256xf32>
    %443 = vector.broadcast %441 : f32 to vector<8x256xf32>
    %444 = arith.mulf %443, %442 : vector<8x256xf32>
    %c64 = arith.constant 64 : index
    %445 = memref.load %arg4[%c64] : memref<144xf32, #tpu.memory_space<smem>>
    %446 = vector.extract_strided_slice %132 {offsets = [0, 0], sizes = [8, 256], strides = [1, 1]} : vector<8x275xf32> to vector<8x256xf32>
    %447 = vector.broadcast %445 : f32 to vector<8x256xf32>
    %448 = arith.mulf %447, %446 : vector<8x256xf32>
    %c65 = arith.constant 65 : index
    %449 = memref.load %arg4[%c65] : memref<144xf32, #tpu.memory_space<smem>>
    %450 = vector.extract_strided_slice %132 {offsets = [0, 1], sizes = [8, 256], strides = [1, 1]} : vector<8x275xf32> to vector<8x256xf32>
    %451 = vector.broadcast %449 : f32 to vector<8x256xf32>
    %452 = arith.mulf %451, %450 : vector<8x256xf32>
    %c66 = arith.constant 66 : index
    %453 = memref.load %arg4[%c66] : memref<144xf32, #tpu.memory_space<smem>>
    %454 = vector.extract_strided_slice %132 {offsets = [0, 2], sizes = [8, 256], strides = [1, 1]} : vector<8x275xf32> to vector<8x256xf32>
    %455 = vector.broadcast %453 : f32 to vector<8x256xf32>
    %456 = arith.mulf %455, %454 : vector<8x256xf32>
    %c67 = arith.constant 67 : index
    %457 = memref.load %arg4[%c67] : memref<144xf32, #tpu.memory_space<smem>>
    %458 = vector.extract_strided_slice %132 {offsets = [0, 3], sizes = [8, 256], strides = [1, 1]} : vector<8x275xf32> to vector<8x256xf32>
    %459 = vector.broadcast %457 : f32 to vector<8x256xf32>
    %460 = arith.mulf %459, %458 : vector<8x256xf32>
    %c68 = arith.constant 68 : index
    %461 = memref.load %arg4[%c68] : memref<144xf32, #tpu.memory_space<smem>>
    %462 = vector.extract_strided_slice %132 {offsets = [0, 16], sizes = [8, 256], strides = [1, 1]} : vector<8x275xf32> to vector<8x256xf32>
    %463 = vector.broadcast %461 : f32 to vector<8x256xf32>
    %464 = arith.mulf %463, %462 : vector<8x256xf32>
    %c69 = arith.constant 69 : index
    %465 = memref.load %arg4[%c69] : memref<144xf32, #tpu.memory_space<smem>>
    %466 = vector.extract_strided_slice %132 {offsets = [0, 17], sizes = [8, 256], strides = [1, 1]} : vector<8x275xf32> to vector<8x256xf32>
    %467 = vector.broadcast %465 : f32 to vector<8x256xf32>
    %468 = arith.mulf %467, %466 : vector<8x256xf32>
    %c70 = arith.constant 70 : index
    %469 = memref.load %arg4[%c70] : memref<144xf32, #tpu.memory_space<smem>>
    %470 = vector.extract_strided_slice %132 {offsets = [0, 18], sizes = [8, 256], strides = [1, 1]} : vector<8x275xf32> to vector<8x256xf32>
    %471 = vector.broadcast %469 : f32 to vector<8x256xf32>
    %472 = arith.mulf %471, %470 : vector<8x256xf32>
    %c71 = arith.constant 71 : index
    %473 = memref.load %arg4[%c71] : memref<144xf32, #tpu.memory_space<smem>>
    %474 = vector.extract_strided_slice %132 {offsets = [0, 19], sizes = [8, 256], strides = [1, 1]} : vector<8x275xf32> to vector<8x256xf32>
    %475 = vector.broadcast %473 : f32 to vector<8x256xf32>
    %476 = arith.mulf %475, %474 : vector<8x256xf32>
    %477 = arith.addf %384, %388 : vector<8x256xf32>
    %478 = arith.addf %392, %396 : vector<8x256xf32>
    %479 = arith.addf %400, %404 : vector<8x256xf32>
    %480 = arith.addf %408, %412 : vector<8x256xf32>
    %481 = arith.addf %416, %420 : vector<8x256xf32>
    %482 = arith.addf %424, %428 : vector<8x256xf32>
    %483 = arith.addf %432, %436 : vector<8x256xf32>
    %484 = arith.addf %440, %444 : vector<8x256xf32>
    %485 = arith.addf %448, %452 : vector<8x256xf32>
    %486 = arith.addf %456, %460 : vector<8x256xf32>
    %487 = arith.addf %464, %468 : vector<8x256xf32>
    %488 = arith.addf %472, %476 : vector<8x256xf32>
    %489 = arith.addf %477, %478 : vector<8x256xf32>
    %490 = arith.addf %479, %480 : vector<8x256xf32>
    %491 = arith.addf %481, %482 : vector<8x256xf32>
    %492 = arith.addf %483, %484 : vector<8x256xf32>
    %493 = arith.addf %485, %486 : vector<8x256xf32>
    %494 = arith.addf %487, %488 : vector<8x256xf32>
    %495 = arith.addf %489, %490 : vector<8x256xf32>
    %496 = arith.addf %491, %492 : vector<8x256xf32>
    %497 = arith.addf %493, %494 : vector<8x256xf32>
    %498 = arith.addf %495, %496 : vector<8x256xf32>
    %499 = arith.addf %498, %497 : vector<8x256xf32>
    %c2_35 = arith.constant 2 : index
    %500 = memref.load %arg5[%c2_35] : memref<6xf32, #tpu.memory_space<smem>>
    %501 = vector.broadcast %500 : f32 to vector<8x256xf32>
    %502 = arith.addf %499, %501 : vector<8x256xf32>
    %cst_36 = arith.constant 0.000000e+00 : f32
    %503 = vector.broadcast %cst_36 : f32 to vector<8x256xf32>
    %504 = arith.maximumf %502, %503 : vector<8x256xf32>
    %c72 = arith.constant 72 : index
    %505 = memref.load %arg4[%c72] : memref<144xf32, #tpu.memory_space<smem>>
    %506 = vector.extract_strided_slice %44 {offsets = [0, 0], sizes = [8, 256], strides = [1, 1]} : vector<8x275xf32> to vector<8x256xf32>
    %507 = vector.broadcast %505 : f32 to vector<8x256xf32>
    %508 = arith.mulf %507, %506 : vector<8x256xf32>
    %c73 = arith.constant 73 : index
    %509 = memref.load %arg4[%c73] : memref<144xf32, #tpu.memory_space<smem>>
    %510 = vector.extract_strided_slice %44 {offsets = [0, 1], sizes = [8, 256], strides = [1, 1]} : vector<8x275xf32> to vector<8x256xf32>
    %511 = vector.broadcast %509 : f32 to vector<8x256xf32>
    %512 = arith.mulf %511, %510 : vector<8x256xf32>
    %c74 = arith.constant 74 : index
    %513 = memref.load %arg4[%c74] : memref<144xf32, #tpu.memory_space<smem>>
    %514 = vector.extract_strided_slice %44 {offsets = [0, 2], sizes = [8, 256], strides = [1, 1]} : vector<8x275xf32> to vector<8x256xf32>
    %515 = vector.broadcast %513 : f32 to vector<8x256xf32>
    %516 = arith.mulf %515, %514 : vector<8x256xf32>
    %c75 = arith.constant 75 : index
    %517 = memref.load %arg4[%c75] : memref<144xf32, #tpu.memory_space<smem>>
    %518 = vector.extract_strided_slice %44 {offsets = [0, 3], sizes = [8, 256], strides = [1, 1]} : vector<8x275xf32> to vector<8x256xf32>
    %519 = vector.broadcast %517 : f32 to vector<8x256xf32>
    %520 = arith.mulf %519, %518 : vector<8x256xf32>
    %c76 = arith.constant 76 : index
    %521 = memref.load %arg4[%c76] : memref<144xf32, #tpu.memory_space<smem>>
    %522 = vector.extract_strided_slice %44 {offsets = [0, 16], sizes = [8, 256], strides = [1, 1]} : vector<8x275xf32> to vector<8x256xf32>
    %523 = vector.broadcast %521 : f32 to vector<8x256xf32>
    %524 = arith.mulf %523, %522 : vector<8x256xf32>
    %c77 = arith.constant 77 : index
    %525 = memref.load %arg4[%c77] : memref<144xf32, #tpu.memory_space<smem>>
    %526 = vector.extract_strided_slice %44 {offsets = [0, 17], sizes = [8, 256], strides = [1, 1]} : vector<8x275xf32> to vector<8x256xf32>
    %527 = vector.broadcast %525 : f32 to vector<8x256xf32>
    %528 = arith.mulf %527, %526 : vector<8x256xf32>
    %c78 = arith.constant 78 : index
    %529 = memref.load %arg4[%c78] : memref<144xf32, #tpu.memory_space<smem>>
    %530 = vector.extract_strided_slice %44 {offsets = [0, 18], sizes = [8, 256], strides = [1, 1]} : vector<8x275xf32> to vector<8x256xf32>
    %531 = vector.broadcast %529 : f32 to vector<8x256xf32>
    %532 = arith.mulf %531, %530 : vector<8x256xf32>
    %c79 = arith.constant 79 : index
    %533 = memref.load %arg4[%c79] : memref<144xf32, #tpu.memory_space<smem>>
    %534 = vector.extract_strided_slice %44 {offsets = [0, 19], sizes = [8, 256], strides = [1, 1]} : vector<8x275xf32> to vector<8x256xf32>
    %535 = vector.broadcast %533 : f32 to vector<8x256xf32>
    %536 = arith.mulf %535, %534 : vector<8x256xf32>
    %c80 = arith.constant 80 : index
    %537 = memref.load %arg4[%c80] : memref<144xf32, #tpu.memory_space<smem>>
    %538 = vector.extract_strided_slice %88 {offsets = [0, 0], sizes = [8, 256], strides = [1, 1]} : vector<8x275xf32> to vector<8x256xf32>
    %539 = vector.broadcast %537 : f32 to vector<8x256xf32>
    %540 = arith.mulf %539, %538 : vector<8x256xf32>
    %c81 = arith.constant 81 : index
    %541 = memref.load %arg4[%c81] : memref<144xf32, #tpu.memory_space<smem>>
    %542 = vector.extract_strided_slice %88 {offsets = [0, 1], sizes = [8, 256], strides = [1, 1]} : vector<8x275xf32> to vector<8x256xf32>
    %543 = vector.broadcast %541 : f32 to vector<8x256xf32>
    %544 = arith.mulf %543, %542 : vector<8x256xf32>
    %c82 = arith.constant 82 : index
    %545 = memref.load %arg4[%c82] : memref<144xf32, #tpu.memory_space<smem>>
    %546 = vector.extract_strided_slice %88 {offsets = [0, 2], sizes = [8, 256], strides = [1, 1]} : vector<8x275xf32> to vector<8x256xf32>
    %547 = vector.broadcast %545 : f32 to vector<8x256xf32>
    %548 = arith.mulf %547, %546 : vector<8x256xf32>
    %c83 = arith.constant 83 : index
    %549 = memref.load %arg4[%c83] : memref<144xf32, #tpu.memory_space<smem>>
    %550 = vector.extract_strided_slice %88 {offsets = [0, 3], sizes = [8, 256], strides = [1, 1]} : vector<8x275xf32> to vector<8x256xf32>
    %551 = vector.broadcast %549 : f32 to vector<8x256xf32>
    %552 = arith.mulf %551, %550 : vector<8x256xf32>
    %c84 = arith.constant 84 : index
    %553 = memref.load %arg4[%c84] : memref<144xf32, #tpu.memory_space<smem>>
    %554 = vector.extract_strided_slice %88 {offsets = [0, 16], sizes = [8, 256], strides = [1, 1]} : vector<8x275xf32> to vector<8x256xf32>
    %555 = vector.broadcast %553 : f32 to vector<8x256xf32>
    %556 = arith.mulf %555, %554 : vector<8x256xf32>
    %c85 = arith.constant 85 : index
    %557 = memref.load %arg4[%c85] : memref<144xf32, #tpu.memory_space<smem>>
    %558 = vector.extract_strided_slice %88 {offsets = [0, 17], sizes = [8, 256], strides = [1, 1]} : vector<8x275xf32> to vector<8x256xf32>
    %559 = vector.broadcast %557 : f32 to vector<8x256xf32>
    %560 = arith.mulf %559, %558 : vector<8x256xf32>
    %c86 = arith.constant 86 : index
    %561 = memref.load %arg4[%c86] : memref<144xf32, #tpu.memory_space<smem>>
    %562 = vector.extract_strided_slice %88 {offsets = [0, 18], sizes = [8, 256], strides = [1, 1]} : vector<8x275xf32> to vector<8x256xf32>
    %563 = vector.broadcast %561 : f32 to vector<8x256xf32>
    %564 = arith.mulf %563, %562 : vector<8x256xf32>
    %c87 = arith.constant 87 : index
    %565 = memref.load %arg4[%c87] : memref<144xf32, #tpu.memory_space<smem>>
    %566 = vector.extract_strided_slice %88 {offsets = [0, 19], sizes = [8, 256], strides = [1, 1]} : vector<8x275xf32> to vector<8x256xf32>
    %567 = vector.broadcast %565 : f32 to vector<8x256xf32>
    %568 = arith.mulf %567, %566 : vector<8x256xf32>
    %c88 = arith.constant 88 : index
    %569 = memref.load %arg4[%c88] : memref<144xf32, #tpu.memory_space<smem>>
    %570 = vector.extract_strided_slice %132 {offsets = [0, 0], sizes = [8, 256], strides = [1, 1]} : vector<8x275xf32> to vector<8x256xf32>
    %571 = vector.broadcast %569 : f32 to vector<8x256xf32>
    %572 = arith.mulf %571, %570 : vector<8x256xf32>
    %c89 = arith.constant 89 : index
    %573 = memref.load %arg4[%c89] : memref<144xf32, #tpu.memory_space<smem>>
    %574 = vector.extract_strided_slice %132 {offsets = [0, 1], sizes = [8, 256], strides = [1, 1]} : vector<8x275xf32> to vector<8x256xf32>
    %575 = vector.broadcast %573 : f32 to vector<8x256xf32>
    %576 = arith.mulf %575, %574 : vector<8x256xf32>
    %c90 = arith.constant 90 : index
    %577 = memref.load %arg4[%c90] : memref<144xf32, #tpu.memory_space<smem>>
    %578 = vector.extract_strided_slice %132 {offsets = [0, 2], sizes = [8, 256], strides = [1, 1]} : vector<8x275xf32> to vector<8x256xf32>
    %579 = vector.broadcast %577 : f32 to vector<8x256xf32>
    %580 = arith.mulf %579, %578 : vector<8x256xf32>
    %c91 = arith.constant 91 : index
    %581 = memref.load %arg4[%c91] : memref<144xf32, #tpu.memory_space<smem>>
    %582 = vector.extract_strided_slice %132 {offsets = [0, 3], sizes = [8, 256], strides = [1, 1]} : vector<8x275xf32> to vector<8x256xf32>
    %583 = vector.broadcast %581 : f32 to vector<8x256xf32>
    %584 = arith.mulf %583, %582 : vector<8x256xf32>
    %c92 = arith.constant 92 : index
    %585 = memref.load %arg4[%c92] : memref<144xf32, #tpu.memory_space<smem>>
    %586 = vector.extract_strided_slice %132 {offsets = [0, 16], sizes = [8, 256], strides = [1, 1]} : vector<8x275xf32> to vector<8x256xf32>
    %587 = vector.broadcast %585 : f32 to vector<8x256xf32>
    %588 = arith.mulf %587, %586 : vector<8x256xf32>
    %c93 = arith.constant 93 : index
    %589 = memref.load %arg4[%c93] : memref<144xf32, #tpu.memory_space<smem>>
    %590 = vector.extract_strided_slice %132 {offsets = [0, 17], sizes = [8, 256], strides = [1, 1]} : vector<8x275xf32> to vector<8x256xf32>
    %591 = vector.broadcast %589 : f32 to vector<8x256xf32>
    %592 = arith.mulf %591, %590 : vector<8x256xf32>
    %c94 = arith.constant 94 : index
    %593 = memref.load %arg4[%c94] : memref<144xf32, #tpu.memory_space<smem>>
    %594 = vector.extract_strided_slice %132 {offsets = [0, 18], sizes = [8, 256], strides = [1, 1]} : vector<8x275xf32> to vector<8x256xf32>
    %595 = vector.broadcast %593 : f32 to vector<8x256xf32>
    %596 = arith.mulf %595, %594 : vector<8x256xf32>
    %c95 = arith.constant 95 : index
    %597 = memref.load %arg4[%c95] : memref<144xf32, #tpu.memory_space<smem>>
    %598 = vector.extract_strided_slice %132 {offsets = [0, 19], sizes = [8, 256], strides = [1, 1]} : vector<8x275xf32> to vector<8x256xf32>
    %599 = vector.broadcast %597 : f32 to vector<8x256xf32>
    %600 = arith.mulf %599, %598 : vector<8x256xf32>
    %601 = arith.addf %508, %512 : vector<8x256xf32>
    %602 = arith.addf %516, %520 : vector<8x256xf32>
    %603 = arith.addf %524, %528 : vector<8x256xf32>
    %604 = arith.addf %532, %536 : vector<8x256xf32>
    %605 = arith.addf %540, %544 : vector<8x256xf32>
    %606 = arith.addf %548, %552 : vector<8x256xf32>
    %607 = arith.addf %556, %560 : vector<8x256xf32>
    %608 = arith.addf %564, %568 : vector<8x256xf32>
    %609 = arith.addf %572, %576 : vector<8x256xf32>
    %610 = arith.addf %580, %584 : vector<8x256xf32>
    %611 = arith.addf %588, %592 : vector<8x256xf32>
    %612 = arith.addf %596, %600 : vector<8x256xf32>
    %613 = arith.addf %601, %602 : vector<8x256xf32>
    %614 = arith.addf %603, %604 : vector<8x256xf32>
    %615 = arith.addf %605, %606 : vector<8x256xf32>
    %616 = arith.addf %607, %608 : vector<8x256xf32>
    %617 = arith.addf %609, %610 : vector<8x256xf32>
    %618 = arith.addf %611, %612 : vector<8x256xf32>
    %619 = arith.addf %613, %614 : vector<8x256xf32>
    %620 = arith.addf %615, %616 : vector<8x256xf32>
    %621 = arith.addf %617, %618 : vector<8x256xf32>
    %622 = arith.addf %619, %620 : vector<8x256xf32>
    %623 = arith.addf %622, %621 : vector<8x256xf32>
    %c3_37 = arith.constant 3 : index
    %624 = memref.load %arg5[%c3_37] : memref<6xf32, #tpu.memory_space<smem>>
    %625 = vector.broadcast %624 : f32 to vector<8x256xf32>
    %626 = arith.addf %623, %625 : vector<8x256xf32>
    %cst_38 = arith.constant 0.000000e+00 : f32
    %627 = vector.broadcast %cst_38 : f32 to vector<8x256xf32>
    %628 = arith.maximumf %626, %627 : vector<8x256xf32>
    %c96 = arith.constant 96 : index
    %629 = memref.load %arg4[%c96] : memref<144xf32, #tpu.memory_space<smem>>
    %630 = vector.extract_strided_slice %44 {offsets = [0, 0], sizes = [8, 256], strides = [1, 1]} : vector<8x275xf32> to vector<8x256xf32>
    %631 = vector.broadcast %629 : f32 to vector<8x256xf32>
    %632 = arith.mulf %631, %630 : vector<8x256xf32>
    %c97 = arith.constant 97 : index
    %633 = memref.load %arg4[%c97] : memref<144xf32, #tpu.memory_space<smem>>
    %634 = vector.extract_strided_slice %44 {offsets = [0, 1], sizes = [8, 256], strides = [1, 1]} : vector<8x275xf32> to vector<8x256xf32>
    %635 = vector.broadcast %633 : f32 to vector<8x256xf32>
    %636 = arith.mulf %635, %634 : vector<8x256xf32>
    %c98 = arith.constant 98 : index
    %637 = memref.load %arg4[%c98] : memref<144xf32, #tpu.memory_space<smem>>
    %638 = vector.extract_strided_slice %44 {offsets = [0, 2], sizes = [8, 256], strides = [1, 1]} : vector<8x275xf32> to vector<8x256xf32>
    %639 = vector.broadcast %637 : f32 to vector<8x256xf32>
    %640 = arith.mulf %639, %638 : vector<8x256xf32>
    %c99 = arith.constant 99 : index
    %641 = memref.load %arg4[%c99] : memref<144xf32, #tpu.memory_space<smem>>
    %642 = vector.extract_strided_slice %44 {offsets = [0, 3], sizes = [8, 256], strides = [1, 1]} : vector<8x275xf32> to vector<8x256xf32>
    %643 = vector.broadcast %641 : f32 to vector<8x256xf32>
    %644 = arith.mulf %643, %642 : vector<8x256xf32>
    %c100 = arith.constant 100 : index
    %645 = memref.load %arg4[%c100] : memref<144xf32, #tpu.memory_space<smem>>
    %646 = vector.extract_strided_slice %44 {offsets = [0, 16], sizes = [8, 256], strides = [1, 1]} : vector<8x275xf32> to vector<8x256xf32>
    %647 = vector.broadcast %645 : f32 to vector<8x256xf32>
    %648 = arith.mulf %647, %646 : vector<8x256xf32>
    %c101 = arith.constant 101 : index
    %649 = memref.load %arg4[%c101] : memref<144xf32, #tpu.memory_space<smem>>
    %650 = vector.extract_strided_slice %44 {offsets = [0, 17], sizes = [8, 256], strides = [1, 1]} : vector<8x275xf32> to vector<8x256xf32>
    %651 = vector.broadcast %649 : f32 to vector<8x256xf32>
    %652 = arith.mulf %651, %650 : vector<8x256xf32>
    %c102 = arith.constant 102 : index
    %653 = memref.load %arg4[%c102] : memref<144xf32, #tpu.memory_space<smem>>
    %654 = vector.extract_strided_slice %44 {offsets = [0, 18], sizes = [8, 256], strides = [1, 1]} : vector<8x275xf32> to vector<8x256xf32>
    %655 = vector.broadcast %653 : f32 to vector<8x256xf32>
    %656 = arith.mulf %655, %654 : vector<8x256xf32>
    %c103 = arith.constant 103 : index
    %657 = memref.load %arg4[%c103] : memref<144xf32, #tpu.memory_space<smem>>
    %658 = vector.extract_strided_slice %44 {offsets = [0, 19], sizes = [8, 256], strides = [1, 1]} : vector<8x275xf32> to vector<8x256xf32>
    %659 = vector.broadcast %657 : f32 to vector<8x256xf32>
    %660 = arith.mulf %659, %658 : vector<8x256xf32>
    %c104 = arith.constant 104 : index
    %661 = memref.load %arg4[%c104] : memref<144xf32, #tpu.memory_space<smem>>
    %662 = vector.extract_strided_slice %88 {offsets = [0, 0], sizes = [8, 256], strides = [1, 1]} : vector<8x275xf32> to vector<8x256xf32>
    %663 = vector.broadcast %661 : f32 to vector<8x256xf32>
    %664 = arith.mulf %663, %662 : vector<8x256xf32>
    %c105 = arith.constant 105 : index
    %665 = memref.load %arg4[%c105] : memref<144xf32, #tpu.memory_space<smem>>
    %666 = vector.extract_strided_slice %88 {offsets = [0, 1], sizes = [8, 256], strides = [1, 1]} : vector<8x275xf32> to vector<8x256xf32>
    %667 = vector.broadcast %665 : f32 to vector<8x256xf32>
    %668 = arith.mulf %667, %666 : vector<8x256xf32>
    %c106 = arith.constant 106 : index
    %669 = memref.load %arg4[%c106] : memref<144xf32, #tpu.memory_space<smem>>
    %670 = vector.extract_strided_slice %88 {offsets = [0, 2], sizes = [8, 256], strides = [1, 1]} : vector<8x275xf32> to vector<8x256xf32>
    %671 = vector.broadcast %669 : f32 to vector<8x256xf32>
    %672 = arith.mulf %671, %670 : vector<8x256xf32>
    %c107 = arith.constant 107 : index
    %673 = memref.load %arg4[%c107] : memref<144xf32, #tpu.memory_space<smem>>
    %674 = vector.extract_strided_slice %88 {offsets = [0, 3], sizes = [8, 256], strides = [1, 1]} : vector<8x275xf32> to vector<8x256xf32>
    %675 = vector.broadcast %673 : f32 to vector<8x256xf32>
    %676 = arith.mulf %675, %674 : vector<8x256xf32>
    %c108 = arith.constant 108 : index
    %677 = memref.load %arg4[%c108] : memref<144xf32, #tpu.memory_space<smem>>
    %678 = vector.extract_strided_slice %88 {offsets = [0, 16], sizes = [8, 256], strides = [1, 1]} : vector<8x275xf32> to vector<8x256xf32>
    %679 = vector.broadcast %677 : f32 to vector<8x256xf32>
    %680 = arith.mulf %679, %678 : vector<8x256xf32>
    %c109 = arith.constant 109 : index
    %681 = memref.load %arg4[%c109] : memref<144xf32, #tpu.memory_space<smem>>
    %682 = vector.extract_strided_slice %88 {offsets = [0, 17], sizes = [8, 256], strides = [1, 1]} : vector<8x275xf32> to vector<8x256xf32>
    %683 = vector.broadcast %681 : f32 to vector<8x256xf32>
    %684 = arith.mulf %683, %682 : vector<8x256xf32>
    %c110 = arith.constant 110 : index
    %685 = memref.load %arg4[%c110] : memref<144xf32, #tpu.memory_space<smem>>
    %686 = vector.extract_strided_slice %88 {offsets = [0, 18], sizes = [8, 256], strides = [1, 1]} : vector<8x275xf32> to vector<8x256xf32>
    %687 = vector.broadcast %685 : f32 to vector<8x256xf32>
    %688 = arith.mulf %687, %686 : vector<8x256xf32>
    %c111 = arith.constant 111 : index
    %689 = memref.load %arg4[%c111] : memref<144xf32, #tpu.memory_space<smem>>
    %690 = vector.extract_strided_slice %88 {offsets = [0, 19], sizes = [8, 256], strides = [1, 1]} : vector<8x275xf32> to vector<8x256xf32>
    %691 = vector.broadcast %689 : f32 to vector<8x256xf32>
    %692 = arith.mulf %691, %690 : vector<8x256xf32>
    %c112 = arith.constant 112 : index
    %693 = memref.load %arg4[%c112] : memref<144xf32, #tpu.memory_space<smem>>
    %694 = vector.extract_strided_slice %132 {offsets = [0, 0], sizes = [8, 256], strides = [1, 1]} : vector<8x275xf32> to vector<8x256xf32>
    %695 = vector.broadcast %693 : f32 to vector<8x256xf32>
    %696 = arith.mulf %695, %694 : vector<8x256xf32>
    %c113 = arith.constant 113 : index
    %697 = memref.load %arg4[%c113] : memref<144xf32, #tpu.memory_space<smem>>
    %698 = vector.extract_strided_slice %132 {offsets = [0, 1], sizes = [8, 256], strides = [1, 1]} : vector<8x275xf32> to vector<8x256xf32>
    %699 = vector.broadcast %697 : f32 to vector<8x256xf32>
    %700 = arith.mulf %699, %698 : vector<8x256xf32>
    %c114 = arith.constant 114 : index
    %701 = memref.load %arg4[%c114] : memref<144xf32, #tpu.memory_space<smem>>
    %702 = vector.extract_strided_slice %132 {offsets = [0, 2], sizes = [8, 256], strides = [1, 1]} : vector<8x275xf32> to vector<8x256xf32>
    %703 = vector.broadcast %701 : f32 to vector<8x256xf32>
    %704 = arith.mulf %703, %702 : vector<8x256xf32>
    %c115 = arith.constant 115 : index
    %705 = memref.load %arg4[%c115] : memref<144xf32, #tpu.memory_space<smem>>
    %706 = vector.extract_strided_slice %132 {offsets = [0, 3], sizes = [8, 256], strides = [1, 1]} : vector<8x275xf32> to vector<8x256xf32>
    %707 = vector.broadcast %705 : f32 to vector<8x256xf32>
    %708 = arith.mulf %707, %706 : vector<8x256xf32>
    %c116 = arith.constant 116 : index
    %709 = memref.load %arg4[%c116] : memref<144xf32, #tpu.memory_space<smem>>
    %710 = vector.extract_strided_slice %132 {offsets = [0, 16], sizes = [8, 256], strides = [1, 1]} : vector<8x275xf32> to vector<8x256xf32>
    %711 = vector.broadcast %709 : f32 to vector<8x256xf32>
    %712 = arith.mulf %711, %710 : vector<8x256xf32>
    %c117 = arith.constant 117 : index
    %713 = memref.load %arg4[%c117] : memref<144xf32, #tpu.memory_space<smem>>
    %714 = vector.extract_strided_slice %132 {offsets = [0, 17], sizes = [8, 256], strides = [1, 1]} : vector<8x275xf32> to vector<8x256xf32>
    %715 = vector.broadcast %713 : f32 to vector<8x256xf32>
    %716 = arith.mulf %715, %714 : vector<8x256xf32>
    %c118 = arith.constant 118 : index
    %717 = memref.load %arg4[%c118] : memref<144xf32, #tpu.memory_space<smem>>
    %718 = vector.extract_strided_slice %132 {offsets = [0, 18], sizes = [8, 256], strides = [1, 1]} : vector<8x275xf32> to vector<8x256xf32>
    %719 = vector.broadcast %717 : f32 to vector<8x256xf32>
    %720 = arith.mulf %719, %718 : vector<8x256xf32>
    %c119 = arith.constant 119 : index
    %721 = memref.load %arg4[%c119] : memref<144xf32, #tpu.memory_space<smem>>
    %722 = vector.extract_strided_slice %132 {offsets = [0, 19], sizes = [8, 256], strides = [1, 1]} : vector<8x275xf32> to vector<8x256xf32>
    %723 = vector.broadcast %721 : f32 to vector<8x256xf32>
    %724 = arith.mulf %723, %722 : vector<8x256xf32>
    %725 = arith.addf %632, %636 : vector<8x256xf32>
    %726 = arith.addf %640, %644 : vector<8x256xf32>
    %727 = arith.addf %648, %652 : vector<8x256xf32>
    %728 = arith.addf %656, %660 : vector<8x256xf32>
    %729 = arith.addf %664, %668 : vector<8x256xf32>
    %730 = arith.addf %672, %676 : vector<8x256xf32>
    %731 = arith.addf %680, %684 : vector<8x256xf32>
    %732 = arith.addf %688, %692 : vector<8x256xf32>
    %733 = arith.addf %696, %700 : vector<8x256xf32>
    %734 = arith.addf %704, %708 : vector<8x256xf32>
    %735 = arith.addf %712, %716 : vector<8x256xf32>
    %736 = arith.addf %720, %724 : vector<8x256xf32>
    %737 = arith.addf %725, %726 : vector<8x256xf32>
    %738 = arith.addf %727, %728 : vector<8x256xf32>
    %739 = arith.addf %729, %730 : vector<8x256xf32>
    %740 = arith.addf %731, %732 : vector<8x256xf32>
    %741 = arith.addf %733, %734 : vector<8x256xf32>
    %742 = arith.addf %735, %736 : vector<8x256xf32>
    %743 = arith.addf %737, %738 : vector<8x256xf32>
    %744 = arith.addf %739, %740 : vector<8x256xf32>
    %745 = arith.addf %741, %742 : vector<8x256xf32>
    %746 = arith.addf %743, %744 : vector<8x256xf32>
    %747 = arith.addf %746, %745 : vector<8x256xf32>
    %c4_39 = arith.constant 4 : index
    %748 = memref.load %arg5[%c4_39] : memref<6xf32, #tpu.memory_space<smem>>
    %749 = vector.broadcast %748 : f32 to vector<8x256xf32>
    %750 = arith.addf %747, %749 : vector<8x256xf32>
    %cst_40 = arith.constant 0.000000e+00 : f32
    %751 = vector.broadcast %cst_40 : f32 to vector<8x256xf32>
    %752 = arith.maximumf %750, %751 : vector<8x256xf32>
    %c120 = arith.constant 120 : index
    %753 = memref.load %arg4[%c120] : memref<144xf32, #tpu.memory_space<smem>>
    %754 = vector.extract_strided_slice %44 {offsets = [0, 0], sizes = [8, 256], strides = [1, 1]} : vector<8x275xf32> to vector<8x256xf32>
    %755 = vector.broadcast %753 : f32 to vector<8x256xf32>
    %756 = arith.mulf %755, %754 : vector<8x256xf32>
    %c121 = arith.constant 121 : index
    %757 = memref.load %arg4[%c121] : memref<144xf32, #tpu.memory_space<smem>>
    %758 = vector.extract_strided_slice %44 {offsets = [0, 1], sizes = [8, 256], strides = [1, 1]} : vector<8x275xf32> to vector<8x256xf32>
    %759 = vector.broadcast %757 : f32 to vector<8x256xf32>
    %760 = arith.mulf %759, %758 : vector<8x256xf32>
    %c122 = arith.constant 122 : index
    %761 = memref.load %arg4[%c122] : memref<144xf32, #tpu.memory_space<smem>>
    %762 = vector.extract_strided_slice %44 {offsets = [0, 2], sizes = [8, 256], strides = [1, 1]} : vector<8x275xf32> to vector<8x256xf32>
    %763 = vector.broadcast %761 : f32 to vector<8x256xf32>
    %764 = arith.mulf %763, %762 : vector<8x256xf32>
    %c123 = arith.constant 123 : index
    %765 = memref.load %arg4[%c123] : memref<144xf32, #tpu.memory_space<smem>>
    %766 = vector.extract_strided_slice %44 {offsets = [0, 3], sizes = [8, 256], strides = [1, 1]} : vector<8x275xf32> to vector<8x256xf32>
    %767 = vector.broadcast %765 : f32 to vector<8x256xf32>
    %768 = arith.mulf %767, %766 : vector<8x256xf32>
    %c124 = arith.constant 124 : index
    %769 = memref.load %arg4[%c124] : memref<144xf32, #tpu.memory_space<smem>>
    %770 = vector.extract_strided_slice %44 {offsets = [0, 16], sizes = [8, 256], strides = [1, 1]} : vector<8x275xf32> to vector<8x256xf32>
    %771 = vector.broadcast %769 : f32 to vector<8x256xf32>
    %772 = arith.mulf %771, %770 : vector<8x256xf32>
    %c125 = arith.constant 125 : index
    %773 = memref.load %arg4[%c125] : memref<144xf32, #tpu.memory_space<smem>>
    %774 = vector.extract_strided_slice %44 {offsets = [0, 17], sizes = [8, 256], strides = [1, 1]} : vector<8x275xf32> to vector<8x256xf32>
    %775 = vector.broadcast %773 : f32 to vector<8x256xf32>
    %776 = arith.mulf %775, %774 : vector<8x256xf32>
    %c126 = arith.constant 126 : index
    %777 = memref.load %arg4[%c126] : memref<144xf32, #tpu.memory_space<smem>>
    %778 = vector.extract_strided_slice %44 {offsets = [0, 18], sizes = [8, 256], strides = [1, 1]} : vector<8x275xf32> to vector<8x256xf32>
    %779 = vector.broadcast %777 : f32 to vector<8x256xf32>
    %780 = arith.mulf %779, %778 : vector<8x256xf32>
    %c127 = arith.constant 127 : index
    %781 = memref.load %arg4[%c127] : memref<144xf32, #tpu.memory_space<smem>>
    %782 = vector.extract_strided_slice %44 {offsets = [0, 19], sizes = [8, 256], strides = [1, 1]} : vector<8x275xf32> to vector<8x256xf32>
    %783 = vector.broadcast %781 : f32 to vector<8x256xf32>
    %784 = arith.mulf %783, %782 : vector<8x256xf32>
    %c128 = arith.constant 128 : index
    %785 = memref.load %arg4[%c128] : memref<144xf32, #tpu.memory_space<smem>>
    %786 = vector.extract_strided_slice %88 {offsets = [0, 0], sizes = [8, 256], strides = [1, 1]} : vector<8x275xf32> to vector<8x256xf32>
    %787 = vector.broadcast %785 : f32 to vector<8x256xf32>
    %788 = arith.mulf %787, %786 : vector<8x256xf32>
    %c129 = arith.constant 129 : index
    %789 = memref.load %arg4[%c129] : memref<144xf32, #tpu.memory_space<smem>>
    %790 = vector.extract_strided_slice %88 {offsets = [0, 1], sizes = [8, 256], strides = [1, 1]} : vector<8x275xf32> to vector<8x256xf32>
    %791 = vector.broadcast %789 : f32 to vector<8x256xf32>
    %792 = arith.mulf %791, %790 : vector<8x256xf32>
    %c130 = arith.constant 130 : index
    %793 = memref.load %arg4[%c130] : memref<144xf32, #tpu.memory_space<smem>>
    %794 = vector.extract_strided_slice %88 {offsets = [0, 2], sizes = [8, 256], strides = [1, 1]} : vector<8x275xf32> to vector<8x256xf32>
    %795 = vector.broadcast %793 : f32 to vector<8x256xf32>
    %796 = arith.mulf %795, %794 : vector<8x256xf32>
    %c131 = arith.constant 131 : index
    %797 = memref.load %arg4[%c131] : memref<144xf32, #tpu.memory_space<smem>>
    %798 = vector.extract_strided_slice %88 {offsets = [0, 3], sizes = [8, 256], strides = [1, 1]} : vector<8x275xf32> to vector<8x256xf32>
    %799 = vector.broadcast %797 : f32 to vector<8x256xf32>
    %800 = arith.mulf %799, %798 : vector<8x256xf32>
    %c132 = arith.constant 132 : index
    %801 = memref.load %arg4[%c132] : memref<144xf32, #tpu.memory_space<smem>>
    %802 = vector.extract_strided_slice %88 {offsets = [0, 16], sizes = [8, 256], strides = [1, 1]} : vector<8x275xf32> to vector<8x256xf32>
    %803 = vector.broadcast %801 : f32 to vector<8x256xf32>
    %804 = arith.mulf %803, %802 : vector<8x256xf32>
    %c133 = arith.constant 133 : index
    %805 = memref.load %arg4[%c133] : memref<144xf32, #tpu.memory_space<smem>>
    %806 = vector.extract_strided_slice %88 {offsets = [0, 17], sizes = [8, 256], strides = [1, 1]} : vector<8x275xf32> to vector<8x256xf32>
    %807 = vector.broadcast %805 : f32 to vector<8x256xf32>
    %808 = arith.mulf %807, %806 : vector<8x256xf32>
    %c134 = arith.constant 134 : index
    %809 = memref.load %arg4[%c134] : memref<144xf32, #tpu.memory_space<smem>>
    %810 = vector.extract_strided_slice %88 {offsets = [0, 18], sizes = [8, 256], strides = [1, 1]} : vector<8x275xf32> to vector<8x256xf32>
    %811 = vector.broadcast %809 : f32 to vector<8x256xf32>
    %812 = arith.mulf %811, %810 : vector<8x256xf32>
    %c135 = arith.constant 135 : index
    %813 = memref.load %arg4[%c135] : memref<144xf32, #tpu.memory_space<smem>>
    %814 = vector.extract_strided_slice %88 {offsets = [0, 19], sizes = [8, 256], strides = [1, 1]} : vector<8x275xf32> to vector<8x256xf32>
    %815 = vector.broadcast %813 : f32 to vector<8x256xf32>
    %816 = arith.mulf %815, %814 : vector<8x256xf32>
    %c136 = arith.constant 136 : index
    %817 = memref.load %arg4[%c136] : memref<144xf32, #tpu.memory_space<smem>>
    %818 = vector.extract_strided_slice %132 {offsets = [0, 0], sizes = [8, 256], strides = [1, 1]} : vector<8x275xf32> to vector<8x256xf32>
    %819 = vector.broadcast %817 : f32 to vector<8x256xf32>
    %820 = arith.mulf %819, %818 : vector<8x256xf32>
    %c137 = arith.constant 137 : index
    %821 = memref.load %arg4[%c137] : memref<144xf32, #tpu.memory_space<smem>>
    %822 = vector.extract_strided_slice %132 {offsets = [0, 1], sizes = [8, 256], strides = [1, 1]} : vector<8x275xf32> to vector<8x256xf32>
    %823 = vector.broadcast %821 : f32 to vector<8x256xf32>
    %824 = arith.mulf %823, %822 : vector<8x256xf32>
    %c138 = arith.constant 138 : index
    %825 = memref.load %arg4[%c138] : memref<144xf32, #tpu.memory_space<smem>>
    %826 = vector.extract_strided_slice %132 {offsets = [0, 2], sizes = [8, 256], strides = [1, 1]} : vector<8x275xf32> to vector<8x256xf32>
    %827 = vector.broadcast %825 : f32 to vector<8x256xf32>
    %828 = arith.mulf %827, %826 : vector<8x256xf32>
    %c139 = arith.constant 139 : index
    %829 = memref.load %arg4[%c139] : memref<144xf32, #tpu.memory_space<smem>>
    %830 = vector.extract_strided_slice %132 {offsets = [0, 3], sizes = [8, 256], strides = [1, 1]} : vector<8x275xf32> to vector<8x256xf32>
    %831 = vector.broadcast %829 : f32 to vector<8x256xf32>
    %832 = arith.mulf %831, %830 : vector<8x256xf32>
    %c140 = arith.constant 140 : index
    %833 = memref.load %arg4[%c140] : memref<144xf32, #tpu.memory_space<smem>>
    %834 = vector.extract_strided_slice %132 {offsets = [0, 16], sizes = [8, 256], strides = [1, 1]} : vector<8x275xf32> to vector<8x256xf32>
    %835 = vector.broadcast %833 : f32 to vector<8x256xf32>
    %836 = arith.mulf %835, %834 : vector<8x256xf32>
    %c141 = arith.constant 141 : index
    %837 = memref.load %arg4[%c141] : memref<144xf32, #tpu.memory_space<smem>>
    %838 = vector.extract_strided_slice %132 {offsets = [0, 17], sizes = [8, 256], strides = [1, 1]} : vector<8x275xf32> to vector<8x256xf32>
    %839 = vector.broadcast %837 : f32 to vector<8x256xf32>
    %840 = arith.mulf %839, %838 : vector<8x256xf32>
    %c142 = arith.constant 142 : index
    %841 = memref.load %arg4[%c142] : memref<144xf32, #tpu.memory_space<smem>>
    %842 = vector.extract_strided_slice %132 {offsets = [0, 18], sizes = [8, 256], strides = [1, 1]} : vector<8x275xf32> to vector<8x256xf32>
    %843 = vector.broadcast %841 : f32 to vector<8x256xf32>
    %844 = arith.mulf %843, %842 : vector<8x256xf32>
    %c143 = arith.constant 143 : index
    %845 = memref.load %arg4[%c143] : memref<144xf32, #tpu.memory_space<smem>>
    %846 = vector.extract_strided_slice %132 {offsets = [0, 19], sizes = [8, 256], strides = [1, 1]} : vector<8x275xf32> to vector<8x256xf32>
    %847 = vector.broadcast %845 : f32 to vector<8x256xf32>
    %848 = arith.mulf %847, %846 : vector<8x256xf32>
    %849 = arith.addf %756, %760 : vector<8x256xf32>
    %850 = arith.addf %764, %768 : vector<8x256xf32>
    %851 = arith.addf %772, %776 : vector<8x256xf32>
    %852 = arith.addf %780, %784 : vector<8x256xf32>
    %853 = arith.addf %788, %792 : vector<8x256xf32>
    %854 = arith.addf %796, %800 : vector<8x256xf32>
    %855 = arith.addf %804, %808 : vector<8x256xf32>
    %856 = arith.addf %812, %816 : vector<8x256xf32>
    %857 = arith.addf %820, %824 : vector<8x256xf32>
    %858 = arith.addf %828, %832 : vector<8x256xf32>
    %859 = arith.addf %836, %840 : vector<8x256xf32>
    %860 = arith.addf %844, %848 : vector<8x256xf32>
    %861 = arith.addf %849, %850 : vector<8x256xf32>
    %862 = arith.addf %851, %852 : vector<8x256xf32>
    %863 = arith.addf %853, %854 : vector<8x256xf32>
    %864 = arith.addf %855, %856 : vector<8x256xf32>
    %865 = arith.addf %857, %858 : vector<8x256xf32>
    %866 = arith.addf %859, %860 : vector<8x256xf32>
    %867 = arith.addf %861, %862 : vector<8x256xf32>
    %868 = arith.addf %863, %864 : vector<8x256xf32>
    %869 = arith.addf %865, %866 : vector<8x256xf32>
    %870 = arith.addf %867, %868 : vector<8x256xf32>
    %871 = arith.addf %870, %869 : vector<8x256xf32>
    %c5_41 = arith.constant 5 : index
    %872 = memref.load %arg5[%c5_41] : memref<6xf32, #tpu.memory_space<smem>>
    %873 = vector.broadcast %872 : f32 to vector<8x256xf32>
    %874 = arith.addf %871, %873 : vector<8x256xf32>
    %cst_42 = arith.constant 0.000000e+00 : f32
    %875 = vector.broadcast %cst_42 : f32 to vector<8x256xf32>
    %876 = arith.maximumf %874, %875 : vector<8x256xf32>
    %877 = tpu.concatenate %256, %380, %504, %628, %752, %876 in 1 : vector<8x256xf32>, vector<8x256xf32>, vector<8x256xf32>, vector<8x256xf32>, vector<8x256xf32>, vector<8x256xf32> -> vector<8x1536xf32>
    %c0_43 = arith.constant 0 : index
    %c0_44 = arith.constant 0 : index
    %878 = vector.load %arg6[%c0_43, %c0_44] : memref<1536x128xf32, #tpu.memory_space<vmem>>, vector<1536x128xf32>
    %cst_45 = arith.constant dense<0.000000e+00> : vector<8x128xf32>
    %879 = tpu.matmul %877, %878, %cst_45 {dimension_numbers = #tpu.dot_dimension_numbers<[1], [0], [0], [1], [0, 0, 1, 1], [], []>} : vector<8x1536xf32>, vector<1536x128xf32>, vector<8x128xf32> -> vector<8x128xf32>
    %c0_46 = arith.constant 0 : index
    %c0_47 = arith.constant 0 : index
    %880 = vector.load %arg7[%c0_46, %c0_47] : memref<1x128xf32, #tpu.memory_space<vmem>>, vector<1x128xf32>
    %881 = vector.broadcast %880 : vector<1x128xf32> to vector<8x128xf32>
    %882 = arith.addf %879, %881 : vector<8x128xf32>
    %883 = tpu.iota {dimensions = array<i32: 1>} : vector<8x128xi32>
    %c8_i32 = arith.constant 8 : i32
    %884 = vector.broadcast %c8_i32 : i32 to vector<8x128xi32>
    %885 = arith.cmpi sge, %883, %884 : vector<8x128xi32>
    %c16_i32 = arith.constant 16 : i32
    %886 = vector.broadcast %c16_i32 : i32 to vector<8x128xi32>
    %887 = arith.cmpi slt, %883, %886 : vector<8x128xi32>
    %888 = arith.andi %885, %887 : vector<8x128xi1>
    %889 = math.exp %882 : vector<8x128xf32>
    %890 = arith.select %888, %889, %882 : vector<8x128xi1>, vector<8x128xf32>
    %c0_48 = arith.constant 0 : index
    %c0_49 = arith.constant 0 : index
    %891 = vector.load %arg8[%c0_48, %c0_49] : memref<8x128xf32, #tpu.memory_space<vmem>>, vector<8x128xf32>
    tpu.vector_store %arg8[%c0_48, %c0_49], %890 {strides = array<i32>} : memref<8x128xf32, #tpu.memory_space<vmem>>, vector<8x128xf32>,
    return
  }
  func.func @transform_0(%arg0: i32) -> (i32, i32) {
    %c0_i32 = arith.constant 0 : i32
    %c0_i32_0 = arith.constant 0 : i32
    return %arg0, %c0_i32 : i32, i32
  }
  func.func @transform_1(%arg0: i32) -> i32 {
    %c0_i32 = arith.constant 0 : i32
    %c0_i32_0 = arith.constant 0 : i32
    return %c0_i32 : i32
  }
  func.func @transform_2(%arg0: i32) -> i32 {
    %c0_i32 = arith.constant 0 : i32
    %c0_i32_0 = arith.constant 0 : i32
    return %c0_i32 : i32
  }
  func.func @transform_3(%arg0: i32) -> i32 {
    %c0_i32 = arith.constant 0 : i32
    %c0_i32_0 = arith.constant 0 : i32
    return %c0_i32 : i32
  }
  func.func @transform_4(%arg0: i32) -> i32 {
    %c0_i32 = arith.constant 0 : i32
    %c0_i32_0 = arith.constant 0 : i32
    return %c0_i32 : i32
  }
  func.func @transform_5(%arg0: i32) -> (i32, i32) {
    %c0_i32 = arith.constant 0 : i32
    %c0_i32_0 = arith.constant 0 : i32
    %c0_i32_1 = arith.constant 0 : i32
    return %c0_i32, %c0_i32_0 : i32, i32
  }
  func.func @transform_6(%arg0: i32) -> (i32, i32) {
    %c0_i32 = arith.constant 0 : i32
    %c0_i32_0 = arith.constant 0 : i32
    %c0_i32_1 = arith.constant 0 : i32
    return %c0_i32, %c0_i32_0 : i32, i32
  }
  func.func @transform_7(%arg0: i32) -> (i32, i32) {
    %c0_i32 = arith.constant 0 : i32
    %c0_i32_0 = arith.constant 0 : i32
    return %arg0, %c0_i32 : i32, i32
  }
}

</mosaic_0001>

<llo_original>
// kernel: tpu_custom_call.1
$region0: #{tpu_custom_call.1}
  #allocation0 [shape = 'u32[]', space=smem, size = 0x4, offset = 0x4, fixed_abs, tag = 'smem constant byte address 0x4 - core index']
  #allocation1 [shape = 'u32[72,128]{1,0:T(1,128)}', space=vmem, size = 0x9000, scoped, tag = 'internal scratch']
  %s0 = inlined_call_operand.hbm [shape: f32[8,384], index: 0, kind: input, shape index: {}]
  %s1 = inlined_call_operand.hbm [shape: f32[24], index: 1, kind: input, shape index: {}]
  %s2 = inlined_call_operand.hbm [shape: f32[3], index: 2, kind: input, shape index: {}]
  %s3 = inlined_call_operand.vmem [shape: f32[144], index: 3, kind: input, shape index: {}]
  %s4 = inlined_call_operand.vmem [shape: f32[6], index: 4, kind: input, shape index: {}]
  %s5 = inlined_call_operand.hbm [shape: f32[1536,128], index: 5, kind: input, shape index: {}]
  %s6 = inlined_call_operand.vmem [shape: f32[1,128], index: 6, kind: input, shape index: {}]
  %s7 = inlined_call_operand.hbm [shape: f32[8,128], index: 7, kind: output, shape index: {}]
  %s8 = sld [smem:[#allocation0]]
  $region62: #{tpu_custom_call.1} parent=0
    _
  %s10 = ssub.s32 1, %s8
  %s11 = scalar_select 0, %s10, %s8
  $region1: #{tpu_custom_call.1} parent=0
    #allocation2 [shape = 'u8[12288]{0}', space=vmem, size = 0x3000, scoped, tag = 'input window, operand 0, single buffered']
    #allocation3 [shape = 's32[1]{0}', space=sflag, size = 0x4, scoped, tag = 'scoped memory for tpu_custom_call.1']
    #allocation4 [shape = 's32[1]{0}', space=sflag, size = 0x4, scoped, tag = 'scoped memory for tpu_custom_call.1']
    #allocation5 [shape = 's32[1]{0}', space=sflag, size = 0x4, scoped, tag = 'scoped memory for tpu_custom_call.1']
    #allocation6 [shape = 's32[1]{0}', space=sflag, size = 0x4, scoped, tag = 'scoped memory for tpu_custom_call.1']
    #allocation7 [shape = 'u8[512]{0}', space=smem, size = 0x200, scoped, tag = 'input window, operand 1, single buffered']
    #allocation8 [shape = 'u8[512]{0}', space=smem, size = 0x200, scoped, tag = 'input window, operand 2, single buffered']
    #allocation9 [shape = 's32[1]{0}', space=sflag, size = 0x4, scoped, tag = 'scoped memory for tpu_custom_call.1']
    #allocation10 [shape = 'u8[1024]{0}', space=smem, size = 0x400, scoped, tag = 'input window, operand 3, single buffered']
    #allocation11 [shape = 'u8[512]{0}', space=smem, size = 0x200, scoped, tag = 'input window, operand 4, single buffered']
    #allocation12 [shape = 's32[1]{0}', space=sflag, size = 0x4, scoped, tag = 'scoped memory for tpu_custom_call.1']
    #allocation13 [shape = 'u8[786432]{0}', space=vmem, size = 0xc0000, scoped, tag = 'input window, operand 5, single buffered']
    #allocation14 [shape = 's32[1]{0}', space=sflag, size = 0x4, scoped, tag = 'scoped memory for tpu_custom_call.1']
    #allocation15 [shape = 'u8[4096]{0}', space=vmem, size = 0x1000, scoped, tag = 'output window, operand 0, single buffered']
    %12 = vsyncpa [#allocation3], 0
    %13 = vsyncpa [#allocation5], 0
    %14 = vsyncpa [#allocation9], 0
    %15 = vsyncpa [#allocation6], 0
    %16 = vsyncpa [#allocation12], 0
    %17 = vsyncpa [#allocation14], 0
    %18 = vsyncpa [#allocation4], 0
    // Predicated region
    $region2: #{tpu_custom_call.1} parent=1 // pred_check
      _
    $region3: #{tpu_custom_call.1} parent=1 // pred_check_branch
      %20 = sbr.rel (0) target = $region5
    $region4: #{tpu_custom_call.1} parent=1 // pred_region
      %22 = vsyncadd [#allocation3], 0
      %s24 = sshll.u32 %s0, 4
      %s25 = int_to_ptr.hbm [resolvable:$true] %s24
      %s26 = sshll.u32 [#allocation2], 4
      %s27 = int_to_ptr.vmem [resolvable:$true] %s26
      %29 = dma.hbm_to_vmem [thread:$0]  %s25, 384, %s27, [#allocation3]
    $region5: #{tpu_custom_call.1} parent=1 // pred_fallthru
      _
    // Predicated region
    $region6: #{tpu_custom_call.1} parent=1 // pred_check
      _
    $region7: #{tpu_custom_call.1} parent=1 // pred_check_branch
      %31 = sbr.rel (0) target = $region9
    $region8: #{tpu_custom_call.1} parent=1 // pred_region
      %33 = vsyncadd [#allocation5], 0
      %s35 = sshll.u32 %s1, 4
      %s36 = int_to_ptr.hbm [resolvable:$true] %s35
      %38 = dma.hbm_to_smem %s36, 16, [#allocation7], [#allocation5]
    $region9: #{tpu_custom_call.1} parent=1 // pred_fallthru
      _
    // Predicated region
    $region10: #{tpu_custom_call.1} parent=1 // pred_check
      _
    $region11: #{tpu_custom_call.1} parent=1 // pred_check_branch
      %40 = sbr.rel (0) target = $region13
    $region12: #{tpu_custom_call.1} parent=1 // pred_region
      %42 = vsyncadd [#allocation9], 0
      %s44 = sshll.u32 %s2, 4
      %s45 = int_to_ptr.hbm [resolvable:$true] %s44
      %47 = dma.hbm_to_smem %s45, 16, [#allocation8], [#allocation9]
    $region13: #{tpu_custom_call.1} parent=1 // pred_fallthru
      _
    // Predicated region
    $region14: #{tpu_custom_call.1} parent=1 // pred_check
      _
    $region15: #{tpu_custom_call.1} parent=1 // pred_check_branch
      %49 = sbr.rel (0) target = $region17
    $region16: #{tpu_custom_call.1} parent=1 // pred_region
      %51 = vsyncadd [#allocation6], 0
      %s53 = sshll.u32 %s3, 4
      %s54 = int_to_ptr.vmem [resolvable:$true] %s53
      %56 = dma.vmem_to_smem %s54, 32, [#allocation10], [#allocation6]
    $region17: #{tpu_custom_call.1} parent=1 // pred_fallthru
      _
    // Predicated region
    $region18: #{tpu_custom_call.1} parent=1 // pred_check
      _
    $region19: #{tpu_custom_call.1} parent=1 // pred_check_branch
      %58 = sbr.rel (0) target = $region21
    $region20: #{tpu_custom_call.1} parent=1 // pred_region
      %60 = vsyncadd [#allocation12], 0
      %s62 = sshll.u32 %s4, 4
      %s63 = int_to_ptr.vmem [resolvable:$true] %s62
      %65 = dma.vmem_to_smem %s63, 16, [#allocation11], [#allocation12]
    $region21: #{tpu_custom_call.1} parent=1 // pred_fallthru
      _
    // Predicated region
    $region22: #{tpu_custom_call.1} parent=1 // pred_check
      _
    $region23: #{tpu_custom_call.1} parent=1 // pred_check_branch
      %67 = sbr.rel (0) target = $region25
    $region24: #{tpu_custom_call.1} parent=1 // pred_region
      %69 = vsyncadd [#allocation14], 0
      %s70 = sshll.u32 %s5, 4
      %s71 = int_to_ptr.hbm [resolvable:$true] %s70
      %s72 = sshll.u32 [#allocation13], 4
      %s73 = int_to_ptr.vmem [resolvable:$true] %s72
      %78 = dma.hbm_to_vmem [thread:$0]  %s71, 24576, %s73, [#allocation14], 128, 128, 8
    $region25: #{tpu_custom_call.1} parent=1 // pred_fallthru
      _
    // Predicated region
    $region26: #{tpu_custom_call.1} parent=1 // pred_check
      _
    $region27: #{tpu_custom_call.1} parent=1 // pred_check_branch
      %80 = sbr.rel (0) target = $region29
    $region28: #{tpu_custom_call.1} parent=1 // pred_region
      _
    $region29: #{tpu_custom_call.1} parent=1 // pred_fallthru
      _
    // Predicated region
    $region30: #{tpu_custom_call.1} parent=1 // pred_check
      _
    $region31: #{tpu_custom_call.1} parent=1 // pred_check_branch
      %82 = sbr.rel (0) target = $region33
    $region32: #{tpu_custom_call.1} parent=1 // pred_region
      %84 = dma.done [#allocation3], 384
    $region33: #{tpu_custom_call.1} parent=1 // pred_fallthru
      _
    // Predicated region
    $region34: #{tpu_custom_call.1} parent=1 // pred_check
      _
    $region35: #{tpu_custom_call.1} parent=1 // pred_check_branch
      %86 = sbr.rel (0) target = $region37
    $region36: #{tpu_custom_call.1} parent=1 // pred_region
      %88 = dma.done [#allocation5], 16
    $region37: #{tpu_custom_call.1} parent=1 // pred_fallthru
      _
    // Predicated region
    $region38: #{tpu_custom_call.1} parent=1 // pred_check
      _
    $region39: #{tpu_custom_call.1} parent=1 // pred_check_branch
      %90 = sbr.rel (0) target = $region41
    $region40: #{tpu_custom_call.1} parent=1 // pred_region
      %92 = dma.done [#allocation9], 16
    $region41: #{tpu_custom_call.1} parent=1 // pred_fallthru
      _
    // Predicated region
    $region42: #{tpu_custom_call.1} parent=1 // pred_check
      _
    $region43: #{tpu_custom_call.1} parent=1 // pred_check_branch
      %94 = sbr.rel (0) target = $region45
    $region44: #{tpu_custom_call.1} parent=1 // pred_region
      %96 = dma.done [#allocation6], 32
    $region45: #{tpu_custom_call.1} parent=1 // pred_fallthru
      _
    // Predicated region
    $region46: #{tpu_custom_call.1} parent=1 // pred_check
      _
    $region47: #{tpu_custom_call.1} parent=1 // pred_check_branch
      %98 = sbr.rel (0) target = $region49
    $region48: #{tpu_custom_call.1} parent=1 // pred_region
      %100 = dma.done [#allocation12], 16
    $region49: #{tpu_custom_call.1} parent=1 // pred_fallthru
      _
    // Predicated region
    $region50: #{tpu_custom_call.1} parent=1 // pred_check
      _
    $region51: #{tpu_custom_call.1} parent=1 // pred_check_branch
      %102 = sbr.rel (0) target = $region53
    $region52: #{tpu_custom_call.1} parent=1 // pred_region
      %104 = dma.done [#allocation14], 24576
    $region53: #{tpu_custom_call.1} parent=1 // pred_fallthru
      _
    %105 = sfence
    %v106 = vld [vmem:[#allocation2] sm:$0xff]
    %v107 = vld [vmem:[#allocation2 + $0x8] sm:$0xff]
    %v108 = vld [vmem:[#allocation2 + $0x10] sm:$0xff]
    %s109 = sld [smem:[#allocation7]]
    %v110 = vstv %s109
    %v111 = vmul.f32 %v110, %v106
    %v112 = vmul.f32 %v110, %v107
    %v113 = vmul.f32 %v110, %v108
    %s114 = sld [smem:[#allocation7 + $0x1]]
    %v115 = vstv %s114
    %v116 = vmul.f32 %v115, %v106
    %v117 = vmul.f32 %v115, %v107
    %v118 = vmul.f32 %v115, %v108
    %s119 = sld [smem:[#allocation7 + $0x2]]
    %v120 = vstv %s119
    %v121 = vmul.f32 %v120, %v106
    %v122 = vmul.f32 %v120, %v107
    %v123 = vmul.f32 %v120, %v108
    %s124 = sld [smem:[#allocation7 + $0x3]]
    %v125 = vstv %s124
    %v126 = vmul.f32 %v125, %v106
    %v127 = vmul.f32 %v125, %v107
    %v128 = vmul.f32 %v125, %v108
    %s129 = sld [smem:[#allocation7 + $0x4]]
    %v130 = vstv %s129
    %v131 = vmul.f32 %v130, %v106
    %v132 = vmul.f32 %v130, %v107
    %v133 = vmul.f32 %v130, %v108
    %s134 = sld [smem:[#allocation7 + $0x5]]
    %v135 = vstv %s134
    %v136 = vmul.f32 %v135, %v106
    %v137 = vmul.f32 %v135, %v107
    %v138 = vmul.f32 %v135, %v108
    %s139 = sld [smem:[#allocation7 + $0x6]]
    %v140 = vstv %s139
    %v141 = vmul.f32 %v140, %v106
    %v142 = vmul.f32 %v140, %v107
    %v143 = vmul.f32 %v140, %v108
    %s144 = sld [smem:[#allocation7 + $0x7]]
    %v145 = vstv %s144
    %v146 = vmul.f32 %v145, %v106
    %v147 = vmul.f32 %v145, %v107
    %v148 = vmul.f32 %v145, %v108
    %152 = vrot.lane.b32.xlu0 %v116, 127
    %v153 = vpop.permute.xlu0 %152
    %154 = vrot.lane.b32.xlu0 %v117, 127
    %v155 = vpop.permute.xlu0 %154
    %156 = vrot.lane.b32.xlu0 %v118, 127
    %v157 = vpop.permute.xlu0 %156
    %vm158 = vcmask 1039360
    %v159 = vsel %vm158, %v153, %v155
    %v160 = vsel %vm158, %v155, %v157
    %v164 = vadd.f32 %v111, %v159
    %v165 = vadd.f32 %v112, %v160
    %v166 = vadd.f32 %v113, %v157
    %170 = vrot.lane.b32.xlu0 %v126, 127
    %v171 = vpop.permute.xlu0 %170
    %172 = vrot.lane.b32.xlu0 %v127, 127
    %v173 = vpop.permute.xlu0 %172
    %174 = vrot.lane.b32.xlu0 %v128, 127
    %v175 = vpop.permute.xlu0 %174
    %v176 = vsel %vm158, %v171, %v173
    %v177 = vsel %vm158, %v173, %v175
    %v181 = vadd.f32 %v121, %v176
    %v182 = vadd.f32 %v122, %v177
    %v183 = vadd.f32 %v123, %v175
    %187 = vrot.lane.b32.xlu0 %v136, 127
    %v188 = vpop.permute.xlu0 %187
    %189 = vrot.lane.b32.xlu0 %v137, 127
    %v190 = vpop.permute.xlu0 %189
    %191 = vrot.lane.b32.xlu0 %v138, 127
    %v192 = vpop.permute.xlu0 %191
    %v193 = vsel %vm158, %v188, %v190
    %v194 = vsel %vm158, %v190, %v192
    %v198 = vadd.f32 %v131, %v193
    %v199 = vadd.f32 %v132, %v194
    %v200 = vadd.f32 %v133, %v192
    %204 = vrot.lane.b32.xlu0 %v146, 127
    %v205 = vpop.permute.xlu0 %204
    %206 = vrot.lane.b32.xlu0 %v147, 127
    %v207 = vpop.permute.xlu0 %206
    %208 = vrot.lane.b32.xlu0 %v148, 127
    %v209 = vpop.permute.xlu0 %208
    %v210 = vsel %vm158, %v205, %v207
    %v211 = vsel %vm158, %v207, %v209
    %v215 = vadd.f32 %v141, %v210
    %v216 = vadd.f32 %v142, %v211
    %v217 = vadd.f32 %v143, %v209
    %221 = vrot.lane.b32.xlu0 %v181, 126
    %v222 = vpop.permute.xlu0 %221
    %223 = vrot.lane.b32.xlu0 %v182, 126
    %v224 = vpop.permute.xlu0 %223
    %225 = vrot.lane.b32.xlu0 %v183, 126
    %v226 = vpop.permute.xlu0 %225
    %vm227 = vcmask 1031168
    %v228 = vsel %vm227, %v222, %v224
    %v229 = vsel %vm227, %v224, %v226
    %v233 = vadd.f32 %v164, %v228
    %v234 = vadd.f32 %v165, %v229
    %v235 = vadd.f32 %v166, %v226
    %239 = vrot.lane.b32.xlu0 %v215, 126
    %v240 = vpop.permute.xlu0 %239
    %241 = vrot.lane.b32.xlu0 %v216, 126
    %v242 = vpop.permute.xlu0 %241
    %243 = vrot.lane.b32.xlu0 %v217, 126
    %v244 = vpop.permute.xlu0 %243
    %v245 = vsel %vm227, %v240, %v242
    %v246 = vsel %vm227, %v242, %v244
    %v250 = vadd.f32 %v198, %v245
    %v251 = vadd.f32 %v199, %v246
    %v252 = vadd.f32 %v200, %v244
    %256 = vrot.lane.b32.xlu0 %v250, 112
    %v257 = vpop.permute.xlu0 %256
    %258 = vrot.lane.b32.xlu0 %v251, 112
    %v259 = vpop.permute.xlu0 %258
    %260 = vrot.lane.b32.xlu0 %v252, 112
    %v261 = vpop.permute.xlu0 %260
    %vm262 = vcmask 916480
    %v263 = vsel %vm262, %v257, %v259
    %v264 = vsel %vm262, %v259, %v261
    %v268 = vadd.f32 %v233, %v263
    %v269 = vadd.f32 %v234, %v264
    %v270 = vadd.f32 %v235, %v261
    %s271 = sld [smem:[#allocation8]]
    %v272 = vstv %s271
    %v273 = vadd.f32 %v268, %v272
    %v274 = vadd.f32 %v269, %v272
    %v275 = vadd.f32 %v270, %v272
    %v276 = vmax.f32 %v273, 0.0
    %v277 = vmax.f32 %v274, 0.0
    %v278 = vmax.f32 %v275, 0.0
    %s279 = sld [smem:[#allocation7 + $0x8]]
    %v280 = vstv %s279
    %v281 = vmul.f32 %v280, %v106
    %v282 = vmul.f32 %v280, %v107
    %v283 = vmul.f32 %v280, %v108
    %s284 = sld [smem:[#allocation7 + $0x9]]
    %v285 = vstv %s284
    %v286 = vmul.f32 %v285, %v106
    %v287 = vmul.f32 %v285, %v107
    %v288 = vmul.f32 %v285, %v108
    %s289 = sld [smem:[#allocation7 + $0xa]]
    %v290 = vstv %s289
    %v291 = vmul.f32 %v290, %v106
    %v292 = vmul.f32 %v290, %v107
    %v293 = vmul.f32 %v290, %v108
    %s294 = sld [smem:[#allocation7 + $0xb]]
    %v295 = vstv %s294
    %v296 = vmul.f32 %v295, %v106
    %v297 = vmul.f32 %v295, %v107
    %v298 = vmul.f32 %v295, %v108
    %s299 = sld [smem:[#allocation7 + $0xc]]
    %v300 = vstv %s299
    %v301 = vmul.f32 %v300, %v106
    %v302 = vmul.f32 %v300, %v107
    %v303 = vmul.f32 %v300, %v108
    %s304 = sld [smem:[#allocation7 + $0xd]]
    %v305 = vstv %s304
    %v306 = vmul.f32 %v305, %v106
    %v307 = vmul.f32 %v305, %v107
    %v308 = vmul.f32 %v305, %v108
    %s309 = sld [smem:[#allocation7 + $0xe]]
    %v310 = vstv %s309
    %v311 = vmul.f32 %v310, %v106
    %v312 = vmul.f32 %v310, %v107
    %v313 = vmul.f32 %v310, %v108
    %s314 = sld [smem:[#allocation7 + $0xf]]
    %v315 = vstv %s314
    %v316 = vmul.f32 %v315, %v106
    %v317 = vmul.f32 %v315, %v107
    %v318 = vmul.f32 %v315, %v108
    %322 = vrot.lane.b32.xlu0 %v286, 127
    %v323 = vpop.permute.xlu0 %322
    %324 = vrot.lane.b32.xlu0 %v287, 127
    %v325 = vpop.permute.xlu0 %324
    %326 = vrot.lane.b32.xlu0 %v288, 127
    %v327 = vpop.permute.xlu0 %326
    %v328 = vsel %vm158, %v323, %v325
    %v329 = vsel %vm158, %v325, %v327
    %v333 = vadd.f32 %v281, %v328
    %v334 = vadd.f32 %v282, %v329
    %v335 = vadd.f32 %v283, %v327
    %339 = vrot.lane.b32.xlu0 %v296, 127
    %v340 = vpop.permute.xlu0 %339
    %341 = vrot.lane.b32.xlu0 %v297, 127
    %v342 = vpop.permute.xlu0 %341
    %343 = vrot.lane.b32.xlu0 %v298, 127
    %v344 = vpop.permute.xlu0 %343
    %v345 = vsel %vm158, %v340, %v342
    %v346 = vsel %vm158, %v342, %v344
    %v350 = vadd.f32 %v291, %v345
    %v351 = vadd.f32 %v292, %v346
    %v352 = vadd.f32 %v293, %v344
    %356 = vrot.lane.b32.xlu0 %v306, 127
    %v357 = vpop.permute.xlu0 %356
    %358 = vrot.lane.b32.xlu0 %v307, 127
    %v359 = vpop.permute.xlu0 %358
    %360 = vrot.lane.b32.xlu0 %v308, 127
    %v361 = vpop.permute.xlu0 %360
    %v362 = vsel %vm158, %v357, %v359
    %v363 = vsel %vm158, %v359, %v361
    %v367 = vadd.f32 %v301, %v362
    %v368 = vadd.f32 %v302, %v363
    %v369 = vadd.f32 %v303, %v361
    %373 = vrot.lane.b32.xlu0 %v316, 127
    %v374 = vpop.permute.xlu0 %373
    %375 = vrot.lane.b32.xlu0 %v317, 127
    %v376 = vpop.permute.xlu0 %375
    %377 = vrot.lane.b32.xlu0 %v318, 127
    %v378 = vpop.permute.xlu0 %377
    %v379 = vsel %vm158, %v374, %v376
    %v380 = vsel %vm158, %v376, %v378
    %v384 = vadd.f32 %v311, %v379
    %v385 = vadd.f32 %v312, %v380
    %v386 = vadd.f32 %v313, %v378
    %390 = vrot.lane.b32.xlu0 %v350, 126
    %v391 = vpop.permute.xlu0 %390
    %392 = vrot.lane.b32.xlu0 %v351, 126
    %v393 = vpop.permute.xlu0 %392
    %394 = vrot.lane.b32.xlu0 %v352, 126
    %v395 = vpop.permute.xlu0 %394
    %v396 = vsel %vm227, %v391, %v393
    %v397 = vsel %vm227, %v393, %v395
    %v401 = vadd.f32 %v333, %v396
    %v402 = vadd.f32 %v334, %v397
    %v403 = vadd.f32 %v335, %v395
    %407 = vrot.lane.b32.xlu0 %v384, 126
    %v408 = vpop.permute.xlu0 %407
    %409 = vrot.lane.b32.xlu0 %v385, 126
    %v410 = vpop.permute.xlu0 %409
    %411 = vrot.lane.b32.xlu0 %v386, 126
    %v412 = vpop.permute.xlu0 %411
    %v413 = vsel %vm227, %v408, %v410
    %v414 = vsel %vm227, %v410, %v412
    %v418 = vadd.f32 %v367, %v413
    %v419 = vadd.f32 %v368, %v414
    %v420 = vadd.f32 %v369, %v412
    %424 = vrot.lane.b32.xlu0 %v418, 112
    %v425 = vpop.permute.xlu0 %424
    %426 = vrot.lane.b32.xlu0 %v419, 112
    %v427 = vpop.permute.xlu0 %426
    %428 = vrot.lane.b32.xlu0 %v420, 112
    %v429 = vpop.permute.xlu0 %428
    %v430 = vsel %vm262, %v425, %v427
    %v431 = vsel %vm262, %v427, %v429
    %v435 = vadd.f32 %v401, %v430
    %v436 = vadd.f32 %v402, %v431
    %v437 = vadd.f32 %v403, %v429
    %s438 = sld [smem:[#allocation8 + $0x1]]
    %v439 = vstv %s438
    %v440 = vadd.f32 %v435, %v439
    %v441 = vadd.f32 %v436, %v439
    %v442 = vadd.f32 %v437, %v439
    %v443 = vmax.f32 %v440, 0.0
    %v444 = vmax.f32 %v441, 0.0
    %v445 = vmax.f32 %v442, 0.0
    %s446 = sld [smem:[#allocation7 + $0x10]]
    %v447 = vstv %s446
    %v448 = vmul.f32 %v447, %v106
    %v449 = vmul.f32 %v447, %v107
    %v450 = vmul.f32 %v447, %v108
    %s451 = sld [smem:[#allocation7 + $0x11]]
    %v452 = vstv %s451
    %v453 = vmul.f32 %v452, %v106
    %v454 = vmul.f32 %v452, %v107
    %v455 = vmul.f32 %v452, %v108
    %s456 = sld [smem:[#allocation7 + $0x12]]
    %v457 = vstv %s456
    %v458 = vmul.f32 %v457, %v106
    %v459 = vmul.f32 %v457, %v107
    %v460 = vmul.f32 %v457, %v108
    %s461 = sld [smem:[#allocation7 + $0x13]]
    %v462 = vstv %s461
    %v463 = vmul.f32 %v462, %v106
    %v464 = vmul.f32 %v462, %v107
    %v465 = vmul.f32 %v462, %v108
    %s466 = sld [smem:[#allocation7 + $0x14]]
    %v467 = vstv %s466
    %v468 = vmul.f32 %v467, %v106
    %v469 = vmul.f32 %v467, %v107
    %v470 = vmul.f32 %v467, %v108
    %s471 = sld [smem:[#allocation7 + $0x15]]
    %v472 = vstv %s471
    %v473 = vmul.f32 %v472, %v106
    %v474 = vmul.f32 %v472, %v107
    %v475 = vmul.f32 %v472, %v108
    %s476 = sld [smem:[#allocation7 + $0x16]]
    %v477 = vstv %s476
    %v478 = vmul.f32 %v477, %v106
    %v479 = vmul.f32 %v477, %v107
    %v480 = vmul.f32 %v477, %v108
    %s481 = sld [smem:[#allocation7 + $0x17]]
    %v482 = vstv %s481
    %v483 = vmul.f32 %v482, %v106
    %v484 = vmul.f32 %v482, %v107
    %v485 = vmul.f32 %v482, %v108
    %489 = vrot.lane.b32.xlu0 %v453, 127
    %v490 = vpop.permute.xlu0 %489
    %491 = vrot.lane.b32.xlu0 %v454, 127
    %v492 = vpop.permute.xlu0 %491
    %493 = vrot.lane.b32.xlu0 %v455, 127
    %v494 = vpop.permute.xlu0 %493
    %v495 = vsel %vm158, %v490, %v492
    %v496 = vsel %vm158, %v492, %v494
    %v500 = vadd.f32 %v448, %v495
    %v501 = vadd.f32 %v449, %v496
    %v502 = vadd.f32 %v450, %v494
    %506 = vrot.lane.b32.xlu0 %v463, 127
    %v507 = vpop.permute.xlu0 %506
    %508 = vrot.lane.b32.xlu0 %v464, 127
    %v509 = vpop.permute.xlu0 %508
    %510 = vrot.lane.b32.xlu0 %v465, 127
    %v511 = vpop.permute.xlu0 %510
    %v512 = vsel %vm158, %v507, %v509
    %v513 = vsel %vm158, %v509, %v511
    %v517 = vadd.f32 %v458, %v512
    %v518 = vadd.f32 %v459, %v513
    %v519 = vadd.f32 %v460, %v511
    %523 = vrot.lane.b32.xlu0 %v473, 127
    %v524 = vpop.permute.xlu0 %523
    %525 = vrot.lane.b32.xlu0 %v474, 127
    %v526 = vpop.permute.xlu0 %525
    %527 = vrot.lane.b32.xlu0 %v475, 127
    %v528 = vpop.permute.xlu0 %527
    %v529 = vsel %vm158, %v524, %v526
    %v530 = vsel %vm158, %v526, %v528
    %v534 = vadd.f32 %v468, %v529
    %v535 = vadd.f32 %v469, %v530
    %v536 = vadd.f32 %v470, %v528
    %540 = vrot.lane.b32.xlu0 %v483, 127
    %v541 = vpop.permute.xlu0 %540
    %542 = vrot.lane.b32.xlu0 %v484, 127
    %v543 = vpop.permute.xlu0 %542
    %544 = vrot.lane.b32.xlu0 %v485, 127
    %v545 = vpop.permute.xlu0 %544
    %v546 = vsel %vm158, %v541, %v543
    %v547 = vsel %vm158, %v543, %v545
    %v551 = vadd.f32 %v478, %v546
    %v552 = vadd.f32 %v479, %v547
    %v553 = vadd.f32 %v480, %v545
    %557 = vrot.lane.b32.xlu0 %v517, 126
    %v558 = vpop.permute.xlu0 %557
    %559 = vrot.lane.b32.xlu0 %v518, 126
    %v560 = vpop.permute.xlu0 %559
    %561 = vrot.lane.b32.xlu0 %v519, 126
    %v562 = vpop.permute.xlu0 %561
    %v563 = vsel %vm227, %v558, %v560
    %v564 = vsel %vm227, %v560, %v562
    %v568 = vadd.f32 %v500, %v563
    %v569 = vadd.f32 %v501, %v564
    %v570 = vadd.f32 %v502, %v562
    %574 = vrot.lane.b32.xlu0 %v551, 126
    %v575 = vpop.permute.xlu0 %574
    %576 = vrot.lane.b32.xlu0 %v552, 126
    %v577 = vpop.permute.xlu0 %576
    %578 = vrot.lane.b32.xlu0 %v553, 126
    %v579 = vpop.permute.xlu0 %578
    %v580 = vsel %vm227, %v575, %v577
    %v581 = vsel %vm227, %v577, %v579
    %v585 = vadd.f32 %v534, %v580
    %v586 = vadd.f32 %v535, %v581
    %v587 = vadd.f32 %v536, %v579
    %591 = vrot.lane.b32.xlu0 %v585, 112
    %v592 = vpop.permute.xlu0 %591
    %593 = vrot.lane.b32.xlu0 %v586, 112
    %v594 = vpop.permute.xlu0 %593
    %595 = vrot.lane.b32.xlu0 %v587, 112
    %v596 = vpop.permute.xlu0 %595
    %v597 = vsel %vm262, %v592, %v594
    %v598 = vsel %vm262, %v594, %v596
    %v602 = vadd.f32 %v568, %v597
    %v603 = vadd.f32 %v569, %v598
    %v604 = vadd.f32 %v570, %v596
    %s605 = sld [smem:[#allocation8 + $0x2]]
    %v606 = vstv %s605
    %v607 = vadd.f32 %v602, %v606
    %v608 = vadd.f32 %v603, %v606
    %v609 = vadd.f32 %v604, %v606
    %v610 = vmax.f32 %v607, 0.0
    %v611 = vmax.f32 %v608, 0.0
    %v612 = vmax.f32 %v609, 0.0
    %s613 = sld [smem:[#allocation10]]
    %v614 = vstv %s613
    %v615 = vmul.f32 %v614, %v276
    %v616 = vmul.f32 %v614, %v277
    %s617 = sld [smem:[#allocation10 + $0x1]]
    %v618 = vstv %s617
    %v619 = vmul.f32 %v618, %v276
    %v620 = vmul.f32 %v618, %v277
    %v621 = vmul.f32 %v618, %v278
    %s622 = sld [smem:[#allocation10 + $0x2]]
    %v623 = vstv %s622
    %v624 = vmul.f32 %v623, %v276
    %v625 = vmul.f32 %v623, %v277
    %v626 = vmul.f32 %v623, %v278
    %s627 = sld [smem:[#allocation10 + $0x3]]
    %v628 = vstv %s627
    %v629 = vmul.f32 %v628, %v276
    %v630 = vmul.f32 %v628, %v277
    %v631 = vmul.f32 %v628, %v278
    %s632 = sld [smem:[#allocation10 + $0x4]]
    %v633 = vstv %s632
    %v634 = vmul.f32 %v633, %v276
    %v635 = vmul.f32 %v633, %v277
    %v636 = vmul.f32 %v633, %v278
    %s637 = sld [smem:[#allocation10 + $0x5]]
    %v638 = vstv %s637
    %v639 = vmul.f32 %v638, %v276
    %v640 = vmul.f32 %v638, %v277
    %v641 = vmul.f32 %v638, %v278
    %s642 = sld [smem:[#allocation10 + $0x6]]
    %v643 = vstv %s642
    %v644 = vmul.f32 %v643, %v276
    %v645 = vmul.f32 %v643, %v277
    %v646 = vmul.f32 %v643, %v278
    %s647 = sld [smem:[#allocation10 + $0x7]]
    %v648 = vstv %s647
    %v649 = vmul.f32 %v648, %v276
    %v650 = vmul.f32 %v648, %v277
    %v651 = vmul.f32 %v648, %v278
    %s652 = sld [smem:[#allocation10 + $0x8]]
    %v653 = vstv %s652
    %v654 = vmul.f32 %v653, %v443
    %v655 = vmul.f32 %v653, %v444
    %s656 = sld [smem:[#allocation10 + $0x9]]
    %v657 = vstv %s656
    %v658 = vmul.f32 %v657, %v443
    %v659 = vmul.f32 %v657, %v444
    %v660 = vmul.f32 %v657, %v445
    %s661 = sld [smem:[#allocation10 + $0xa]]
    %v662 = vstv %s661
    %v663 = vmul.f32 %v662, %v443
    %v664 = vmul.f32 %v662, %v444
    %v665 = vmul.f32 %v662, %v445
    %s666 = sld [smem:[#allocation10 + $0xb]]
    %v667 = vstv %s666
    %v668 = vmul.f32 %v667, %v443
    %v669 = vmul.f32 %v667, %v444
    %v670 = vmul.f32 %v667, %v445
    %s671 = sld [smem:[#allocation10 + $0xc]]
    %v672 = vstv %s671
    %v673 = vmul.f32 %v672, %v443
    %v674 = vmul.f32 %v672, %v444
    %v675 = vmul.f32 %v672, %v445
    %s676 = sld [smem:[#allocation10 + $0xd]]
    %v677 = vstv %s676
    %v678 = vmul.f32 %v677, %v443
    %v679 = vmul.f32 %v677, %v444
    %v680 = vmul.f32 %v677, %v445
    %s681 = sld [smem:[#allocation10 + $0xe]]
    %v682 = vstv %s681
    %v683 = vmul.f32 %v682, %v443
    %v684 = vmul.f32 %v682, %v444
    %v685 = vmul.f32 %v682, %v445
    %s686 = sld [smem:[#allocation10 + $0xf]]
    %v687 = vstv %s686
    %v688 = vmul.f32 %v687, %v443
    %v689 = vmul.f32 %v687, %v444
    %v690 = vmul.f32 %v687, %v445
    %s691 = sld [smem:[#allocation10 + $0x10]]
    %v692 = vstv %s691
    %v693 = vmul.f32 %v692, %v610
    %v694 = vmul.f32 %v692, %v611
    %s695 = sld [smem:[#allocation10 + $0x11]]
    %v696 = vstv %s695
    %v697 = vmul.f32 %v696, %v610
    %v698 = vmul.f32 %v696, %v611
    %v699 = vmul.f32 %v696, %v612
    %s700 = sld [smem:[#allocation10 + $0x12]]
    %v701 = vstv %s700
    %v702 = vmul.f32 %v701, %v610
    %v703 = vmul.f32 %v701, %v611
    %v704 = vmul.f32 %v701, %v612
    %s705 = sld [smem:[#allocation10 + $0x13]]
    %v706 = vstv %s705
    %v707 = vmul.f32 %v706, %v610
    %v708 = vmul.f32 %v706, %v611
    %v709 = vmul.f32 %v706, %v612
    %s710 = sld [smem:[#allocation10 + $0x14]]
    %v711 = vstv %s710
    %v712 = vmul.f32 %v711, %v610
    %v713 = vmul.f32 %v711, %v611
    %v714 = vmul.f32 %v711, %v612
    %s715 = sld [smem:[#allocation10 + $0x15]]
    %v716 = vstv %s715
    %v717 = vmul.f32 %v716, %v610
    %v718 = vmul.f32 %v716, %v611
    %v719 = vmul.f32 %v716, %v612
    %s720 = sld [smem:[#allocation10 + $0x16]]
    %v721 = vstv %s720
    %v722 = vmul.f32 %v721, %v610
    %v723 = vmul.f32 %v721, %v611
    %v724 = vmul.f32 %v721, %v612
    %s725 = sld [smem:[#allocation10 + $0x17]]
    %v726 = vstv %s725
    %v727 = vmul.f32 %v726, %v610
    %v728 = vmul.f32 %v726, %v611
    %v729 = vmul.f32 %v726, %v612
    %733 = vrot.lane.b32.xlu0 %v619, 127
    %v734 = vpop.permute.xlu0 %733
    %735 = vrot.lane.b32.xlu0 %v620, 127
    %v736 = vpop.permute.xlu0 %735
    %737 = vrot.lane.b32.xlu0 %v621, 127
    %v738 = vpop.permute.xlu0 %737
    %v739 = vsel %vm158, %v734, %v736
    %v740 = vsel %vm158, %v736, %v738
    %v743 = vadd.f32 %v615, %v739
    %v744 = vadd.f32 %v616, %v740
    %748 = vrot.lane.b32.xlu0 %v629, 127
    %v749 = vpop.permute.xlu0 %748
    %750 = vrot.lane.b32.xlu0 %v630, 127
    %v751 = vpop.permute.xlu0 %750
    %752 = vrot.lane.b32.xlu0 %v631, 127
    %v753 = vpop.permute.xlu0 %752
    %v754 = vsel %vm158, %v749, %v751
    %v755 = vsel %vm158, %v751, %v753
    %v759 = vadd.f32 %v624, %v754
    %v760 = vadd.f32 %v625, %v755
    %v761 = vadd.f32 %v626, %v753
    %765 = vrot.lane.b32.xlu0 %v639, 127
    %v766 = vpop.permute.xlu0 %765
    %767 = vrot.lane.b32.xlu0 %v640, 127
    %v768 = vpop.permute.xlu0 %767
    %769 = vrot.lane.b32.xlu0 %v641, 127
    %v770 = vpop.permute.xlu0 %769
    %v771 = vsel %vm158, %v766, %v768
    %v772 = vsel %vm158, %v768, %v770
    %v776 = vadd.f32 %v634, %v771
    %v777 = vadd.f32 %v635, %v772
    %v778 = vadd.f32 %v636, %v770
    %782 = vrot.lane.b32.xlu0 %v649, 127
    %v783 = vpop.permute.xlu0 %782
    %784 = vrot.lane.b32.xlu0 %v650, 127
    %v785 = vpop.permute.xlu0 %784
    %786 = vrot.lane.b32.xlu0 %v651, 127
    %v787 = vpop.permute.xlu0 %786
    %v788 = vsel %vm158, %v783, %v785
    %v789 = vsel %vm158, %v785, %v787
    %v793 = vadd.f32 %v644, %v788
    %v794 = vadd.f32 %v645, %v789
    %v795 = vadd.f32 %v646, %v787
    %799 = vrot.lane.b32.xlu0 %v658, 127
    %v800 = vpop.permute.xlu0 %799
    %801 = vrot.lane.b32.xlu0 %v659, 127
    %v802 = vpop.permute.xlu0 %801
    %803 = vrot.lane.b32.xlu0 %v660, 127
    %v804 = vpop.permute.xlu0 %803
    %v805 = vsel %vm158, %v800, %v802
    %v806 = vsel %vm158, %v802, %v804
    %v809 = vadd.f32 %v654, %v805
    %v810 = vadd.f32 %v655, %v806
    %814 = vrot.lane.b32.xlu0 %v668, 127
    %v815 = vpop.permute.xlu0 %814
    %816 = vrot.lane.b32.xlu0 %v669, 127
    %v817 = vpop.permute.xlu0 %816
    %818 = vrot.lane.b32.xlu0 %v670, 127
    %v819 = vpop.permute.xlu0 %818
    %v820 = vsel %vm158, %v815, %v817
    %v821 = vsel %vm158, %v817, %v819
    %v825 = vadd.f32 %v663, %v820
    %v826 = vadd.f32 %v664, %v821
    %v827 = vadd.f32 %v665, %v819
    %831 = vrot.lane.b32.xlu0 %v678, 127
    %v832 = vpop.permute.xlu0 %831
    %833 = vrot.lane.b32.xlu0 %v679, 127
    %v834 = vpop.permute.xlu0 %833
    %835 = vrot.lane.b32.xlu0 %v680, 127
    %v836 = vpop.permute.xlu0 %835
    %v837 = vsel %vm158, %v832, %v834
    %v838 = vsel %vm158, %v834, %v836
    %v842 = vadd.f32 %v673, %v837
    %v843 = vadd.f32 %v674, %v838
    %v844 = vadd.f32 %v675, %v836
    %848 = vrot.lane.b32.xlu0 %v688, 127
    %v849 = vpop.permute.xlu0 %848
    %850 = vrot.lane.b32.xlu0 %v689, 127
    %v851 = vpop.permute.xlu0 %850
    %852 = vrot.lane.b32.xlu0 %v690, 127
    %v853 = vpop.permute.xlu0 %852
    %v854 = vsel %vm158, %v849, %v851
    %v855 = vsel %vm158, %v851, %v853
    %v859 = vadd.f32 %v683, %v854
    %v860 = vadd.f32 %v684, %v855
    %v861 = vadd.f32 %v685, %v853
    %865 = vrot.lane.b32.xlu0 %v697, 127
    %v866 = vpop.permute.xlu0 %865
    %867 = vrot.lane.b32.xlu0 %v698, 127
    %v868 = vpop.permute.xlu0 %867
    %869 = vrot.lane.b32.xlu0 %v699, 127
    %v870 = vpop.permute.xlu0 %869
    %v871 = vsel %vm158, %v866, %v868
    %v872 = vsel %vm158, %v868, %v870
    %v875 = vadd.f32 %v693, %v871
    %v876 = vadd.f32 %v694, %v872
    %880 = vrot.lane.b32.xlu0 %v707, 127
    %v881 = vpop.permute.xlu0 %880
    %882 = vrot.lane.b32.xlu0 %v708, 127
    %v883 = vpop.permute.xlu0 %882
    %884 = vrot.lane.b32.xlu0 %v709, 127
    %v885 = vpop.permute.xlu0 %884
    %v886 = vsel %vm158, %v881, %v883
    %v887 = vsel %vm158, %v883, %v885
    %v891 = vadd.f32 %v702, %v886
    %v892 = vadd.f32 %v703, %v887
    %v893 = vadd.f32 %v704, %v885
    %897 = vrot.lane.b32.xlu0 %v717, 127
    %v898 = vpop.permute.xlu0 %897
    %899 = vrot.lane.b32.xlu0 %v718, 127
    %v900 = vpop.permute.xlu0 %899
    %901 = vrot.lane.b32.xlu0 %v719, 127
    %v902 = vpop.permute.xlu0 %901
    %v903 = vsel %vm158, %v898, %v900
    %v904 = vsel %vm158, %v900, %v902
    %v908 = vadd.f32 %v712, %v903
    %v909 = vadd.f32 %v713, %v904
    %v910 = vadd.f32 %v714, %v902
    %914 = vrot.lane.b32.xlu0 %v727, 127
    %v915 = vpop.permute.xlu0 %914
    %916 = vrot.lane.b32.xlu0 %v728, 127
    %v917 = vpop.permute.xlu0 %916
    %918 = vrot.lane.b32.xlu0 %v729, 127
    %v919 = vpop.permute.xlu0 %918
    %v920 = vsel %vm158, %v915, %v917
    %v921 = vsel %vm158, %v917, %v919
    %v925 = vadd.f32 %v722, %v920
    %v926 = vadd.f32 %v723, %v921
    %v927 = vadd.f32 %v724, %v919
    %931 = vrot.lane.b32.xlu0 %v759, 126
    %v932 = vpop.permute.xlu0 %931
    %933 = vrot.lane.b32.xlu0 %v760, 126
    %v934 = vpop.permute.xlu0 %933
    %935 = vrot.lane.b32.xlu0 %v761, 126
    %v936 = vpop.permute.xlu0 %935
    %v937 = vsel %vm227, %v932, %v934
    %v938 = vsel %vm227, %v934, %v936
    %v941 = vadd.f32 %v743, %v937
    %v942 = vadd.f32 %v744, %v938
    %946 = vrot.lane.b32.xlu0 %v793, 126
    %v947 = vpop.permute.xlu0 %946
    %948 = vrot.lane.b32.xlu0 %v794, 126
    %v949 = vpop.permute.xlu0 %948
    %950 = vrot.lane.b32.xlu0 %v795, 126
    %v951 = vpop.permute.xlu0 %950
    %v952 = vsel %vm227, %v947, %v949
    %v953 = vsel %vm227, %v949, %v951
    %v957 = vadd.f32 %v776, %v952
    %v958 = vadd.f32 %v777, %v953
    %v959 = vadd.f32 %v778, %v951
    %963 = vrot.lane.b32.xlu0 %v825, 126
    %v964 = vpop.permute.xlu0 %963
    %965 = vrot.lane.b32.xlu0 %v826, 126
    %v966 = vpop.permute.xlu0 %965
    %967 = vrot.lane.b32.xlu0 %v827, 126
    %v968 = vpop.permute.xlu0 %967
    %v969 = vsel %vm227, %v964, %v966
    %v970 = vsel %vm227, %v966, %v968
    %v973 = vadd.f32 %v809, %v969
    %v974 = vadd.f32 %v810, %v970
    %978 = vrot.lane.b32.xlu0 %v859, 126
    %v979 = vpop.permute.xlu0 %978
    %980 = vrot.lane.b32.xlu0 %v860, 126
    %v981 = vpop.permute.xlu0 %980
    %982 = vrot.lane.b32.xlu0 %v861, 126
    %v983 = vpop.permute.xlu0 %982
    %v984 = vsel %vm227, %v979, %v981
    %v985 = vsel %vm227, %v981, %v983
    %v989 = vadd.f32 %v842, %v984
    %v990 = vadd.f32 %v843, %v985
    %v991 = vadd.f32 %v844, %v983
    %995 = vrot.lane.b32.xlu0 %v891, 126
    %v996 = vpop.permute.xlu0 %995
    %997 = vrot.lane.b32.xlu0 %v892, 126
    %v998 = vpop.permute.xlu0 %997
    %999 = vrot.lane.b32.xlu0 %v893, 126
    %v1000 = vpop.permute.xlu0 %999
    %v1001 = vsel %vm227, %v996, %v998
    %v1002 = vsel %vm227, %v998, %v1000
    %v1005 = vadd.f32 %v875, %v1001
    %v1006 = vadd.f32 %v876, %v1002
    %1010 = vrot.lane.b32.xlu0 %v925, 126
    %v1011 = vpop.permute.xlu0 %1010
    %1012 = vrot.lane.b32.xlu0 %v926, 126
    %v1013 = vpop.permute.xlu0 %1012
    %1014 = vrot.lane.b32.xlu0 %v927, 126
    %v1015 = vpop.permute.xlu0 %1014
    %v1016 = vsel %vm227, %v1011, %v1013
    %v1017 = vsel %vm227, %v1013, %v1015
    %v1021 = vadd.f32 %v908, %v1016
    %v1022 = vadd.f32 %v909, %v1017
    %v1023 = vadd.f32 %v910, %v1015
    %1027 = vrot.lane.b32.xlu0 %v957, 112
    %v1028 = vpop.permute.xlu0 %1027
    %1029 = vrot.lane.b32.xlu0 %v958, 112
    %v1030 = vpop.permute.xlu0 %1029
    %1031 = vrot.lane.b32.xlu0 %v959, 112
    %v1032 = vpop.permute.xlu0 %1031
    %v1033 = vsel %vm262, %v1028, %v1030
    %v1034 = vsel %vm262, %v1030, %v1032
    %v1037 = vadd.f32 %v941, %v1033
    %v1038 = vadd.f32 %v942, %v1034
    %1042 = vrot.lane.b32.xlu0 %v989, 112
    %v1043 = vpop.permute.xlu0 %1042
    %1044 = vrot.lane.b32.xlu0 %v990, 112
    %v1045 = vpop.permute.xlu0 %1044
    %1046 = vrot.lane.b32.xlu0 %v991, 112
    %v1047 = vpop.permute.xlu0 %1046
    %v1048 = vsel %vm262, %v1043, %v1045
    %v1049 = vsel %vm262, %v1045, %v1047
    %v1052 = vadd.f32 %v973, %v1048
    %v1053 = vadd.f32 %v974, %v1049
    %1057 = vrot.lane.b32.xlu0 %v1021, 112
    %v1058 = vpop.permute.xlu0 %1057
    %1059 = vrot.lane.b32.xlu0 %v1022, 112
    %v1060 = vpop.permute.xlu0 %1059
    %1061 = vrot.lane.b32.xlu0 %v1023, 112
    %v1062 = vpop.permute.xlu0 %1061
    %v1063 = vsel %vm262, %v1058, %v1060
    %v1064 = vsel %vm262, %v1060, %v1062
    %v1067 = vadd.f32 %v1005, %v1063
    %v1068 = vadd.f32 %v1006, %v1064
    %v1069 = vadd.f32 %v1037, %v1052
    %v1070 = vadd.f32 %v1038, %v1053
    %v1071 = vadd.f32 %v1069, %v1067
    %v1072 = vadd.f32 %v1070, %v1068
    %s1073 = sld [smem:[#allocation11]]
    %v1074 = vstv %s1073
    %v1075 = vadd.f32 %v1071, %v1074
    %v1076 = vadd.f32 %v1072, %v1074
    %v1077 = vmax.f32 %v1075, 0.0
    %v1078 = vmax.f32 %v1076, 0.0
    %s1079 = sld [smem:[#allocation10 + $0x18]]
    %v1080 = vstv %s1079
    %v1081 = vmul.f32 %v1080, %v276
    %v1082 = vmul.f32 %v1080, %v277
    %s1083 = sld [smem:[#allocation10 + $0x19]]
    %v1084 = vstv %s1083
    %v1085 = vmul.f32 %v1084, %v276
    %v1086 = vmul.f32 %v1084, %v277
    %v1087 = vmul.f32 %v1084, %v278
    %s1088 = sld [smem:[#allocation10 + $0x1a]]
    %v1089 = vstv %s1088
    %v1090 = vmul.f32 %v1089, %v276
    %v1091 = vmul.f32 %v1089, %v277
    %v1092 = vmul.f32 %v1089, %v278
    %s1093 = sld [smem:[#allocation10 + $0x1b]]
    %v1094 = vstv %s1093
    %v1095 = vmul.f32 %v1094, %v276
    %v1096 = vmul.f32 %v1094, %v277
    %v1097 = vmul.f32 %v1094, %v278
    %s1098 = sld [smem:[#allocation10 + $0x1c]]
    %v1099 = vstv %s1098
    %v1100 = vmul.f32 %v1099, %v276
    %v1101 = vmul.f32 %v1099, %v277
    %v1102 = vmul.f32 %v1099, %v278
    %s1103 = sld [smem:[#allocation10 + $0x1d]]
    %v1104 = vstv %s1103
    %v1105 = vmul.f32 %v1104, %v276
    %v1106 = vmul.f32 %v1104, %v277
    %v1107 = vmul.f32 %v1104, %v278
    %s1108 = sld [smem:[#allocation10 + $0x1e]]
    %v1109 = vstv %s1108
    %v1110 = vmul.f32 %v1109, %v276
    %v1111 = vmul.f32 %v1109, %v277
    %v1112 = vmul.f32 %v1109, %v278
    %s1113 = sld [smem:[#allocation10 + $0x1f]]
    %v1114 = vstv %s1113
    %v1115 = vmul.f32 %v1114, %v276
    %v1116 = vmul.f32 %v1114, %v277
    %v1117 = vmul.f32 %v1114, %v278
    %s1118 = sld [smem:[#allocation10 + $0x20]]
    %v1119 = vstv %s1118
    %v1120 = vmul.f32 %v1119, %v443
    %v1121 = vmul.f32 %v1119, %v444
    %s1122 = sld [smem:[#allocation10 + $0x21]]
    %v1123 = vstv %s1122
    %v1124 = vmul.f32 %v1123, %v443
    %v1125 = vmul.f32 %v1123, %v444
    %v1126 = vmul.f32 %v1123, %v445
    %s1127 = sld [smem:[#allocation10 + $0x22]]
    %v1128 = vstv %s1127
    %v1129 = vmul.f32 %v1128, %v443
    %v1130 = vmul.f32 %v1128, %v444
    %v1131 = vmul.f32 %v1128, %v445
    %s1132 = sld [smem:[#allocation10 + $0x23]]
    %v1133 = vstv %s1132
    %v1134 = vmul.f32 %v1133, %v443
    %v1135 = vmul.f32 %v1133, %v444
    %v1136 = vmul.f32 %v1133, %v445
    %s1137 = sld [smem:[#allocation10 + $0x24]]
    %v1138 = vstv %s1137
    %v1139 = vmul.f32 %v1138, %v443
    %v1140 = vmul.f32 %v1138, %v444
    %v1141 = vmul.f32 %v1138, %v445
    %s1142 = sld [smem:[#allocation10 + $0x25]]
    %v1143 = vstv %s1142
    %v1144 = vmul.f32 %v1143, %v443
    %v1145 = vmul.f32 %v1143, %v444
    %v1146 = vmul.f32 %v1143, %v445
    %s1147 = sld [smem:[#allocation10 + $0x26]]
    %v1148 = vstv %s1147
    %v1149 = vmul.f32 %v1148, %v443
    %v1150 = vmul.f32 %v1148, %v444
    %v1151 = vmul.f32 %v1148, %v445
    %s1152 = sld [smem:[#allocation10 + $0x27]]
    %v1153 = vstv %s1152
    %v1154 = vmul.f32 %v1153, %v443
    %v1155 = vmul.f32 %v1153, %v444
    %v1156 = vmul.f32 %v1153, %v445
    %s1157 = sld [smem:[#allocation10 + $0x28]]
    %v1158 = vstv %s1157
    %v1159 = vmul.f32 %v1158, %v610
    %v1160 = vmul.f32 %v1158, %v611
    %s1161 = sld [smem:[#allocation10 + $0x29]]
    %v1162 = vstv %s1161
    %v1163 = vmul.f32 %v1162, %v610
    %v1164 = vmul.f32 %v1162, %v611
    %v1165 = vmul.f32 %v1162, %v612
    %s1166 = sld [smem:[#allocation10 + $0x2a]]
    %v1167 = vstv %s1166
    %v1168 = vmul.f32 %v1167, %v610
    %v1169 = vmul.f32 %v1167, %v611
    %v1170 = vmul.f32 %v1167, %v612
    %s1171 = sld [smem:[#allocation10 + $0x2b]]
    %v1172 = vstv %s1171
    %v1173 = vmul.f32 %v1172, %v610
    %v1174 = vmul.f32 %v1172, %v611
    %v1175 = vmul.f32 %v1172, %v612
    %s1176 = sld [smem:[#allocation10 + $0x2c]]
    %v1177 = vstv %s1176
    %v1178 = vmul.f32 %v1177, %v610
    %v1179 = vmul.f32 %v1177, %v611
    %v1180 = vmul.f32 %v1177, %v612
    %s1181 = sld [smem:[#allocation10 + $0x2d]]
    %v1182 = vstv %s1181
    %v1183 = vmul.f32 %v1182, %v610
    %v1184 = vmul.f32 %v1182, %v611
    %v1185 = vmul.f32 %v1182, %v612
    %s1186 = sld [smem:[#allocation10 + $0x2e]]
    %v1187 = vstv %s1186
    %v1188 = vmul.f32 %v1187, %v610
    %v1189 = vmul.f32 %v1187, %v611
    %v1190 = vmul.f32 %v1187, %v612
    %s1191 = sld [smem:[#allocation10 + $0x2f]]
    %v1192 = vstv %s1191
    %v1193 = vmul.f32 %v1192, %v610
    %v1194 = vmul.f32 %v1192, %v611
    %v1195 = vmul.f32 %v1192, %v612
    %1199 = vrot.lane.b32.xlu0 %v1085, 127
    %v1200 = vpop.permute.xlu0 %1199
    %1201 = vrot.lane.b32.xlu0 %v1086, 127
    %v1202 = vpop.permute.xlu0 %1201
    %1203 = vrot.lane.b32.xlu0 %v1087, 127
    %v1204 = vpop.permute.xlu0 %1203
    %v1205 = vsel %vm158, %v1200, %v1202
    %v1206 = vsel %vm158, %v1202, %v1204
    %v1209 = vadd.f32 %v1081, %v1205
    %v1210 = vadd.f32 %v1082, %v1206
    %1214 = vrot.lane.b32.xlu0 %v1095, 127
    %v1215 = vpop.permute.xlu0 %1214
    %1216 = vrot.lane.b32.xlu0 %v1096, 127
    %v1217 = vpop.permute.xlu0 %1216
    %1218 = vrot.lane.b32.xlu0 %v1097, 127
    %v1219 = vpop.permute.xlu0 %1218
    %v1220 = vsel %vm158, %v1215, %v1217
    %v1221 = vsel %vm158, %v1217, %v1219
    %v1225 = vadd.f32 %v1090, %v1220
    %v1226 = vadd.f32 %v1091, %v1221
    %v1227 = vadd.f32 %v1092, %v1219
    %1231 = vrot.lane.b32.xlu0 %v1105, 127
    %v1232 = vpop.permute.xlu0 %1231
    %1233 = vrot.lane.b32.xlu0 %v1106, 127
    %v1234 = vpop.permute.xlu0 %1233
    %1235 = vrot.lane.b32.xlu0 %v1107, 127
    %v1236 = vpop.permute.xlu0 %1235
    %v1237 = vsel %vm158, %v1232, %v1234
    %v1238 = vsel %vm158, %v1234, %v1236
    %v1242 = vadd.f32 %v1100, %v1237
    %v1243 = vadd.f32 %v1101, %v1238
    %v1244 = vadd.f32 %v1102, %v1236
    %1248 = vrot.lane.b32.xlu0 %v1115, 127
    %v1249 = vpop.permute.xlu0 %1248
    %1250 = vrot.lane.b32.xlu0 %v1116, 127
    %v1251 = vpop.permute.xlu0 %1250
    %1252 = vrot.lane.b32.xlu0 %v1117, 127
    %v1253 = vpop.permute.xlu0 %1252
    %v1254 = vsel %vm158, %v1249, %v1251
    %v1255 = vsel %vm158, %v1251, %v1253
    %v1259 = vadd.f32 %v1110, %v1254
    %v1260 = vadd.f32 %v1111, %v1255
    %v1261 = vadd.f32 %v1112, %v1253
    %1265 = vrot.lane.b32.xlu0 %v1124, 127
    %v1266 = vpop.permute.xlu0 %1265
    %1267 = vrot.lane.b32.xlu0 %v1125, 127
    %v1268 = vpop.permute.xlu0 %1267
    %1269 = vrot.lane.b32.xlu0 %v1126, 127
    %v1270 = vpop.permute.xlu0 %1269
    %v1271 = vsel %vm158, %v1266, %v1268
    %v1272 = vsel %vm158, %v1268, %v1270
    %v1275 = vadd.f32 %v1120, %v1271
    %v1276 = vadd.f32 %v1121, %v1272
    %1280 = vrot.lane.b32.xlu0 %v1134, 127
    %v1281 = vpop.permute.xlu0 %1280
    %1282 = vrot.lane.b32.xlu0 %v1135, 127
    %v1283 = vpop.permute.xlu0 %1282
    %1284 = vrot.lane.b32.xlu0 %v1136, 127
    %v1285 = vpop.permute.xlu0 %1284
    %v1286 = vsel %vm158, %v1281, %v1283
    %v1287 = vsel %vm158, %v1283, %v1285
    %v1291 = vadd.f32 %v1129, %v1286
    %v1292 = vadd.f32 %v1130, %v1287
    %v1293 = vadd.f32 %v1131, %v1285
    %1297 = vrot.lane.b32.xlu0 %v1144, 127
    %v1298 = vpop.permute.xlu0 %1297
    %1299 = vrot.lane.b32.xlu0 %v1145, 127
    %v1300 = vpop.permute.xlu0 %1299
    %1301 = vrot.lane.b32.xlu0 %v1146, 127
    %v1302 = vpop.permute.xlu0 %1301
    %v1303 = vsel %vm158, %v1298, %v1300
    %v1304 = vsel %vm158, %v1300, %v1302
    %v1308 = vadd.f32 %v1139, %v1303
    %v1309 = vadd.f32 %v1140, %v1304
    %v1310 = vadd.f32 %v1141, %v1302
    %1314 = vrot.lane.b32.xlu0 %v1154, 127
    %v1315 = vpop.permute.xlu0 %1314
    %1316 = vrot.lane.b32.xlu0 %v1155, 127
    %v1317 = vpop.permute.xlu0 %1316
    %1318 = vrot.lane.b32.xlu0 %v1156, 127
    %v1319 = vpop.permute.xlu0 %1318
    %v1320 = vsel %vm158, %v1315, %v1317
    %v1321 = vsel %vm158, %v1317, %v1319
    %v1325 = vadd.f32 %v1149, %v1320
    %v1326 = vadd.f32 %v1150, %v1321
    %v1327 = vadd.f32 %v1151, %v1319
    %1331 = vrot.lane.b32.xlu0 %v1163, 127
    %v1332 = vpop.permute.xlu0 %1331
    %1333 = vrot.lane.b32.xlu0 %v1164, 127
    %v1334 = vpop.permute.xlu0 %1333
    %1335 = vrot.lane.b32.xlu0 %v1165, 127
    %v1336 = vpop.permute.xlu0 %1335
    %v1337 = vsel %vm158, %v1332, %v1334
    %v1338 = vsel %vm158, %v1334, %v1336
    %v1341 = vadd.f32 %v1159, %v1337
    %v1342 = vadd.f32 %v1160, %v1338
    %1346 = vrot.lane.b32.xlu0 %v1173, 127
    %v1347 = vpop.permute.xlu0 %1346
    %1348 = vrot.lane.b32.xlu0 %v1174, 127
    %v1349 = vpop.permute.xlu0 %1348
    %1350 = vrot.lane.b32.xlu0 %v1175, 127
    %v1351 = vpop.permute.xlu0 %1350
    %v1352 = vsel %vm158, %v1347, %v1349
    %v1353 = vsel %vm158, %v1349, %v1351
    %v1357 = vadd.f32 %v1168, %v1352
    %v1358 = vadd.f32 %v1169, %v1353
    %v1359 = vadd.f32 %v1170, %v1351
    %1363 = vrot.lane.b32.xlu0 %v1183, 127
    %v1364 = vpop.permute.xlu0 %1363
    %1365 = vrot.lane.b32.xlu0 %v1184, 127
    %v1366 = vpop.permute.xlu0 %1365
    %1367 = vrot.lane.b32.xlu0 %v1185, 127
    %v1368 = vpop.permute.xlu0 %1367
    %v1369 = vsel %vm158, %v1364, %v1366
    %v1370 = vsel %vm158, %v1366, %v1368
    %v1374 = vadd.f32 %v1178, %v1369
    %v1375 = vadd.f32 %v1179, %v1370
    %v1376 = vadd.f32 %v1180, %v1368
    %1380 = vrot.lane.b32.xlu0 %v1193, 127
    %v1381 = vpop.permute.xlu0 %1380
    %1382 = vrot.lane.b32.xlu0 %v1194, 127
    %v1383 = vpop.permute.xlu0 %1382
    %1384 = vrot.lane.b32.xlu0 %v1195, 127
    %v1385 = vpop.permute.xlu0 %1384
    %v1386 = vsel %vm158, %v1381, %v1383
    %v1387 = vsel %vm158, %v1383, %v1385
    %v1391 = vadd.f32 %v1188, %v1386
    %v1392 = vadd.f32 %v1189, %v1387
    %v1393 = vadd.f32 %v1190, %v1385
    %1397 = vrot.lane.b32.xlu0 %v1225, 126
    %v1398 = vpop.permute.xlu0 %1397
    %1399 = vrot.lane.b32.xlu0 %v1226, 126
    %v1400 = vpop.permute.xlu0 %1399
    %1401 = vrot.lane.b32.xlu0 %v1227, 126
    %v1402 = vpop.permute.xlu0 %1401
    %v1403 = vsel %vm227, %v1398, %v1400
    %v1404 = vsel %vm227, %v1400, %v1402
    %v1407 = vadd.f32 %v1209, %v1403
    %v1408 = vadd.f32 %v1210, %v1404
    %1412 = vrot.lane.b32.xlu0 %v1259, 126
    %v1413 = vpop.permute.xlu0 %1412
    %1414 = vrot.lane.b32.xlu0 %v1260, 126
    %v1415 = vpop.permute.xlu0 %1414
    %1416 = vrot.lane.b32.xlu0 %v1261, 126
    %v1417 = vpop.permute.xlu0 %1416
    %v1418 = vsel %vm227, %v1413, %v1415
    %v1419 = vsel %vm227, %v1415, %v1417
    %v1423 = vadd.f32 %v1242, %v1418
    %v1424 = vadd.f32 %v1243, %v1419
    %v1425 = vadd.f32 %v1244, %v1417
    %1429 = vrot.lane.b32.xlu0 %v1291, 126
    %v1430 = vpop.permute.xlu0 %1429
    %1431 = vrot.lane.b32.xlu0 %v1292, 126
    %v1432 = vpop.permute.xlu0 %1431
    %1433 = vrot.lane.b32.xlu0 %v1293, 126
    %v1434 = vpop.permute.xlu0 %1433
    %v1435 = vsel %vm227, %v1430, %v1432
    %v1436 = vsel %vm227, %v1432, %v1434
    %v1439 = vadd.f32 %v1275, %v1435
    %v1440 = vadd.f32 %v1276, %v1436
    %1444 = vrot.lane.b32.xlu0 %v1325, 126
    %v1445 = vpop.permute.xlu0 %1444
    %1446 = vrot.lane.b32.xlu0 %v1326, 126
    %v1447 = vpop.permute.xlu0 %1446
    %1448 = vrot.lane.b32.xlu0 %v1327, 126
    %v1449 = vpop.permute.xlu0 %1448
    %v1450 = vsel %vm227, %v1445, %v1447
    %v1451 = vsel %vm227, %v1447, %v1449
    %v1455 = vadd.f32 %v1308, %v1450
    %v1456 = vadd.f32 %v1309, %v1451
    %v1457 = vadd.f32 %v1310, %v1449
    %1461 = vrot.lane.b32.xlu0 %v1357, 126
    %v1462 = vpop.permute.xlu0 %1461
    %1463 = vrot.lane.b32.xlu0 %v1358, 126
    %v1464 = vpop.permute.xlu0 %1463
    %1465 = vrot.lane.b32.xlu0 %v1359, 126
    %v1466 = vpop.permute.xlu0 %1465
    %v1467 = vsel %vm227, %v1462, %v1464
    %v1468 = vsel %vm227, %v1464, %v1466
    %v1471 = vadd.f32 %v1341, %v1467
    %v1472 = vadd.f32 %v1342, %v1468
    %1476 = vrot.lane.b32.xlu0 %v1391, 126
    %v1477 = vpop.permute.xlu0 %1476
    %1478 = vrot.lane.b32.xlu0 %v1392, 126
    %v1479 = vpop.permute.xlu0 %1478
    %1480 = vrot.lane.b32.xlu0 %v1393, 126
    %v1481 = vpop.permute.xlu0 %1480
    %v1482 = vsel %vm227, %v1477, %v1479
    %v1483 = vsel %vm227, %v1479, %v1481
    %v1487 = vadd.f32 %v1374, %v1482
    %v1488 = vadd.f32 %v1375, %v1483
    %v1489 = vadd.f32 %v1376, %v1481
    %1493 = vrot.lane.b32.xlu0 %v1423, 112
    %v1494 = vpop.permute.xlu0 %1493
    %1495 = vrot.lane.b32.xlu0 %v1424, 112
    %v1496 = vpop.permute.xlu0 %1495
    %1497 = vrot.lane.b32.xlu0 %v1425, 112
    %v1498 = vpop.permute.xlu0 %1497
    %v1499 = vsel %vm262, %v1494, %v1496
    %v1500 = vsel %vm262, %v1496, %v1498
    %v1503 = vadd.f32 %v1407, %v1499
    %v1504 = vadd.f32 %v1408, %v1500
    %1508 = vrot.lane.b32.xlu0 %v1455, 112
    %v1509 = vpop.permute.xlu0 %1508
    %1510 = vrot.lane.b32.xlu0 %v1456, 112
    %v1511 = vpop.permute.xlu0 %1510
    %1512 = vrot.lane.b32.xlu0 %v1457, 112
    %v1513 = vpop.permute.xlu0 %1512
    %v1514 = vsel %vm262, %v1509, %v1511
    %v1515 = vsel %vm262, %v1511, %v1513
    %v1518 = vadd.f32 %v1439, %v1514
    %v1519 = vadd.f32 %v1440, %v1515
    %1523 = vrot.lane.b32.xlu0 %v1487, 112
    %v1524 = vpop.permute.xlu0 %1523
    %1525 = vrot.lane.b32.xlu0 %v1488, 112
    %v1526 = vpop.permute.xlu0 %1525
    %1527 = vrot.lane.b32.xlu0 %v1489, 112
    %v1528 = vpop.permute.xlu0 %1527
    %v1529 = vsel %vm262, %v1524, %v1526
    %v1530 = vsel %vm262, %v1526, %v1528
    %v1533 = vadd.f32 %v1471, %v1529
    %v1534 = vadd.f32 %v1472, %v1530
    %v1535 = vadd.f32 %v1503, %v1518
    %v1536 = vadd.f32 %v1504, %v1519
    %v1537 = vadd.f32 %v1535, %v1533
    %v1538 = vadd.f32 %v1536, %v1534
    %s1539 = sld [smem:[#allocation11 + $0x1]]
    %v1540 = vstv %s1539
    %v1541 = vadd.f32 %v1537, %v1540
    %v1542 = vadd.f32 %v1538, %v1540
    %v1543 = vmax.f32 %v1541, 0.0
    %v1544 = vmax.f32 %v1542, 0.0
    %s1545 = sld [smem:[#allocation10 + $0x30]]
    %v1546 = vstv %s1545
    %v1547 = vmul.f32 %v1546, %v276
    %v1548 = vmul.f32 %v1546, %v277
    %s1549 = sld [smem:[#allocation10 + $0x31]]
    %v1550 = vstv %s1549
    %v1551 = vmul.f32 %v1550, %v276
    %v1552 = vmul.f32 %v1550, %v277
    %v1553 = vmul.f32 %v1550, %v278
    %s1554 = sld [smem:[#allocation10 + $0x32]]
    %v1555 = vstv %s1554
    %v1556 = vmul.f32 %v1555, %v276
    %v1557 = vmul.f32 %v1555, %v277
    %v1558 = vmul.f32 %v1555, %v278
    %s1559 = sld [smem:[#allocation10 + $0x33]]
    %v1560 = vstv %s1559
    %v1561 = vmul.f32 %v1560, %v276
    %v1562 = vmul.f32 %v1560, %v277
    %v1563 = vmul.f32 %v1560, %v278
    %s1564 = sld [smem:[#allocation10 + $0x34]]
    %v1565 = vstv %s1564
    %v1566 = vmul.f32 %v1565, %v276
    %v1567 = vmul.f32 %v1565, %v277
    %v1568 = vmul.f32 %v1565, %v278
    %s1569 = sld [smem:[#allocation10 + $0x35]]
    %v1570 = vstv %s1569
    %v1571 = vmul.f32 %v1570, %v276
    %v1572 = vmul.f32 %v1570, %v277
    %v1573 = vmul.f32 %v1570, %v278
    %s1574 = sld [smem:[#allocation10 + $0x36]]
    %v1575 = vstv %s1574
    %v1576 = vmul.f32 %v1575, %v276
    %v1577 = vmul.f32 %v1575, %v277
    %v1578 = vmul.f32 %v1575, %v278
    %s1579 = sld [smem:[#allocation10 + $0x37]]
    %v1580 = vstv %s1579
    %v1581 = vmul.f32 %v1580, %v276
    %v1582 = vmul.f32 %v1580, %v277
    %v1583 = vmul.f32 %v1580, %v278
    %s1584 = sld [smem:[#allocation10 + $0x38]]
    %v1585 = vstv %s1584
    %v1586 = vmul.f32 %v1585, %v443
    %v1587 = vmul.f32 %v1585, %v444
    %s1588 = sld [smem:[#allocation10 + $0x39]]
    %v1589 = vstv %s1588
    %v1590 = vmul.f32 %v1589, %v443
    %v1591 = vmul.f32 %v1589, %v444
    %v1592 = vmul.f32 %v1589, %v445
    %s1593 = sld [smem:[#allocation10 + $0x3a]]
    %v1594 = vstv %s1593
    %v1595 = vmul.f32 %v1594, %v443
    %v1596 = vmul.f32 %v1594, %v444
    %v1597 = vmul.f32 %v1594, %v445
    %s1598 = sld [smem:[#allocation10 + $0x3b]]
    %v1599 = vstv %s1598
    %v1600 = vmul.f32 %v1599, %v443
    %v1601 = vmul.f32 %v1599, %v444
    %v1602 = vmul.f32 %v1599, %v445
    %s1603 = sld [smem:[#allocation10 + $0x3c]]
    %v1604 = vstv %s1603
    %v1605 = vmul.f32 %v1604, %v443
    %v1606 = vmul.f32 %v1604, %v444
    %v1607 = vmul.f32 %v1604, %v445
    %s1608 = sld [smem:[#allocation10 + $0x3d]]
    %v1609 = vstv %s1608
    %v1610 = vmul.f32 %v1609, %v443
    %v1611 = vmul.f32 %v1609, %v444
    %v1612 = vmul.f32 %v1609, %v445
    %s1613 = sld [smem:[#allocation10 + $0x3e]]
    %v1614 = vstv %s1613
    %v1615 = vmul.f32 %v1614, %v443
    %v1616 = vmul.f32 %v1614, %v444
    %v1617 = vmul.f32 %v1614, %v445
    %s1618 = sld [smem:[#allocation10 + $0x3f]]
    %v1619 = vstv %s1618
    %v1620 = vmul.f32 %v1619, %v443
    %v1621 = vmul.f32 %v1619, %v444
    %v1622 = vmul.f32 %v1619, %v445
    %s1623 = sld [smem:[#allocation10 + $0x40]]
    %v1624 = vstv %s1623
    %v1625 = vmul.f32 %v1624, %v610
    %v1626 = vmul.f32 %v1624, %v611
    %s1627 = sld [smem:[#allocation10 + $0x41]]
    %v1628 = vstv %s1627
    %v1629 = vmul.f32 %v1628, %v610
    %v1630 = vmul.f32 %v1628, %v611
    %v1631 = vmul.f32 %v1628, %v612
    %s1632 = sld [smem:[#allocation10 + $0x42]]
    %v1633 = vstv %s1632
    %v1634 = vmul.f32 %v1633, %v610
    %v1635 = vmul.f32 %v1633, %v611
    %v1636 = vmul.f32 %v1633, %v612
    %s1637 = sld [smem:[#allocation10 + $0x43]]
    %v1638 = vstv %s1637
    %v1639 = vmul.f32 %v1638, %v610
    %v1640 = vmul.f32 %v1638, %v611
    %v1641 = vmul.f32 %v1638, %v612
    %s1642 = sld [smem:[#allocation10 + $0x44]]
    %v1643 = vstv %s1642
    %v1644 = vmul.f32 %v1643, %v610
    %v1645 = vmul.f32 %v1643, %v611
    %v1646 = vmul.f32 %v1643, %v612
    %s1647 = sld [smem:[#allocation10 + $0x45]]
    %v1648 = vstv %s1647
    %v1649 = vmul.f32 %v1648, %v610
    %v1650 = vmul.f32 %v1648, %v611
    %v1651 = vmul.f32 %v1648, %v612
    %s1652 = sld [smem:[#allocation10 + $0x46]]
    %v1653 = vstv %s1652
    %v1654 = vmul.f32 %v1653, %v610
    %v1655 = vmul.f32 %v1653, %v611
    %v1656 = vmul.f32 %v1653, %v612
    %s1657 = sld [smem:[#allocation10 + $0x47]]
    %v1658 = vstv %s1657
    %v1659 = vmul.f32 %v1658, %v610
    %v1660 = vmul.f32 %v1658, %v611
    %v1661 = vmul.f32 %v1658, %v612
    %1665 = vrot.lane.b32.xlu0 %v1551, 127
    %v1666 = vpop.permute.xlu0 %1665
    %1667 = vrot.lane.b32.xlu0 %v1552, 127
    %v1668 = vpop.permute.xlu0 %1667
    %1669 = vrot.lane.b32.xlu0 %v1553, 127
    %v1670 = vpop.permute.xlu0 %1669
    %v1671 = vsel %vm158, %v1666, %v1668
    %v1672 = vsel %vm158, %v1668, %v1670
    %v1675 = vadd.f32 %v1547, %v1671
    %v1676 = vadd.f32 %v1548, %v1672
    %1680 = vrot.lane.b32.xlu0 %v1561, 127
    %v1681 = vpop.permute.xlu0 %1680
    %1682 = vrot.lane.b32.xlu0 %v1562, 127
    %v1683 = vpop.permute.xlu0 %1682
    %1684 = vrot.lane.b32.xlu0 %v1563, 127
    %v1685 = vpop.permute.xlu0 %1684
    %v1686 = vsel %vm158, %v1681, %v1683
    %v1687 = vsel %vm158, %v1683, %v1685
    %v1691 = vadd.f32 %v1556, %v1686
    %v1692 = vadd.f32 %v1557, %v1687
    %v1693 = vadd.f32 %v1558, %v1685
    %1697 = vrot.lane.b32.xlu0 %v1571, 127
    %v1698 = vpop.permute.xlu0 %1697
    %1699 = vrot.lane.b32.xlu0 %v1572, 127
    %v1700 = vpop.permute.xlu0 %1699
    %1701 = vrot.lane.b32.xlu0 %v1573, 127
    %v1702 = vpop.permute.xlu0 %1701
    %v1703 = vsel %vm158, %v1698, %v1700
    %v1704 = vsel %vm158, %v1700, %v1702
    %v1708 = vadd.f32 %v1566, %v1703
    %v1709 = vadd.f32 %v1567, %v1704
    %v1710 = vadd.f32 %v1568, %v1702
    %1714 = vrot.lane.b32.xlu0 %v1581, 127
    %v1715 = vpop.permute.xlu0 %1714
    %1716 = vrot.lane.b32.xlu0 %v1582, 127
    %v1717 = vpop.permute.xlu0 %1716
    %1718 = vrot.lane.b32.xlu0 %v1583, 127
    %v1719 = vpop.permute.xlu0 %1718
    %v1720 = vsel %vm158, %v1715, %v1717
    %v1721 = vsel %vm158, %v1717, %v1719
    %v1725 = vadd.f32 %v1576, %v1720
    %v1726 = vadd.f32 %v1577, %v1721
    %v1727 = vadd.f32 %v1578, %v1719
    %1731 = vrot.lane.b32.xlu0 %v1590, 127
    %v1732 = vpop.permute.xlu0 %1731
    %1733 = vrot.lane.b32.xlu0 %v1591, 127
    %v1734 = vpop.permute.xlu0 %1733
    %1735 = vrot.lane.b32.xlu0 %v1592, 127
    %v1736 = vpop.permute.xlu0 %1735
    %v1737 = vsel %vm158, %v1732, %v1734
    %v1738 = vsel %vm158, %v1734, %v1736
    %v1741 = vadd.f32 %v1586, %v1737
    %v1742 = vadd.f32 %v1587, %v1738
    %1746 = vrot.lane.b32.xlu0 %v1600, 127
    %v1747 = vpop.permute.xlu0 %1746
    %1748 = vrot.lane.b32.xlu0 %v1601, 127
    %v1749 = vpop.permute.xlu0 %1748
    %1750 = vrot.lane.b32.xlu0 %v1602, 127
    %v1751 = vpop.permute.xlu0 %1750
    %v1752 = vsel %vm158, %v1747, %v1749
    %v1753 = vsel %vm158, %v1749, %v1751
    %v1757 = vadd.f32 %v1595, %v1752
    %v1758 = vadd.f32 %v1596, %v1753
    %v1759 = vadd.f32 %v1597, %v1751
    %1763 = vrot.lane.b32.xlu0 %v1610, 127
    %v1764 = vpop.permute.xlu0 %1763
    %1765 = vrot.lane.b32.xlu0 %v1611, 127
    %v1766 = vpop.permute.xlu0 %1765
    %1767 = vrot.lane.b32.xlu0 %v1612, 127
    %v1768 = vpop.permute.xlu0 %1767
    %v1769 = vsel %vm158, %v1764, %v1766
    %v1770 = vsel %vm158, %v1766, %v1768
    %v1774 = vadd.f32 %v1605, %v1769
    %v1775 = vadd.f32 %v1606, %v1770
    %v1776 = vadd.f32 %v1607, %v1768
    %1780 = vrot.lane.b32.xlu0 %v1620, 127
    %v1781 = vpop.permute.xlu0 %1780
    %1782 = vrot.lane.b32.xlu0 %v1621, 127
    %v1783 = vpop.permute.xlu0 %1782
    %1784 = vrot.lane.b32.xlu0 %v1622, 127
    %v1785 = vpop.permute.xlu0 %1784
    %v1786 = vsel %vm158, %v1781, %v1783
    %v1787 = vsel %vm158, %v1783, %v1785
    %v1791 = vadd.f32 %v1615, %v1786
    %v1792 = vadd.f32 %v1616, %v1787
    %v1793 = vadd.f32 %v1617, %v1785
    %1797 = vrot.lane.b32.xlu0 %v1629, 127
    %v1798 = vpop.permute.xlu0 %1797
    %1799 = vrot.lane.b32.xlu0 %v1630, 127
    %v1800 = vpop.permute.xlu0 %1799
    %1801 = vrot.lane.b32.xlu0 %v1631, 127
    %v1802 = vpop.permute.xlu0 %1801
    %v1803 = vsel %vm158, %v1798, %v1800
    %v1804 = vsel %vm158, %v1800, %v1802
    %v1807 = vadd.f32 %v1625, %v1803
    %v1808 = vadd.f32 %v1626, %v1804
    %1812 = vrot.lane.b32.xlu0 %v1639, 127
    %v1813 = vpop.permute.xlu0 %1812
    %1814 = vrot.lane.b32.xlu0 %v1640, 127
    %v1815 = vpop.permute.xlu0 %1814
    %1816 = vrot.lane.b32.xlu0 %v1641, 127
    %v1817 = vpop.permute.xlu0 %1816
    %v1818 = vsel %vm158, %v1813, %v1815
    %v1819 = vsel %vm158, %v1815, %v1817
    %v1823 = vadd.f32 %v1634, %v1818
    %v1824 = vadd.f32 %v1635, %v1819
    %v1825 = vadd.f32 %v1636, %v1817
    %1829 = vrot.lane.b32.xlu0 %v1649, 127
    %v1830 = vpop.permute.xlu0 %1829
    %1831 = vrot.lane.b32.xlu0 %v1650, 127
    %v1832 = vpop.permute.xlu0 %1831
    %1833 = vrot.lane.b32.xlu0 %v1651, 127
    %v1834 = vpop.permute.xlu0 %1833
    %v1835 = vsel %vm158, %v1830, %v1832
    %v1836 = vsel %vm158, %v1832, %v1834
    %v1840 = vadd.f32 %v1644, %v1835
    %v1841 = vadd.f32 %v1645, %v1836
    %v1842 = vadd.f32 %v1646, %v1834
    %1846 = vrot.lane.b32.xlu0 %v1659, 127
    %v1847 = vpop.permute.xlu0 %1846
    %1848 = vrot.lane.b32.xlu0 %v1660, 127
    %v1849 = vpop.permute.xlu0 %1848
    %1850 = vrot.lane.b32.xlu0 %v1661, 127
    %v1851 = vpop.permute.xlu0 %1850
    %v1852 = vsel %vm158, %v1847, %v1849
    %v1853 = vsel %vm158, %v1849, %v1851
    %v1857 = vadd.f32 %v1654, %v1852
    %v1858 = vadd.f32 %v1655, %v1853
    %v1859 = vadd.f32 %v1656, %v1851
    %1863 = vrot.lane.b32.xlu0 %v1691, 126
    %v1864 = vpop.permute.xlu0 %1863
    %1865 = vrot.lane.b32.xlu0 %v1692, 126
    %v1866 = vpop.permute.xlu0 %1865
    %1867 = vrot.lane.b32.xlu0 %v1693, 126
    %v1868 = vpop.permute.xlu0 %1867
    %v1869 = vsel %vm227, %v1864, %v1866
    %v1870 = vsel %vm227, %v1866, %v1868
    %v1873 = vadd.f32 %v1675, %v1869
    %v1874 = vadd.f32 %v1676, %v1870
    %1878 = vrot.lane.b32.xlu0 %v1725, 126
    %v1879 = vpop.permute.xlu0 %1878
    %1880 = vrot.lane.b32.xlu0 %v1726, 126
    %v1881 = vpop.permute.xlu0 %1880
    %1882 = vrot.lane.b32.xlu0 %v1727, 126
    %v1883 = vpop.permute.xlu0 %1882
    %v1884 = vsel %vm227, %v1879, %v1881
    %v1885 = vsel %vm227, %v1881, %v1883
    %v1889 = vadd.f32 %v1708, %v1884
    %v1890 = vadd.f32 %v1709, %v1885
    %v1891 = vadd.f32 %v1710, %v1883
    %1895 = vrot.lane.b32.xlu0 %v1757, 126
    %v1896 = vpop.permute.xlu0 %1895
    %1897 = vrot.lane.b32.xlu0 %v1758, 126
    %v1898 = vpop.permute.xlu0 %1897
    %1899 = vrot.lane.b32.xlu0 %v1759, 126
    %v1900 = vpop.permute.xlu0 %1899
    %v1901 = vsel %vm227, %v1896, %v1898
    %v1902 = vsel %vm227, %v1898, %v1900
    %v1905 = vadd.f32 %v1741, %v1901
    %v1906 = vadd.f32 %v1742, %v1902
    %1910 = vrot.lane.b32.xlu0 %v1791, 126
    %v1911 = vpop.permute.xlu0 %1910
    %1912 = vrot.lane.b32.xlu0 %v1792, 126
    %v1913 = vpop.permute.xlu0 %1912
    %1914 = vrot.lane.b32.xlu0 %v1793, 126
    %v1915 = vpop.permute.xlu0 %1914
    %v1916 = vsel %vm227, %v1911, %v1913
    %v1917 = vsel %vm227, %v1913, %v1915
    %v1921 = vadd.f32 %v1774, %v1916
    %v1922 = vadd.f32 %v1775, %v1917
    %v1923 = vadd.f32 %v1776, %v1915
    %1927 = vrot.lane.b32.xlu0 %v1823, 126
    %v1928 = vpop.permute.xlu0 %1927
    %1929 = vrot.lane.b32.xlu0 %v1824, 126
    %v1930 = vpop.permute.xlu0 %1929
    %1931 = vrot.lane.b32.xlu0 %v1825, 126
    %v1932 = vpop.permute.xlu0 %1931
    %v1933 = vsel %vm227, %v1928, %v1930
    %v1934 = vsel %vm227, %v1930, %v1932
    %v1937 = vadd.f32 %v1807, %v1933
    %v1938 = vadd.f32 %v1808, %v1934
    %1942 = vrot.lane.b32.xlu0 %v1857, 126
    %v1943 = vpop.permute.xlu0 %1942
    %1944 = vrot.lane.b32.xlu0 %v1858, 126
    %v1945 = vpop.permute.xlu0 %1944
    %1946 = vrot.lane.b32.xlu0 %v1859, 126
    %v1947 = vpop.permute.xlu0 %1946
    %v1948 = vsel %vm227, %v1943, %v1945
    %v1949 = vsel %vm227, %v1945, %v1947
    %v1953 = vadd.f32 %v1840, %v1948
    %v1954 = vadd.f32 %v1841, %v1949
    %v1955 = vadd.f32 %v1842, %v1947
    %1959 = vrot.lane.b32.xlu0 %v1889, 112
    %v1960 = vpop.permute.xlu0 %1959
    %1961 = vrot.lane.b32.xlu0 %v1890, 112
    %v1962 = vpop.permute.xlu0 %1961
    %1963 = vrot.lane.b32.xlu0 %v1891, 112
    %v1964 = vpop.permute.xlu0 %1963
    %v1965 = vsel %vm262, %v1960, %v1962
    %v1966 = vsel %vm262, %v1962, %v1964
    %v1969 = vadd.f32 %v1873, %v1965
    %v1970 = vadd.f32 %v1874, %v1966
    %1974 = vrot.lane.b32.xlu0 %v1921, 112
    %v1975 = vpop.permute.xlu0 %1974
    %1976 = vrot.lane.b32.xlu0 %v1922, 112
    %v1977 = vpop.permute.xlu0 %1976
    %1978 = vrot.lane.b32.xlu0 %v1923, 112
    %v1979 = vpop.permute.xlu0 %1978
    %v1980 = vsel %vm262, %v1975, %v1977
    %v1981 = vsel %vm262, %v1977, %v1979
    %v1984 = vadd.f32 %v1905, %v1980
    %v1985 = vadd.f32 %v1906, %v1981
    %1989 = vrot.lane.b32.xlu0 %v1953, 112
    %v1990 = vpop.permute.xlu0 %1989
    %1991 = vrot.lane.b32.xlu0 %v1954, 112
    %v1992 = vpop.permute.xlu0 %1991
    %1993 = vrot.lane.b32.xlu0 %v1955, 112
    %v1994 = vpop.permute.xlu0 %1993
    %v1995 = vsel %vm262, %v1990, %v1992
    %v1996 = vsel %vm262, %v1992, %v1994
    %v1999 = vadd.f32 %v1937, %v1995
    %v2000 = vadd.f32 %v1938, %v1996
    %v2001 = vadd.f32 %v1969, %v1984
    %v2002 = vadd.f32 %v1970, %v1985
    %v2003 = vadd.f32 %v2001, %v1999
    %v2004 = vadd.f32 %v2002, %v2000
    %s2005 = sld [smem:[#allocation11 + $0x2]]
    %v2006 = vstv %s2005
    %v2007 = vadd.f32 %v2003, %v2006
    %v2008 = vadd.f32 %v2004, %v2006
    %v2009 = vmax.f32 %v2007, 0.0
    %v2010 = vmax.f32 %v2008, 0.0
    %s2011 = sld [smem:[#allocation10 + $0x48]]
    %v2012 = vstv %s2011
    %v2013 = vmul.f32 %v2012, %v276
    %v2014 = vmul.f32 %v2012, %v277
    %s2015 = sld [smem:[#allocation10 + $0x49]]
    %v2016 = vstv %s2015
    %v2017 = vmul.f32 %v2016, %v276
    %v2018 = vmul.f32 %v2016, %v277
    %v2019 = vmul.f32 %v2016, %v278
    %s2020 = sld [smem:[#allocation10 + $0x4a]]
    %v2021 = vstv %s2020
    %v2022 = vmul.f32 %v2021, %v276
    %v2023 = vmul.f32 %v2021, %v277
    %v2024 = vmul.f32 %v2021, %v278
    %s2025 = sld [smem:[#allocation10 + $0x4b]]
    %v2026 = vstv %s2025
    %v2027 = vmul.f32 %v2026, %v276
    %v2028 = vmul.f32 %v2026, %v277
    %v2029 = vmul.f32 %v2026, %v278
    %s2030 = sld [smem:[#allocation10 + $0x4c]]
    %v2031 = vstv %s2030
    %v2032 = vmul.f32 %v2031, %v276
    %v2033 = vmul.f32 %v2031, %v277
    %v2034 = vmul.f32 %v2031, %v278
    %s2035 = sld [smem:[#allocation10 + $0x4d]]
    %v2036 = vstv %s2035
    %v2037 = vmul.f32 %v2036, %v276
    %v2038 = vmul.f32 %v2036, %v277
    %v2039 = vmul.f32 %v2036, %v278
    %s2040 = sld [smem:[#allocation10 + $0x4e]]
    %v2041 = vstv %s2040
    %v2042 = vmul.f32 %v2041, %v276
    %v2043 = vmul.f32 %v2041, %v277
    %v2044 = vmul.f32 %v2041, %v278
    %s2045 = sld [smem:[#allocation10 + $0x4f]]
    %v2046 = vstv %s2045
    %v2047 = vmul.f32 %v2046, %v276
    %v2048 = vmul.f32 %v2046, %v277
    %v2049 = vmul.f32 %v2046, %v278
    %s2050 = sld [smem:[#allocation10 + $0x50]]
    %v2051 = vstv %s2050
    %v2052 = vmul.f32 %v2051, %v443
    %v2053 = vmul.f32 %v2051, %v444
    %s2054 = sld [smem:[#allocation10 + $0x51]]
    %v2055 = vstv %s2054
    %v2056 = vmul.f32 %v2055, %v443
    %v2057 = vmul.f32 %v2055, %v444
    %v2058 = vmul.f32 %v2055, %v445
    %s2059 = sld [smem:[#allocation10 + $0x52]]
    %v2060 = vstv %s2059
    %v2061 = vmul.f32 %v2060, %v443
    %v2062 = vmul.f32 %v2060, %v444
    %v2063 = vmul.f32 %v2060, %v445
    %s2064 = sld [smem:[#allocation10 + $0x53]]
    %v2065 = vstv %s2064
    %v2066 = vmul.f32 %v2065, %v443
    %v2067 = vmul.f32 %v2065, %v444
    %v2068 = vmul.f32 %v2065, %v445
    %s2069 = sld [smem:[#allocation10 + $0x54]]
    %v2070 = vstv %s2069
    %v2071 = vmul.f32 %v2070, %v443
    %v2072 = vmul.f32 %v2070, %v444
    %v2073 = vmul.f32 %v2070, %v445
    %s2074 = sld [smem:[#allocation10 + $0x55]]
    %v2075 = vstv %s2074
    %v2076 = vmul.f32 %v2075, %v443
    %v2077 = vmul.f32 %v2075, %v444
    %v2078 = vmul.f32 %v2075, %v445
    %s2079 = sld [smem:[#allocation10 + $0x56]]
    %v2080 = vstv %s2079
    %v2081 = vmul.f32 %v2080, %v443
    %v2082 = vmul.f32 %v2080, %v444
    %v2083 = vmul.f32 %v2080, %v445
    %s2084 = sld [smem:[#allocation10 + $0x57]]
    %v2085 = vstv %s2084
    %v2086 = vmul.f32 %v2085, %v443
    %v2087 = vmul.f32 %v2085, %v444
    %v2088 = vmul.f32 %v2085, %v445
    %s2089 = sld [smem:[#allocation10 + $0x58]]
    %v2090 = vstv %s2089
    %v2091 = vmul.f32 %v2090, %v610
    %v2092 = vmul.f32 %v2090, %v611
    %s2093 = sld [smem:[#allocation10 + $0x59]]
    %v2094 = vstv %s2093
    %v2095 = vmul.f32 %v2094, %v610
    %v2096 = vmul.f32 %v2094, %v611
    %v2097 = vmul.f32 %v2094, %v612
    %s2098 = sld [smem:[#allocation10 + $0x5a]]
    %v2099 = vstv %s2098
    %v2100 = vmul.f32 %v2099, %v610
    %v2101 = vmul.f32 %v2099, %v611
    %v2102 = vmul.f32 %v2099, %v612
    %s2103 = sld [smem:[#allocation10 + $0x5b]]
    %v2104 = vstv %s2103
    %v2105 = vmul.f32 %v2104, %v610
    %v2106 = vmul.f32 %v2104, %v611
    %v2107 = vmul.f32 %v2104, %v612
    %s2108 = sld [smem:[#allocation10 + $0x5c]]
    %v2109 = vstv %s2108
    %v2110 = vmul.f32 %v2109, %v610
    %v2111 = vmul.f32 %v2109, %v611
    %v2112 = vmul.f32 %v2109, %v612
    %s2113 = sld [smem:[#allocation10 + $0x5d]]
    %v2114 = vstv %s2113
    %v2115 = vmul.f32 %v2114, %v610
    %v2116 = vmul.f32 %v2114, %v611
    %v2117 = vmul.f32 %v2114, %v612
    %s2118 = sld [smem:[#allocation10 + $0x5e]]
    %v2119 = vstv %s2118
    %v2120 = vmul.f32 %v2119, %v610
    %v2121 = vmul.f32 %v2119, %v611
    %v2122 = vmul.f32 %v2119, %v612
    %s2123 = sld [smem:[#allocation10 + $0x5f]]
    %v2124 = vstv %s2123
    %v2125 = vmul.f32 %v2124, %v610
    %v2126 = vmul.f32 %v2124, %v611
    %v2127 = vmul.f32 %v2124, %v612
    %2131 = vrot.lane.b32.xlu0 %v2017, 127
    %v2132 = vpop.permute.xlu0 %2131
    %2133 = vrot.lane.b32.xlu0 %v2018, 127
    %v2134 = vpop.permute.xlu0 %2133
    %2135 = vrot.lane.b32.xlu0 %v2019, 127
    %v2136 = vpop.permute.xlu0 %2135
    %v2137 = vsel %vm158, %v2132, %v2134
    %v2138 = vsel %vm158, %v2134, %v2136
    %v2141 = vadd.f32 %v2013, %v2137
    %v2142 = vadd.f32 %v2014, %v2138
    %2146 = vrot.lane.b32.xlu0 %v2027, 127
    %v2147 = vpop.permute.xlu0 %2146
    %2148 = vrot.lane.b32.xlu0 %v2028, 127
    %v2149 = vpop.permute.xlu0 %2148
    %2150 = vrot.lane.b32.xlu0 %v2029, 127
    %v2151 = vpop.permute.xlu0 %2150
    %v2152 = vsel %vm158, %v2147, %v2149
    %v2153 = vsel %vm158, %v2149, %v2151
    %v2157 = vadd.f32 %v2022, %v2152
    %v2158 = vadd.f32 %v2023, %v2153
    %v2159 = vadd.f32 %v2024, %v2151
    %2163 = vrot.lane.b32.xlu0 %v2037, 127
    %v2164 = vpop.permute.xlu0 %2163
    %2165 = vrot.lane.b32.xlu0 %v2038, 127
    %v2166 = vpop.permute.xlu0 %2165
    %2167 = vrot.lane.b32.xlu0 %v2039, 127
    %v2168 = vpop.permute.xlu0 %2167
    %v2169 = vsel %vm158, %v2164, %v2166
    %v2170 = vsel %vm158, %v2166, %v2168
    %v2174 = vadd.f32 %v2032, %v2169
    %v2175 = vadd.f32 %v2033, %v2170
    %v2176 = vadd.f32 %v2034, %v2168
    %2180 = vrot.lane.b32.xlu0 %v2047, 127
    %v2181 = vpop.permute.xlu0 %2180
    %2182 = vrot.lane.b32.xlu0 %v2048, 127
    %v2183 = vpop.permute.xlu0 %2182
    %2184 = vrot.lane.b32.xlu0 %v2049, 127
    %v2185 = vpop.permute.xlu0 %2184
    %v2186 = vsel %vm158, %v2181, %v2183
    %v2187 = vsel %vm158, %v2183, %v2185
    %v2191 = vadd.f32 %v2042, %v2186
    %v2192 = vadd.f32 %v2043, %v2187
    %v2193 = vadd.f32 %v2044, %v2185
    %2197 = vrot.lane.b32.xlu0 %v2056, 127
    %v2198 = vpop.permute.xlu0 %2197
    %2199 = vrot.lane.b32.xlu0 %v2057, 127
    %v2200 = vpop.permute.xlu0 %2199
    %2201 = vrot.lane.b32.xlu0 %v2058, 127
    %v2202 = vpop.permute.xlu0 %2201
    %v2203 = vsel %vm158, %v2198, %v2200
    %v2204 = vsel %vm158, %v2200, %v2202
    %v2207 = vadd.f32 %v2052, %v2203
    %v2208 = vadd.f32 %v2053, %v2204
    %2212 = vrot.lane.b32.xlu0 %v2066, 127
    %v2213 = vpop.permute.xlu0 %2212
    %2214 = vrot.lane.b32.xlu0 %v2067, 127
    %v2215 = vpop.permute.xlu0 %2214
    %2216 = vrot.lane.b32.xlu0 %v2068, 127
    %v2217 = vpop.permute.xlu0 %2216
    %v2218 = vsel %vm158, %v2213, %v2215
    %v2219 = vsel %vm158, %v2215, %v2217
    %v2223 = vadd.f32 %v2061, %v2218
    %v2224 = vadd.f32 %v2062, %v2219
    %v2225 = vadd.f32 %v2063, %v2217
    %2229 = vrot.lane.b32.xlu0 %v2076, 127
    %v2230 = vpop.permute.xlu0 %2229
    %2231 = vrot.lane.b32.xlu0 %v2077, 127
    %v2232 = vpop.permute.xlu0 %2231
    %2233 = vrot.lane.b32.xlu0 %v2078, 127
    %v2234 = vpop.permute.xlu0 %2233
    %v2235 = vsel %vm158, %v2230, %v2232
    %v2236 = vsel %vm158, %v2232, %v2234
    %v2240 = vadd.f32 %v2071, %v2235
    %v2241 = vadd.f32 %v2072, %v2236
    %v2242 = vadd.f32 %v2073, %v2234
    %2246 = vrot.lane.b32.xlu0 %v2086, 127
    %v2247 = vpop.permute.xlu0 %2246
    %2248 = vrot.lane.b32.xlu0 %v2087, 127
    %v2249 = vpop.permute.xlu0 %2248
    %2250 = vrot.lane.b32.xlu0 %v2088, 127
    %v2251 = vpop.permute.xlu0 %2250
    %v2252 = vsel %vm158, %v2247, %v2249
    %v2253 = vsel %vm158, %v2249, %v2251
    %v2257 = vadd.f32 %v2081, %v2252
    %v2258 = vadd.f32 %v2082, %v2253
    %v2259 = vadd.f32 %v2083, %v2251
    %2263 = vrot.lane.b32.xlu0 %v2095, 127
    %v2264 = vpop.permute.xlu0 %2263
    %2265 = vrot.lane.b32.xlu0 %v2096, 127
    %v2266 = vpop.permute.xlu0 %2265
    %2267 = vrot.lane.b32.xlu0 %v2097, 127
    %v2268 = vpop.permute.xlu0 %2267
    %v2269 = vsel %vm158, %v2264, %v2266
    %v2270 = vsel %vm158, %v2266, %v2268
    %v2273 = vadd.f32 %v2091, %v2269
    %v2274 = vadd.f32 %v2092, %v2270
    %2278 = vrot.lane.b32.xlu0 %v2105, 127
    %v2279 = vpop.permute.xlu0 %2278
    %2280 = vrot.lane.b32.xlu0 %v2106, 127
    %v2281 = vpop.permute.xlu0 %2280
    %2282 = vrot.lane.b32.xlu0 %v2107, 127
    %v2283 = vpop.permute.xlu0 %2282
    %v2284 = vsel %vm158, %v2279, %v2281
    %v2285 = vsel %vm158, %v2281, %v2283
    %v2289 = vadd.f32 %v2100, %v2284
    %v2290 = vadd.f32 %v2101, %v2285
    %v2291 = vadd.f32 %v2102, %v2283
    %2295 = vrot.lane.b32.xlu0 %v2115, 127
    %v2296 = vpop.permute.xlu0 %2295
    %2297 = vrot.lane.b32.xlu0 %v2116, 127
    %v2298 = vpop.permute.xlu0 %2297
    %2299 = vrot.lane.b32.xlu0 %v2117, 127
    %v2300 = vpop.permute.xlu0 %2299
    %v2301 = vsel %vm158, %v2296, %v2298
    %v2302 = vsel %vm158, %v2298, %v2300
    %v2306 = vadd.f32 %v2110, %v2301
    %v2307 = vadd.f32 %v2111, %v2302
    %v2308 = vadd.f32 %v2112, %v2300
    %2312 = vrot.lane.b32.xlu0 %v2125, 127
    %v2313 = vpop.permute.xlu0 %2312
    %2314 = vrot.lane.b32.xlu0 %v2126, 127
    %v2315 = vpop.permute.xlu0 %2314
    %2316 = vrot.lane.b32.xlu0 %v2127, 127
    %v2317 = vpop.permute.xlu0 %2316
    %v2318 = vsel %vm158, %v2313, %v2315
    %v2319 = vsel %vm158, %v2315, %v2317
    %v2323 = vadd.f32 %v2120, %v2318
    %v2324 = vadd.f32 %v2121, %v2319
    %v2325 = vadd.f32 %v2122, %v2317
    %2329 = vrot.lane.b32.xlu0 %v2157, 126
    %v2330 = vpop.permute.xlu0 %2329
    %2331 = vrot.lane.b32.xlu0 %v2158, 126
    %v2332 = vpop.permute.xlu0 %2331
    %2333 = vrot.lane.b32.xlu0 %v2159, 126
    %v2334 = vpop.permute.xlu0 %2333
    %v2335 = vsel %vm227, %v2330, %v2332
    %v2336 = vsel %vm227, %v2332, %v2334
    %v2339 = vadd.f32 %v2141, %v2335
    %v2340 = vadd.f32 %v2142, %v2336
    %2344 = vrot.lane.b32.xlu0 %v2191, 126
    %v2345 = vpop.permute.xlu0 %2344
    %2346 = vrot.lane.b32.xlu0 %v2192, 126
    %v2347 = vpop.permute.xlu0 %2346
    %2348 = vrot.lane.b32.xlu0 %v2193, 126
    %v2349 = vpop.permute.xlu0 %2348
    %v2350 = vsel %vm227, %v2345, %v2347
    %v2351 = vsel %vm227, %v2347, %v2349
    %v2355 = vadd.f32 %v2174, %v2350
    %v2356 = vadd.f32 %v2175, %v2351
    %v2357 = vadd.f32 %v2176, %v2349
    %2361 = vrot.lane.b32.xlu0 %v2223, 126
    %v2362 = vpop.permute.xlu0 %2361
    %2363 = vrot.lane.b32.xlu0 %v2224, 126
    %v2364 = vpop.permute.xlu0 %2363
    %2365 = vrot.lane.b32.xlu0 %v2225, 126
    %v2366 = vpop.permute.xlu0 %2365
    %v2367 = vsel %vm227, %v2362, %v2364
    %v2368 = vsel %vm227, %v2364, %v2366
    %v2371 = vadd.f32 %v2207, %v2367
    %v2372 = vadd.f32 %v2208, %v2368
    %2376 = vrot.lane.b32.xlu0 %v2257, 126
    %v2377 = vpop.permute.xlu0 %2376
    %2378 = vrot.lane.b32.xlu0 %v2258, 126
    %v2379 = vpop.permute.xlu0 %2378
    %2380 = vrot.lane.b32.xlu0 %v2259, 126
    %v2381 = vpop.permute.xlu0 %2380
    %v2382 = vsel %vm227, %v2377, %v2379
    %v2383 = vsel %vm227, %v2379, %v2381
    %v2387 = vadd.f32 %v2240, %v2382
    %v2388 = vadd.f32 %v2241, %v2383
    %v2389 = vadd.f32 %v2242, %v2381
    %2393 = vrot.lane.b32.xlu0 %v2289, 126
    %v2394 = vpop.permute.xlu0 %2393
    %2395 = vrot.lane.b32.xlu0 %v2290, 126
    %v2396 = vpop.permute.xlu0 %2395
    %2397 = vrot.lane.b32.xlu0 %v2291, 126
    %v2398 = vpop.permute.xlu0 %2397
    %v2399 = vsel %vm227, %v2394, %v2396
    %v2400 = vsel %vm227, %v2396, %v2398
    %v2403 = vadd.f32 %v2273, %v2399
    %v2404 = vadd.f32 %v2274, %v2400
    %2408 = vrot.lane.b32.xlu0 %v2323, 126
    %v2409 = vpop.permute.xlu0 %2408
    %2410 = vrot.lane.b32.xlu0 %v2324, 126
    %v2411 = vpop.permute.xlu0 %2410
    %2412 = vrot.lane.b32.xlu0 %v2325, 126
    %v2413 = vpop.permute.xlu0 %2412
    %v2414 = vsel %vm227, %v2409, %v2411
    %v2415 = vsel %vm227, %v2411, %v2413
    %v2419 = vadd.f32 %v2306, %v2414
    %v2420 = vadd.f32 %v2307, %v2415
    %v2421 = vadd.f32 %v2308, %v2413
    %2425 = vrot.lane.b32.xlu0 %v2355, 112
    %v2426 = vpop.permute.xlu0 %2425
    %2427 = vrot.lane.b32.xlu0 %v2356, 112
    %v2428 = vpop.permute.xlu0 %2427
    %2429 = vrot.lane.b32.xlu0 %v2357, 112
    %v2430 = vpop.permute.xlu0 %2429
    %v2431 = vsel %vm262, %v2426, %v2428
    %v2432 = vsel %vm262, %v2428, %v2430
    %v2435 = vadd.f32 %v2339, %v2431
    %v2436 = vadd.f32 %v2340, %v2432
    %2440 = vrot.lane.b32.xlu0 %v2387, 112
    %v2441 = vpop.permute.xlu0 %2440
    %2442 = vrot.lane.b32.xlu0 %v2388, 112
    %v2443 = vpop.permute.xlu0 %2442
    %2444 = vrot.lane.b32.xlu0 %v2389, 112
    %v2445 = vpop.permute.xlu0 %2444
    %v2446 = vsel %vm262, %v2441, %v2443
    %v2447 = vsel %vm262, %v2443, %v2445
    %v2450 = vadd.f32 %v2371, %v2446
    %v2451 = vadd.f32 %v2372, %v2447
    %2455 = vrot.lane.b32.xlu0 %v2419, 112
    %v2456 = vpop.permute.xlu0 %2455
    %2457 = vrot.lane.b32.xlu0 %v2420, 112
    %v2458 = vpop.permute.xlu0 %2457
    %2459 = vrot.lane.b32.xlu0 %v2421, 112
    %v2460 = vpop.permute.xlu0 %2459
    %v2461 = vsel %vm262, %v2456, %v2458
    %v2462 = vsel %vm262, %v2458, %v2460
    %v2465 = vadd.f32 %v2403, %v2461
    %v2466 = vadd.f32 %v2404, %v2462
    %v2467 = vadd.f32 %v2435, %v2450
    %v2468 = vadd.f32 %v2436, %v2451
    %v2469 = vadd.f32 %v2467, %v2465
    %v2470 = vadd.f32 %v2468, %v2466
    %s2471 = sld [smem:[#allocation11 + $0x3]]
    %v2472 = vstv %s2471
    %v2473 = vadd.f32 %v2469, %v2472
    %v2474 = vadd.f32 %v2470, %v2472
    %v2475 = vmax.f32 %v2473, 0.0
    %v2476 = vmax.f32 %v2474, 0.0
    %s2477 = sld [smem:[#allocation10 + $0x60]]
    %v2478 = vstv %s2477
    %v2479 = vmul.f32 %v2478, %v276
    %v2480 = vmul.f32 %v2478, %v277
    %s2481 = sld [smem:[#allocation10 + $0x61]]
    %v2482 = vstv %s2481
    %v2483 = vmul.f32 %v2482, %v276
    %v2484 = vmul.f32 %v2482, %v277
    %v2485 = vmul.f32 %v2482, %v278
    %s2486 = sld [smem:[#allocation10 + $0x62]]
    %v2487 = vstv %s2486
    %v2488 = vmul.f32 %v2487, %v276
    %v2489 = vmul.f32 %v2487, %v277
    %v2490 = vmul.f32 %v2487, %v278
    %s2491 = sld [smem:[#allocation10 + $0x63]]
    %v2492 = vstv %s2491
    %v2493 = vmul.f32 %v2492, %v276
    %v2494 = vmul.f32 %v2492, %v277
    %v2495 = vmul.f32 %v2492, %v278
    %s2496 = sld [smem:[#allocation10 + $0x64]]
    %v2497 = vstv %s2496
    %v2498 = vmul.f32 %v2497, %v276
    %v2499 = vmul.f32 %v2497, %v277
    %v2500 = vmul.f32 %v2497, %v278
    %s2501 = sld [smem:[#allocation10 + $0x65]]
    %v2502 = vstv %s2501
    %v2503 = vmul.f32 %v2502, %v276
    %v2504 = vmul.f32 %v2502, %v277
    %v2505 = vmul.f32 %v2502, %v278
    %s2506 = sld [smem:[#allocation10 + $0x66]]
    %v2507 = vstv %s2506
    %v2508 = vmul.f32 %v2507, %v276
    %v2509 = vmul.f32 %v2507, %v277
    %v2510 = vmul.f32 %v2507, %v278
    %s2511 = sld [smem:[#allocation10 + $0x67]]
    %v2512 = vstv %s2511
    %v2513 = vmul.f32 %v2512, %v276
    %v2514 = vmul.f32 %v2512, %v277
    %v2515 = vmul.f32 %v2512, %v278
    %s2516 = sld [smem:[#allocation10 + $0x68]]
    %v2517 = vstv %s2516
    %v2518 = vmul.f32 %v2517, %v443
    %v2519 = vmul.f32 %v2517, %v444
    %s2520 = sld [smem:[#allocation10 + $0x69]]
    %v2521 = vstv %s2520
    %v2522 = vmul.f32 %v2521, %v443
    %v2523 = vmul.f32 %v2521, %v444
    %v2524 = vmul.f32 %v2521, %v445
    %s2525 = sld [smem:[#allocation10 + $0x6a]]
    %v2526 = vstv %s2525
    %v2527 = vmul.f32 %v2526, %v443
    %v2528 = vmul.f32 %v2526, %v444
    %v2529 = vmul.f32 %v2526, %v445
    %s2530 = sld [smem:[#allocation10 + $0x6b]]
    %v2531 = vstv %s2530
    %v2532 = vmul.f32 %v2531, %v443
    %v2533 = vmul.f32 %v2531, %v444
    %v2534 = vmul.f32 %v2531, %v445
    %s2535 = sld [smem:[#allocation10 + $0x6c]]
    %v2536 = vstv %s2535
    %v2537 = vmul.f32 %v2536, %v443
    %v2538 = vmul.f32 %v2536, %v444
    %v2539 = vmul.f32 %v2536, %v445
    %s2540 = sld [smem:[#allocation10 + $0x6d]]
    %v2541 = vstv %s2540
    %v2542 = vmul.f32 %v2541, %v443
    %v2543 = vmul.f32 %v2541, %v444
    %v2544 = vmul.f32 %v2541, %v445
    %s2545 = sld [smem:[#allocation10 + $0x6e]]
    %v2546 = vstv %s2545
    %v2547 = vmul.f32 %v2546, %v443
    %v2548 = vmul.f32 %v2546, %v444
    %v2549 = vmul.f32 %v2546, %v445
    %s2550 = sld [smem:[#allocation10 + $0x6f]]
    %v2551 = vstv %s2550
    %v2552 = vmul.f32 %v2551, %v443
    %v2553 = vmul.f32 %v2551, %v444
    %v2554 = vmul.f32 %v2551, %v445
    %s2555 = sld [smem:[#allocation10 + $0x70]]
    %v2556 = vstv %s2555
    %v2557 = vmul.f32 %v2556, %v610
    %v2558 = vmul.f32 %v2556, %v611
    %s2559 = sld [smem:[#allocation10 + $0x71]]
    %v2560 = vstv %s2559
    %v2561 = vmul.f32 %v2560, %v610
    %v2562 = vmul.f32 %v2560, %v611
    %v2563 = vmul.f32 %v2560, %v612
    %s2564 = sld [smem:[#allocation10 + $0x72]]
    %v2565 = vstv %s2564
    %v2566 = vmul.f32 %v2565, %v610
    %v2567 = vmul.f32 %v2565, %v611
    %v2568 = vmul.f32 %v2565, %v612
    %s2569 = sld [smem:[#allocation10 + $0x73]]
    %v2570 = vstv %s2569
    %v2571 = vmul.f32 %v2570, %v610
    %v2572 = vmul.f32 %v2570, %v611
    %v2573 = vmul.f32 %v2570, %v612
    %s2574 = sld [smem:[#allocation10 + $0x74]]
    %v2575 = vstv %s2574
    %v2576 = vmul.f32 %v2575, %v610
    %v2577 = vmul.f32 %v2575, %v611
    %v2578 = vmul.f32 %v2575, %v612
    %s2579 = sld [smem:[#allocation10 + $0x75]]
    %v2580 = vstv %s2579
    %v2581 = vmul.f32 %v2580, %v610
    %v2582 = vmul.f32 %v2580, %v611
    %v2583 = vmul.f32 %v2580, %v612
    %s2584 = sld [smem:[#allocation10 + $0x76]]
    %v2585 = vstv %s2584
    %v2586 = vmul.f32 %v2585, %v610
    %v2587 = vmul.f32 %v2585, %v611
    %v2588 = vmul.f32 %v2585, %v612
    %s2589 = sld [smem:[#allocation10 + $0x77]]
    %v2590 = vstv %s2589
    %v2591 = vmul.f32 %v2590, %v610
    %v2592 = vmul.f32 %v2590, %v611
    %v2593 = vmul.f32 %v2590, %v612
    %2597 = vrot.lane.b32.xlu0 %v2483, 127
    %v2598 = vpop.permute.xlu0 %2597
    %2599 = vrot.lane.b32.xlu0 %v2484, 127
    %v2600 = vpop.permute.xlu0 %2599
    %2601 = vrot.lane.b32.xlu0 %v2485, 127
    %v2602 = vpop.permute.xlu0 %2601
    %v2603 = vsel %vm158, %v2598, %v2600
    %v2604 = vsel %vm158, %v2600, %v2602
    %v2607 = vadd.f32 %v2479, %v2603
    %v2608 = vadd.f32 %v2480, %v2604
    %2612 = vrot.lane.b32.xlu0 %v2493, 127
    %v2613 = vpop.permute.xlu0 %2612
    %2614 = vrot.lane.b32.xlu0 %v2494, 127
    %v2615 = vpop.permute.xlu0 %2614
    %2616 = vrot.lane.b32.xlu0 %v2495, 127
    %v2617 = vpop.permute.xlu0 %2616
    %v2618 = vsel %vm158, %v2613, %v2615
    %v2619 = vsel %vm158, %v2615, %v2617
    %v2623 = vadd.f32 %v2488, %v2618
    %v2624 = vadd.f32 %v2489, %v2619
    %v2625 = vadd.f32 %v2490, %v2617
    %2629 = vrot.lane.b32.xlu0 %v2503, 127
    %v2630 = vpop.permute.xlu0 %2629
    %2631 = vrot.lane.b32.xlu0 %v2504, 127
    %v2632 = vpop.permute.xlu0 %2631
    %2633 = vrot.lane.b32.xlu0 %v2505, 127
    %v2634 = vpop.permute.xlu0 %2633
    %v2635 = vsel %vm158, %v2630, %v2632
    %v2636 = vsel %vm158, %v2632, %v2634
    %v2640 = vadd.f32 %v2498, %v2635
    %v2641 = vadd.f32 %v2499, %v2636
    %v2642 = vadd.f32 %v2500, %v2634
    %2646 = vrot.lane.b32.xlu0 %v2513, 127
    %v2647 = vpop.permute.xlu0 %2646
    %2648 = vrot.lane.b32.xlu0 %v2514, 127
    %v2649 = vpop.permute.xlu0 %2648
    %2650 = vrot.lane.b32.xlu0 %v2515, 127
    %v2651 = vpop.permute.xlu0 %2650
    %v2652 = vsel %vm158, %v2647, %v2649
    %v2653 = vsel %vm158, %v2649, %v2651
    %v2657 = vadd.f32 %v2508, %v2652
    %v2658 = vadd.f32 %v2509, %v2653
    %v2659 = vadd.f32 %v2510, %v2651
    %2663 = vrot.lane.b32.xlu0 %v2522, 127
    %v2664 = vpop.permute.xlu0 %2663
    %2665 = vrot.lane.b32.xlu0 %v2523, 127
    %v2666 = vpop.permute.xlu0 %2665
    %2667 = vrot.lane.b32.xlu0 %v2524, 127
    %v2668 = vpop.permute.xlu0 %2667
    %v2669 = vsel %vm158, %v2664, %v2666
    %v2670 = vsel %vm158, %v2666, %v2668
    %v2673 = vadd.f32 %v2518, %v2669
    %v2674 = vadd.f32 %v2519, %v2670
    %2678 = vrot.lane.b32.xlu0 %v2532, 127
    %v2679 = vpop.permute.xlu0 %2678
    %2680 = vrot.lane.b32.xlu0 %v2533, 127
    %v2681 = vpop.permute.xlu0 %2680
    %2682 = vrot.lane.b32.xlu0 %v2534, 127
    %v2683 = vpop.permute.xlu0 %2682
    %v2684 = vsel %vm158, %v2679, %v2681
    %v2685 = vsel %vm158, %v2681, %v2683
    %v2689 = vadd.f32 %v2527, %v2684
    %v2690 = vadd.f32 %v2528, %v2685
    %v2691 = vadd.f32 %v2529, %v2683
    %2695 = vrot.lane.b32.xlu0 %v2542, 127
    %v2696 = vpop.permute.xlu0 %2695
    %2697 = vrot.lane.b32.xlu0 %v2543, 127
    %v2698 = vpop.permute.xlu0 %2697
    %2699 = vrot.lane.b32.xlu0 %v2544, 127
    %v2700 = vpop.permute.xlu0 %2699
    %v2701 = vsel %vm158, %v2696, %v2698
    %v2702 = vsel %vm158, %v2698, %v2700
    %v2706 = vadd.f32 %v2537, %v2701
    %v2707 = vadd.f32 %v2538, %v2702
    %v2708 = vadd.f32 %v2539, %v2700
    %2712 = vrot.lane.b32.xlu0 %v2552, 127
    %v2713 = vpop.permute.xlu0 %2712
    %2714 = vrot.lane.b32.xlu0 %v2553, 127
    %v2715 = vpop.permute.xlu0 %2714
    %2716 = vrot.lane.b32.xlu0 %v2554, 127
    %v2717 = vpop.permute.xlu0 %2716
    %v2718 = vsel %vm158, %v2713, %v2715
    %v2719 = vsel %vm158, %v2715, %v2717
    %v2723 = vadd.f32 %v2547, %v2718
    %v2724 = vadd.f32 %v2548, %v2719
    %v2725 = vadd.f32 %v2549, %v2717
    %2729 = vrot.lane.b32.xlu0 %v2561, 127
    %v2730 = vpop.permute.xlu0 %2729
    %2731 = vrot.lane.b32.xlu0 %v2562, 127
    %v2732 = vpop.permute.xlu0 %2731
    %2733 = vrot.lane.b32.xlu0 %v2563, 127
    %v2734 = vpop.permute.xlu0 %2733
    %v2735 = vsel %vm158, %v2730, %v2732
    %v2736 = vsel %vm158, %v2732, %v2734
    %v2739 = vadd.f32 %v2557, %v2735
    %v2740 = vadd.f32 %v2558, %v2736
    %2744 = vrot.lane.b32.xlu0 %v2571, 127
    %v2745 = vpop.permute.xlu0 %2744
    %2746 = vrot.lane.b32.xlu0 %v2572, 127
    %v2747 = vpop.permute.xlu0 %2746
    %2748 = vrot.lane.b32.xlu0 %v2573, 127
    %v2749 = vpop.permute.xlu0 %2748
    %v2750 = vsel %vm158, %v2745, %v2747
    %v2751 = vsel %vm158, %v2747, %v2749
    %v2755 = vadd.f32 %v2566, %v2750
    %v2756 = vadd.f32 %v2567, %v2751
    %v2757 = vadd.f32 %v2568, %v2749
    %2761 = vrot.lane.b32.xlu0 %v2581, 127
    %v2762 = vpop.permute.xlu0 %2761
    %2763 = vrot.lane.b32.xlu0 %v2582, 127
    %v2764 = vpop.permute.xlu0 %2763
    %2765 = vrot.lane.b32.xlu0 %v2583, 127
    %v2766 = vpop.permute.xlu0 %2765
    %v2767 = vsel %vm158, %v2762, %v2764
    %v2768 = vsel %vm158, %v2764, %v2766
    %v2772 = vadd.f32 %v2576, %v2767
    %v2773 = vadd.f32 %v2577, %v2768
    %v2774 = vadd.f32 %v2578, %v2766
    %2778 = vrot.lane.b32.xlu0 %v2591, 127
    %v2779 = vpop.permute.xlu0 %2778
    %2780 = vrot.lane.b32.xlu0 %v2592, 127
    %v2781 = vpop.permute.xlu0 %2780
    %2782 = vrot.lane.b32.xlu0 %v2593, 127
    %v2783 = vpop.permute.xlu0 %2782
    %v2784 = vsel %vm158, %v2779, %v2781
    %v2785 = vsel %vm158, %v2781, %v2783
    %v2789 = vadd.f32 %v2586, %v2784
    %v2790 = vadd.f32 %v2587, %v2785
    %v2791 = vadd.f32 %v2588, %v2783
    %2795 = vrot.lane.b32.xlu0 %v2623, 126
    %v2796 = vpop.permute.xlu0 %2795
    %2797 = vrot.lane.b32.xlu0 %v2624, 126
    %v2798 = vpop.permute.xlu0 %2797
    %2799 = vrot.lane.b32.xlu0 %v2625, 126
    %v2800 = vpop.permute.xlu0 %2799
    %v2801 = vsel %vm227, %v2796, %v2798
    %v2802 = vsel %vm227, %v2798, %v2800
    %v2805 = vadd.f32 %v2607, %v2801
    %v2806 = vadd.f32 %v2608, %v2802
    %2810 = vrot.lane.b32.xlu0 %v2657, 126
    %v2811 = vpop.permute.xlu0 %2810
    %2812 = vrot.lane.b32.xlu0 %v2658, 126
    %v2813 = vpop.permute.xlu0 %2812
    %2814 = vrot.lane.b32.xlu0 %v2659, 126
    %v2815 = vpop.permute.xlu0 %2814
    %v2816 = vsel %vm227, %v2811, %v2813
    %v2817 = vsel %vm227, %v2813, %v2815
    %v2821 = vadd.f32 %v2640, %v2816
    %v2822 = vadd.f32 %v2641, %v2817
    %v2823 = vadd.f32 %v2642, %v2815
    %2827 = vrot.lane.b32.xlu0 %v2689, 126
    %v2828 = vpop.permute.xlu0 %2827
    %2829 = vrot.lane.b32.xlu0 %v2690, 126
    %v2830 = vpop.permute.xlu0 %2829
    %2831 = vrot.lane.b32.xlu0 %v2691, 126
    %v2832 = vpop.permute.xlu0 %2831
    %v2833 = vsel %vm227, %v2828, %v2830
    %v2834 = vsel %vm227, %v2830, %v2832
    %v2837 = vadd.f32 %v2673, %v2833
    %v2838 = vadd.f32 %v2674, %v2834
    %2842 = vrot.lane.b32.xlu0 %v2723, 126
    %v2843 = vpop.permute.xlu0 %2842
    %2844 = vrot.lane.b32.xlu0 %v2724, 126
    %v2845 = vpop.permute.xlu0 %2844
    %2846 = vrot.lane.b32.xlu0 %v2725, 126
    %v2847 = vpop.permute.xlu0 %2846
    %v2848 = vsel %vm227, %v2843, %v2845
    %v2849 = vsel %vm227, %v2845, %v2847
    %v2853 = vadd.f32 %v2706, %v2848
    %v2854 = vadd.f32 %v2707, %v2849
    %v2855 = vadd.f32 %v2708, %v2847
    %2859 = vrot.lane.b32.xlu0 %v2755, 126
    %v2860 = vpop.permute.xlu0 %2859
    %2861 = vrot.lane.b32.xlu0 %v2756, 126
    %v2862 = vpop.permute.xlu0 %2861
    %2863 = vrot.lane.b32.xlu0 %v2757, 126
    %v2864 = vpop.permute.xlu0 %2863
    %v2865 = vsel %vm227, %v2860, %v2862
    %v2866 = vsel %vm227, %v2862, %v2864
    %v2869 = vadd.f32 %v2739, %v2865
    %v2870 = vadd.f32 %v2740, %v2866
    %2874 = vrot.lane.b32.xlu0 %v2789, 126
    %v2875 = vpop.permute.xlu0 %2874
    %2876 = vrot.lane.b32.xlu0 %v2790, 126
    %v2877 = vpop.permute.xlu0 %2876
    %2878 = vrot.lane.b32.xlu0 %v2791, 126
    %v2879 = vpop.permute.xlu0 %2878
    %v2880 = vsel %vm227, %v2875, %v2877
    %v2881 = vsel %vm227, %v2877, %v2879
    %v2885 = vadd.f32 %v2772, %v2880
    %v2886 = vadd.f32 %v2773, %v2881
    %v2887 = vadd.f32 %v2774, %v2879
    %2891 = vrot.lane.b32.xlu0 %v2821, 112
    %v2892 = vpop.permute.xlu0 %2891
    %2893 = vrot.lane.b32.xlu0 %v2822, 112
    %v2894 = vpop.permute.xlu0 %2893
    %2895 = vrot.lane.b32.xlu0 %v2823, 112
    %v2896 = vpop.permute.xlu0 %2895
    %v2897 = vsel %vm262, %v2892, %v2894
    %v2898 = vsel %vm262, %v2894, %v2896
    %v2901 = vadd.f32 %v2805, %v2897
    %v2902 = vadd.f32 %v2806, %v2898
    %2906 = vrot.lane.b32.xlu0 %v2853, 112
    %v2907 = vpop.permute.xlu0 %2906
    %2908 = vrot.lane.b32.xlu0 %v2854, 112
    %v2909 = vpop.permute.xlu0 %2908
    %2910 = vrot.lane.b32.xlu0 %v2855, 112
    %v2911 = vpop.permute.xlu0 %2910
    %v2912 = vsel %vm262, %v2907, %v2909
    %v2913 = vsel %vm262, %v2909, %v2911
    %v2916 = vadd.f32 %v2837, %v2912
    %v2917 = vadd.f32 %v2838, %v2913
    %2921 = vrot.lane.b32.xlu0 %v2885, 112
    %v2922 = vpop.permute.xlu0 %2921
    %2923 = vrot.lane.b32.xlu0 %v2886, 112
    %v2924 = vpop.permute.xlu0 %2923
    %2925 = vrot.lane.b32.xlu0 %v2887, 112
    %v2926 = vpop.permute.xlu0 %2925
    %v2927 = vsel %vm262, %v2922, %v2924
    %v2928 = vsel %vm262, %v2924, %v2926
    %v2931 = vadd.f32 %v2869, %v2927
    %v2932 = vadd.f32 %v2870, %v2928
    %v2933 = vadd.f32 %v2901, %v2916
    %v2934 = vadd.f32 %v2902, %v2917
    %v2935 = vadd.f32 %v2933, %v2931
    %v2936 = vadd.f32 %v2934, %v2932
    %s2937 = sld [smem:[#allocation11 + $0x4]]
    %v2938 = vstv %s2937
    %v2939 = vadd.f32 %v2935, %v2938
    %v2940 = vadd.f32 %v2936, %v2938
    %v2941 = vmax.f32 %v2939, 0.0
    %v2942 = vmax.f32 %v2940, 0.0
    %s2943 = sld [smem:[#allocation10 + $0x78]]
    %v2944 = vstv %s2943
    %v2945 = vmul.f32 %v2944, %v276
    %v2946 = vmul.f32 %v2944, %v277
    %s2947 = sld [smem:[#allocation10 + $0x79]]
    %v2948 = vstv %s2947
    %v2949 = vmul.f32 %v2948, %v276
    %v2950 = vmul.f32 %v2948, %v277
    %v2951 = vmul.f32 %v2948, %v278
    %s2952 = sld [smem:[#allocation10 + $0x7a]]
    %v2953 = vstv %s2952
    %v2954 = vmul.f32 %v2953, %v276
    %v2955 = vmul.f32 %v2953, %v277
    %v2956 = vmul.f32 %v2953, %v278
    %s2957 = sld [smem:[#allocation10 + $0x7b]]
    %v2958 = vstv %s2957
    %v2959 = vmul.f32 %v2958, %v276
    %v2960 = vmul.f32 %v2958, %v277
    %v2961 = vmul.f32 %v2958, %v278
    %s2962 = sld [smem:[#allocation10 + $0x7c]]
    %v2963 = vstv %s2962
    %v2964 = vmul.f32 %v2963, %v276
    %v2965 = vmul.f32 %v2963, %v277
    %v2966 = vmul.f32 %v2963, %v278
    %s2967 = sld [smem:[#allocation10 + $0x7d]]
    %v2968 = vstv %s2967
    %v2969 = vmul.f32 %v2968, %v276
    %v2970 = vmul.f32 %v2968, %v277
    %v2971 = vmul.f32 %v2968, %v278
    %s2972 = sld [smem:[#allocation10 + $0x7e]]
    %v2973 = vstv %s2972
    %v2974 = vmul.f32 %v2973, %v276
    %v2975 = vmul.f32 %v2973, %v277
    %v2976 = vmul.f32 %v2973, %v278
    %s2977 = sld [smem:[#allocation10 + $0x7f]]
    %v2978 = vstv %s2977
    %v2979 = vmul.f32 %v2978, %v276
    %v2980 = vmul.f32 %v2978, %v277
    %v2981 = vmul.f32 %v2978, %v278
    %s2982 = sld [smem:[#allocation10 + $0x80]]
    %v2983 = vstv %s2982
    %v2984 = vmul.f32 %v2983, %v443
    %v2985 = vmul.f32 %v2983, %v444
    %s2986 = sld [smem:[#allocation10 + $0x81]]
    %v2987 = vstv %s2986
    %v2988 = vmul.f32 %v2987, %v443
    %v2989 = vmul.f32 %v2987, %v444
    %v2990 = vmul.f32 %v2987, %v445
    %s2991 = sld [smem:[#allocation10 + $0x82]]
    %v2992 = vstv %s2991
    %v2993 = vmul.f32 %v2992, %v443
    %v2994 = vmul.f32 %v2992, %v444
    %v2995 = vmul.f32 %v2992, %v445
    %s2996 = sld [smem:[#allocation10 + $0x83]]
    %v2997 = vstv %s2996
    %v2998 = vmul.f32 %v2997, %v443
    %v2999 = vmul.f32 %v2997, %v444
    %v3000 = vmul.f32 %v2997, %v445
    %s3001 = sld [smem:[#allocation10 + $0x84]]
    %v3002 = vstv %s3001
    %v3003 = vmul.f32 %v3002, %v443
    %v3004 = vmul.f32 %v3002, %v444
    %v3005 = vmul.f32 %v3002, %v445
    %s3006 = sld [smem:[#allocation10 + $0x85]]
    %v3007 = vstv %s3006
    %v3008 = vmul.f32 %v3007, %v443
    %v3009 = vmul.f32 %v3007, %v444
    %v3010 = vmul.f32 %v3007, %v445
    %s3011 = sld [smem:[#allocation10 + $0x86]]
    %v3012 = vstv %s3011
    %v3013 = vmul.f32 %v3012, %v443
    %v3014 = vmul.f32 %v3012, %v444
    %v3015 = vmul.f32 %v3012, %v445
    %s3016 = sld [smem:[#allocation10 + $0x87]]
    %v3017 = vstv %s3016
    %v3018 = vmul.f32 %v3017, %v443
    %v3019 = vmul.f32 %v3017, %v444
    %v3020 = vmul.f32 %v3017, %v445
    %s3021 = sld [smem:[#allocation10 + $0x88]]
    %v3022 = vstv %s3021
    %v3023 = vmul.f32 %v3022, %v610
    %v3024 = vmul.f32 %v3022, %v611
    %s3025 = sld [smem:[#allocation10 + $0x89]]
    %v3026 = vstv %s3025
    %v3027 = vmul.f32 %v3026, %v610
    %v3028 = vmul.f32 %v3026, %v611
    %v3029 = vmul.f32 %v3026, %v612
    %s3030 = sld [smem:[#allocation10 + $0x8a]]
    %v3031 = vstv %s3030
    %v3032 = vmul.f32 %v3031, %v610
    %v3033 = vmul.f32 %v3031, %v611
    %v3034 = vmul.f32 %v3031, %v612
    %s3035 = sld [smem:[#allocation10 + $0x8b]]
    %v3036 = vstv %s3035
    %v3037 = vmul.f32 %v3036, %v610
    %v3038 = vmul.f32 %v3036, %v611
    %v3039 = vmul.f32 %v3036, %v612
    %s3040 = sld [smem:[#allocation10 + $0x8c]]
    %v3041 = vstv %s3040
    %v3042 = vmul.f32 %v3041, %v610
    %v3043 = vmul.f32 %v3041, %v611
    %v3044 = vmul.f32 %v3041, %v612
    %s3045 = sld [smem:[#allocation10 + $0x8d]]
    %v3046 = vstv %s3045
    %v3047 = vmul.f32 %v3046, %v610
    %v3048 = vmul.f32 %v3046, %v611
    %v3049 = vmul.f32 %v3046, %v612
    %s3050 = sld [smem:[#allocation10 + $0x8e]]
    %v3051 = vstv %s3050
    %v3052 = vmul.f32 %v3051, %v610
    %v3053 = vmul.f32 %v3051, %v611
    %v3054 = vmul.f32 %v3051, %v612
    %s3055 = sld [smem:[#allocation10 + $0x8f]]
    %v3056 = vstv %s3055
    %v3057 = vmul.f32 %v3056, %v610
    %v3058 = vmul.f32 %v3056, %v611
    %v3059 = vmul.f32 %v3056, %v612
    %3063 = vrot.lane.b32.xlu0 %v2949, 127
    %v3064 = vpop.permute.xlu0 %3063
    %3065 = vrot.lane.b32.xlu0 %v2950, 127
    %v3066 = vpop.permute.xlu0 %3065
    %3067 = vrot.lane.b32.xlu0 %v2951, 127
    %v3068 = vpop.permute.xlu0 %3067
    %v3069 = vsel %vm158, %v3064, %v3066
    %v3070 = vsel %vm158, %v3066, %v3068
    %v3073 = vadd.f32 %v2945, %v3069
    %v3074 = vadd.f32 %v2946, %v3070
    %3078 = vrot.lane.b32.xlu0 %v2959, 127
    %v3079 = vpop.permute.xlu0 %3078
    %3080 = vrot.lane.b32.xlu0 %v2960, 127
    %v3081 = vpop.permute.xlu0 %3080
    %3082 = vrot.lane.b32.xlu0 %v2961, 127
    %v3083 = vpop.permute.xlu0 %3082
    %v3084 = vsel %vm158, %v3079, %v3081
    %v3085 = vsel %vm158, %v3081, %v3083
    %v3089 = vadd.f32 %v2954, %v3084
    %v3090 = vadd.f32 %v2955, %v3085
    %v3091 = vadd.f32 %v2956, %v3083
    %3095 = vrot.lane.b32.xlu0 %v2969, 127
    %v3096 = vpop.permute.xlu0 %3095
    %3097 = vrot.lane.b32.xlu0 %v2970, 127
    %v3098 = vpop.permute.xlu0 %3097
    %3099 = vrot.lane.b32.xlu0 %v2971, 127
    %v3100 = vpop.permute.xlu0 %3099
    %v3101 = vsel %vm158, %v3096, %v3098
    %v3102 = vsel %vm158, %v3098, %v3100
    %v3106 = vadd.f32 %v2964, %v3101
    %v3107 = vadd.f32 %v2965, %v3102
    %v3108 = vadd.f32 %v2966, %v3100
    %3112 = vrot.lane.b32.xlu0 %v2979, 127
    %v3113 = vpop.permute.xlu0 %3112
    %3114 = vrot.lane.b32.xlu0 %v2980, 127
    %v3115 = vpop.permute.xlu0 %3114
    %3116 = vrot.lane.b32.xlu0 %v2981, 127
    %v3117 = vpop.permute.xlu0 %3116
    %v3118 = vsel %vm158, %v3113, %v3115
    %v3119 = vsel %vm158, %v3115, %v3117
    %v3123 = vadd.f32 %v2974, %v3118
    %v3124 = vadd.f32 %v2975, %v3119
    %v3125 = vadd.f32 %v2976, %v3117
    %3129 = vrot.lane.b32.xlu0 %v2988, 127
    %v3130 = vpop.permute.xlu0 %3129
    %3131 = vrot.lane.b32.xlu0 %v2989, 127
    %v3132 = vpop.permute.xlu0 %3131
    %3133 = vrot.lane.b32.xlu0 %v2990, 127
    %v3134 = vpop.permute.xlu0 %3133
    %v3135 = vsel %vm158, %v3130, %v3132
    %v3136 = vsel %vm158, %v3132, %v3134
    %v3139 = vadd.f32 %v2984, %v3135
    %v3140 = vadd.f32 %v2985, %v3136
    %3144 = vrot.lane.b32.xlu0 %v2998, 127
    %v3145 = vpop.permute.xlu0 %3144
    %3146 = vrot.lane.b32.xlu0 %v2999, 127
    %v3147 = vpop.permute.xlu0 %3146
    %3148 = vrot.lane.b32.xlu0 %v3000, 127
    %v3149 = vpop.permute.xlu0 %3148
    %v3150 = vsel %vm158, %v3145, %v3147
    %v3151 = vsel %vm158, %v3147, %v3149
    %v3155 = vadd.f32 %v2993, %v3150
    %v3156 = vadd.f32 %v2994, %v3151
    %v3157 = vadd.f32 %v2995, %v3149
    %3161 = vrot.lane.b32.xlu0 %v3008, 127
    %v3162 = vpop.permute.xlu0 %3161
    %3163 = vrot.lane.b32.xlu0 %v3009, 127
    %v3164 = vpop.permute.xlu0 %3163
    %3165 = vrot.lane.b32.xlu0 %v3010, 127
    %v3166 = vpop.permute.xlu0 %3165
    %v3167 = vsel %vm158, %v3162, %v3164
    %v3168 = vsel %vm158, %v3164, %v3166
    %v3172 = vadd.f32 %v3003, %v3167
    %v3173 = vadd.f32 %v3004, %v3168
    %v3174 = vadd.f32 %v3005, %v3166
    %3178 = vrot.lane.b32.xlu0 %v3018, 127
    %v3179 = vpop.permute.xlu0 %3178
    %3180 = vrot.lane.b32.xlu0 %v3019, 127
    %v3181 = vpop.permute.xlu0 %3180
    %3182 = vrot.lane.b32.xlu0 %v3020, 127
    %v3183 = vpop.permute.xlu0 %3182
    %v3184 = vsel %vm158, %v3179, %v3181
    %v3185 = vsel %vm158, %v3181, %v3183
    %v3189 = vadd.f32 %v3013, %v3184
    %v3190 = vadd.f32 %v3014, %v3185
    %v3191 = vadd.f32 %v3015, %v3183
    %3195 = vrot.lane.b32.xlu0 %v3027, 127
    %v3196 = vpop.permute.xlu0 %3195
    %3197 = vrot.lane.b32.xlu0 %v3028, 127
    %v3198 = vpop.permute.xlu0 %3197
    %3199 = vrot.lane.b32.xlu0 %v3029, 127
    %v3200 = vpop.permute.xlu0 %3199
    %v3201 = vsel %vm158, %v3196, %v3198
    %v3202 = vsel %vm158, %v3198, %v3200
    %v3205 = vadd.f32 %v3023, %v3201
    %v3206 = vadd.f32 %v3024, %v3202
    %3210 = vrot.lane.b32.xlu0 %v3037, 127
    %v3211 = vpop.permute.xlu0 %3210
    %3212 = vrot.lane.b32.xlu0 %v3038, 127
    %v3213 = vpop.permute.xlu0 %3212
    %3214 = vrot.lane.b32.xlu0 %v3039, 127
    %v3215 = vpop.permute.xlu0 %3214
    %v3216 = vsel %vm158, %v3211, %v3213
    %v3217 = vsel %vm158, %v3213, %v3215
    %v3221 = vadd.f32 %v3032, %v3216
    %v3222 = vadd.f32 %v3033, %v3217
    %v3223 = vadd.f32 %v3034, %v3215
    %3227 = vrot.lane.b32.xlu0 %v3047, 127
    %v3228 = vpop.permute.xlu0 %3227
    %3229 = vrot.lane.b32.xlu0 %v3048, 127
    %v3230 = vpop.permute.xlu0 %3229
    %3231 = vrot.lane.b32.xlu0 %v3049, 127
    %v3232 = vpop.permute.xlu0 %3231
    %v3233 = vsel %vm158, %v3228, %v3230
    %v3234 = vsel %vm158, %v3230, %v3232
    %v3238 = vadd.f32 %v3042, %v3233
    %v3239 = vadd.f32 %v3043, %v3234
    %v3240 = vadd.f32 %v3044, %v3232
    %3244 = vrot.lane.b32.xlu0 %v3057, 127
    %v3245 = vpop.permute.xlu0 %3244
    %3246 = vrot.lane.b32.xlu0 %v3058, 127
    %v3247 = vpop.permute.xlu0 %3246
    %3248 = vrot.lane.b32.xlu0 %v3059, 127
    %v3249 = vpop.permute.xlu0 %3248
    %v3250 = vsel %vm158, %v3245, %v3247
    %v3251 = vsel %vm158, %v3247, %v3249
    %v3255 = vadd.f32 %v3052, %v3250
    %v3256 = vadd.f32 %v3053, %v3251
    %v3257 = vadd.f32 %v3054, %v3249
    %3261 = vrot.lane.b32.xlu0 %v3089, 126
    %v3262 = vpop.permute.xlu0 %3261
    %3263 = vrot.lane.b32.xlu0 %v3090, 126
    %v3264 = vpop.permute.xlu0 %3263
    %3265 = vrot.lane.b32.xlu0 %v3091, 126
    %v3266 = vpop.permute.xlu0 %3265
    %v3267 = vsel %vm227, %v3262, %v3264
    %v3268 = vsel %vm227, %v3264, %v3266
    %v3271 = vadd.f32 %v3073, %v3267
    %v3272 = vadd.f32 %v3074, %v3268
    %3276 = vrot.lane.b32.xlu0 %v3123, 126
    %v3277 = vpop.permute.xlu0 %3276
    %3278 = vrot.lane.b32.xlu0 %v3124, 126
    %v3279 = vpop.permute.xlu0 %3278
    %3280 = vrot.lane.b32.xlu0 %v3125, 126
    %v3281 = vpop.permute.xlu0 %3280
    %v3282 = vsel %vm227, %v3277, %v3279
    %v3283 = vsel %vm227, %v3279, %v3281
    %v3287 = vadd.f32 %v3106, %v3282
    %v3288 = vadd.f32 %v3107, %v3283
    %v3289 = vadd.f32 %v3108, %v3281
    %3293 = vrot.lane.b32.xlu0 %v3155, 126
    %v3294 = vpop.permute.xlu0 %3293
    %3295 = vrot.lane.b32.xlu0 %v3156, 126
    %v3296 = vpop.permute.xlu0 %3295
    %3297 = vrot.lane.b32.xlu0 %v3157, 126
    %v3298 = vpop.permute.xlu0 %3297
    %v3299 = vsel %vm227, %v3294, %v3296
    %v3300 = vsel %vm227, %v3296, %v3298
    %v3303 = vadd.f32 %v3139, %v3299
    %v3304 = vadd.f32 %v3140, %v3300
    %3308 = vrot.lane.b32.xlu0 %v3189, 126
    %v3309 = vpop.permute.xlu0 %3308
    %3310 = vrot.lane.b32.xlu0 %v3190, 126
    %v3311 = vpop.permute.xlu0 %3310
    %3312 = vrot.lane.b32.xlu0 %v3191, 126
    %v3313 = vpop.permute.xlu0 %3312
    %v3314 = vsel %vm227, %v3309, %v3311
    %v3315 = vsel %vm227, %v3311, %v3313
    %v3319 = vadd.f32 %v3172, %v3314
    %v3320 = vadd.f32 %v3173, %v3315
    %v3321 = vadd.f32 %v3174, %v3313
    %3325 = vrot.lane.b32.xlu0 %v3221, 126
    %v3326 = vpop.permute.xlu0 %3325
    %3327 = vrot.lane.b32.xlu0 %v3222, 126
    %v3328 = vpop.permute.xlu0 %3327
    %3329 = vrot.lane.b32.xlu0 %v3223, 126
    %v3330 = vpop.permute.xlu0 %3329
    %v3331 = vsel %vm227, %v3326, %v3328
    %v3332 = vsel %vm227, %v3328, %v3330
    %v3335 = vadd.f32 %v3205, %v3331
    %v3336 = vadd.f32 %v3206, %v3332
    %3340 = vrot.lane.b32.xlu0 %v3255, 126
    %v3341 = vpop.permute.xlu0 %3340
    %3342 = vrot.lane.b32.xlu0 %v3256, 126
    %v3343 = vpop.permute.xlu0 %3342
    %3344 = vrot.lane.b32.xlu0 %v3257, 126
    %v3345 = vpop.permute.xlu0 %3344
    %v3346 = vsel %vm227, %v3341, %v3343
    %v3347 = vsel %vm227, %v3343, %v3345
    %v3351 = vadd.f32 %v3238, %v3346
    %v3352 = vadd.f32 %v3239, %v3347
    %v3353 = vadd.f32 %v3240, %v3345
    %3357 = vrot.lane.b32.xlu0 %v3287, 112
    %v3358 = vpop.permute.xlu0 %3357
    %3359 = vrot.lane.b32.xlu0 %v3288, 112
    %v3360 = vpop.permute.xlu0 %3359
    %3361 = vrot.lane.b32.xlu0 %v3289, 112
    %v3362 = vpop.permute.xlu0 %3361
    %v3363 = vsel %vm262, %v3358, %v3360
    %v3364 = vsel %vm262, %v3360, %v3362
    %v3367 = vadd.f32 %v3271, %v3363
    %v3368 = vadd.f32 %v3272, %v3364
    %3372 = vrot.lane.b32.xlu0 %v3319, 112
    %v3373 = vpop.permute.xlu0 %3372
    %3374 = vrot.lane.b32.xlu0 %v3320, 112
    %v3375 = vpop.permute.xlu0 %3374
    %3376 = vrot.lane.b32.xlu0 %v3321, 112
    %v3377 = vpop.permute.xlu0 %3376
    %v3378 = vsel %vm262, %v3373, %v3375
    %v3379 = vsel %vm262, %v3375, %v3377
    %v3382 = vadd.f32 %v3303, %v3378
    %v3383 = vadd.f32 %v3304, %v3379
    %3387 = vrot.lane.b32.xlu0 %v3351, 112
    %v3388 = vpop.permute.xlu0 %3387
    %3389 = vrot.lane.b32.xlu0 %v3352, 112
    %v3390 = vpop.permute.xlu0 %3389
    %3391 = vrot.lane.b32.xlu0 %v3353, 112
    %v3392 = vpop.permute.xlu0 %3391
    %v3393 = vsel %vm262, %v3388, %v3390
    %v3394 = vsel %vm262, %v3390, %v3392
    %v3397 = vadd.f32 %v3335, %v3393
    %v3398 = vadd.f32 %v3336, %v3394
    %v3399 = vadd.f32 %v3367, %v3382
    %v3400 = vadd.f32 %v3368, %v3383
    %v3401 = vadd.f32 %v3399, %v3397
    %v3402 = vadd.f32 %v3400, %v3398
    %s3403 = sld [smem:[#allocation11 + $0x5]]
    %v3404 = vstv %s3403
    %v3405 = vadd.f32 %v3401, %v3404
    %v3406 = vadd.f32 %v3402, %v3404
    %v3407 = vmax.f32 %v3405, 0.0
    %v3408 = vmax.f32 %v3406, 0.0
    %v3409 = vld [vmem:[#allocation13] sm:$0xff]
    %v3410 = vld [vmem:[#allocation13 + $0x8] sm:$0xff]
    %v3411 = vld [vmem:[#allocation13 + $0x10] sm:$0xff]
    %v3412 = vld [vmem:[#allocation13 + $0x18] sm:$0xff]
    %v3413 = vld [vmem:[#allocation13 + $0x20] sm:$0xff]
    %v3414 = vld [vmem:[#allocation13 + $0x28] sm:$0xff]
    %v3415 = vld [vmem:[#allocation13 + $0x30] sm:$0xff]
    %v3416 = vld [vmem:[#allocation13 + $0x38] sm:$0xff]
    %v3417 = vld [vmem:[#allocation13 + $0x40] sm:$0xff]
    %v3418 = vld [vmem:[#allocation13 + $0x48] sm:$0xff]
    %v3419 = vld [vmem:[#allocation13 + $0x50] sm:$0xff]
    %v3420 = vld [vmem:[#allocation13 + $0x58] sm:$0xff]
    %v3421 = vld [vmem:[#allocation13 + $0x60] sm:$0xff]
    %v3422 = vld [vmem:[#allocation13 + $0x68] sm:$0xff]
    %v3423 = vld [vmem:[#allocation13 + $0x70] sm:$0xff]
    %v3424 = vld [vmem:[#allocation13 + $0x78] sm:$0xff]
    %v3425 = vld [vmem:[#allocation13 + $0x80] sm:$0xff]
    %v3426 = vld [vmem:[#allocation13 + $0x88] sm:$0xff]
    %v3427 = vld [vmem:[#allocation13 + $0x90] sm:$0xff]
    %v3428 = vld [vmem:[#allocation13 + $0x98] sm:$0xff]
    %v3429 = vld [vmem:[#allocation13 + $0xa0] sm:$0xff]
    %v3430 = vld [vmem:[#allocation13 + $0xa8] sm:$0xff]
    %v3431 = vld [vmem:[#allocation13 + $0xb0] sm:$0xff]
    %v3432 = vld [vmem:[#allocation13 + $0xb8] sm:$0xff]
    %v3433 = vld [vmem:[#allocation13 + $0xc0] sm:$0xff]
    %v3434 = vld [vmem:[#allocation13 + $0xc8] sm:$0xff]
    %v3435 = vld [vmem:[#allocation13 + $0xd0] sm:$0xff]
    %v3436 = vld [vmem:[#allocation13 + $0xd8] sm:$0xff]
    %v3437 = vld [vmem:[#allocation13 + $0xe0] sm:$0xff]
    %v3438 = vld [vmem:[#allocation13 + $0xe8] sm:$0xff]
    %v3439 = vld [vmem:[#allocation13 + $0xf0] sm:$0xff]
    %v3440 = vld [vmem:[#allocation13 + $0xf8] sm:$0xff]
    %v3441 = vld [vmem:[#allocation13 + $0x100] sm:$0xff]
    %v3442 = vld [vmem:[#allocation13 + $0x108] sm:$0xff]
    %v3443 = vld [vmem:[#allocation13 + $0x110] sm:$0xff]
    %v3444 = vld [vmem:[#allocation13 + $0x118] sm:$0xff]
    %v3445 = vld [vmem:[#allocation13 + $0x120] sm:$0xff]
    %v3446 = vld [vmem:[#allocation13 + $0x128] sm:$0xff]
    %v3447 = vld [vmem:[#allocation13 + $0x130] sm:$0xff]
    %v3448 = vld [vmem:[#allocation13 + $0x138] sm:$0xff]
    %v3449 = vld [vmem:[#allocation13 + $0x140] sm:$0xff]
    %v3450 = vld [vmem:[#allocation13 + $0x148] sm:$0xff]
    %v3451 = vld [vmem:[#allocation13 + $0x150] sm:$0xff]
    %v3452 = vld [vmem:[#allocation13 + $0x158] sm:$0xff]
    %v3453 = vld [vmem:[#allocation13 + $0x160] sm:$0xff]
    %v3454 = vld [vmem:[#allocation13 + $0x168] sm:$0xff]
    %v3455 = vld [vmem:[#allocation13 + $0x170] sm:$0xff]
    %v3456 = vld [vmem:[#allocation13 + $0x178] sm:$0xff]
    %v3457 = vld [vmem:[#allocation13 + $0x180] sm:$0xff]
    %v3458 = vld [vmem:[#allocation13 + $0x188] sm:$0xff]
    %v3459 = vld [vmem:[#allocation13 + $0x190] sm:$0xff]
    %v3460 = vld [vmem:[#allocation13 + $0x198] sm:$0xff]
    %v3461 = vld [vmem:[#allocation13 + $0x1a0] sm:$0xff]
    %v3462 = vld [vmem:[#allocation13 + $0x1a8] sm:$0xff]
    %v3463 = vld [vmem:[#allocation13 + $0x1b0] sm:$0xff]
    %v3464 = vld [vmem:[#allocation13 + $0x1b8] sm:$0xff]
    %v3465 = vld [vmem:[#allocation13 + $0x1c0] sm:$0xff]
    %v3466 = vld [vmem:[#allocation13 + $0x1c8] sm:$0xff]
    %v3467 = vld [vmem:[#allocation13 + $0x1d0] sm:$0xff]
    %v3468 = vld [vmem:[#allocation13 + $0x1d8] sm:$0xff]
    %v3469 = vld [vmem:[#allocation13 + $0x1e0] sm:$0xff]
    %v3470 = vld [vmem:[#allocation13 + $0x1e8] sm:$0xff]
    %v3471 = vld [vmem:[#allocation13 + $0x1f0] sm:$0xff]
    %v3472 = vld [vmem:[#allocation13 + $0x1f8] sm:$0xff]
    %v3473 = vld [vmem:[#allocation13 + $0x200] sm:$0xff]
    %v3474 = vld [vmem:[#allocation13 + $0x208] sm:$0xff]
    %v3475 = vld [vmem:[#allocation13 + $0x210] sm:$0xff]
    %v3476 = vld [vmem:[#allocation13 + $0x218] sm:$0xff]
    %v3477 = vld [vmem:[#allocation13 + $0x220] sm:$0xff]
    %v3478 = vld [vmem:[#allocation13 + $0x228] sm:$0xff]
    %v3479 = vld [vmem:[#allocation13 + $0x230] sm:$0xff]
    %v3480 = vld [vmem:[#allocation13 + $0x238] sm:$0xff]
    %v3481 = vld [vmem:[#allocation13 + $0x240] sm:$0xff]
    %v3482 = vld [vmem:[#allocation13 + $0x248] sm:$0xff]
    %v3483 = vld [vmem:[#allocation13 + $0x250] sm:$0xff]
    %v3484 = vld [vmem:[#allocation13 + $0x258] sm:$0xff]
    %v3485 = vld [vmem:[#allocation13 + $0x260] sm:$0xff]
    %v3486 = vld [vmem:[#allocation13 + $0x268] sm:$0xff]
    %v3487 = vld [vmem:[#allocation13 + $0x270] sm:$0xff]
    %v3488 = vld [vmem:[#allocation13 + $0x278] sm:$0xff]
    %v3489 = vld [vmem:[#allocation13 + $0x280] sm:$0xff]
    %v3490 = vld [vmem:[#allocation13 + $0x288] sm:$0xff]
    %v3491 = vld [vmem:[#allocation13 + $0x290] sm:$0xff]
    %v3492 = vld [vmem:[#allocation13 + $0x298] sm:$0xff]
    %v3493 = vld [vmem:[#allocation13 + $0x2a0] sm:$0xff]
    %v3494 = vld [vmem:[#allocation13 + $0x2a8] sm:$0xff]
    %v3495 = vld [vmem:[#allocation13 + $0x2b0] sm:$0xff]
    %v3496 = vld [vmem:[#allocation13 + $0x2b8] sm:$0xff]
    %v3497 = vld [vmem:[#allocation13 + $0x2c0] sm:$0xff]
    %v3498 = vld [vmem:[#allocation13 + $0x2c8] sm:$0xff]
    %v3499 = vld [vmem:[#allocation13 + $0x2d0] sm:$0xff]
    %v3500 = vld [vmem:[#allocation13 + $0x2d8] sm:$0xff]
    %v3501 = vld [vmem:[#allocation13 + $0x2e0] sm:$0xff]
    %v3502 = vld [vmem:[#allocation13 + $0x2e8] sm:$0xff]
    %v3503 = vld [vmem:[#allocation13 + $0x2f0] sm:$0xff]
    %v3504 = vld [vmem:[#allocation13 + $0x2f8] sm:$0xff]
    %v3505 = vld [vmem:[#allocation13 + $0x300] sm:$0xff]
    %v3506 = vld [vmem:[#allocation13 + $0x308] sm:$0xff]
    %v3507 = vld [vmem:[#allocation13 + $0x310] sm:$0xff]
    %v3508 = vld [vmem:[#allocation13 + $0x318] sm:$0xff]
    %v3509 = vld [vmem:[#allocation13 + $0x320] sm:$0xff]
    %v3510 = vld [vmem:[#allocation13 + $0x328] sm:$0xff]
    %v3511 = vld [vmem:[#allocation13 + $0x330] sm:$0xff]
    %v3512 = vld [vmem:[#allocation13 + $0x338] sm:$0xff]
    %v3513 = vld [vmem:[#allocation13 + $0x340] sm:$0xff]
    %v3514 = vld [vmem:[#allocation13 + $0x348] sm:$0xff]
    %v3515 = vld [vmem:[#allocation13 + $0x350] sm:$0xff]
    %v3516 = vld [vmem:[#allocation13 + $0x358] sm:$0xff]
    %v3517 = vld [vmem:[#allocation13 + $0x360] sm:$0xff]
    %v3518 = vld [vmem:[#allocation13 + $0x368] sm:$0xff]
    %v3519 = vld [vmem:[#allocation13 + $0x370] sm:$0xff]
    %v3520 = vld [vmem:[#allocation13 + $0x378] sm:$0xff]
    %v3521 = vld [vmem:[#allocation13 + $0x380] sm:$0xff]
    %v3522 = vld [vmem:[#allocation13 + $0x388] sm:$0xff]
    %v3523 = vld [vmem:[#allocation13 + $0x390] sm:$0xff]
    %v3524 = vld [vmem:[#allocation13 + $0x398] sm:$0xff]
    %v3525 = vld [vmem:[#allocation13 + $0x3a0] sm:$0xff]
    %v3526 = vld [vmem:[#allocation13 + $0x3a8] sm:$0xff]
    %v3527 = vld [vmem:[#allocation13 + $0x3b0] sm:$0xff]
    %v3528 = vld [vmem:[#allocation13 + $0x3b8] sm:$0xff]
    %v3529 = vld [vmem:[#allocation13 + $0x3c0] sm:$0xff]
    %v3530 = vld [vmem:[#allocation13 + $0x3c8] sm:$0xff]
    %v3531 = vld [vmem:[#allocation13 + $0x3d0] sm:$0xff]
    %v3532 = vld [vmem:[#allocation13 + $0x3d8] sm:$0xff]
    %v3533 = vld [vmem:[#allocation13 + $0x3e0] sm:$0xff]
    %v3534 = vld [vmem:[#allocation13 + $0x3e8] sm:$0xff]
    %v3535 = vld [vmem:[#allocation13 + $0x3f0] sm:$0xff]
    %v3536 = vld [vmem:[#allocation13 + $0x3f8] sm:$0xff]
    %v3537 = vld [vmem:[#allocation13 + $0x400] sm:$0xff]
    %v3538 = vld [vmem:[#allocation13 + $0x408] sm:$0xff]
    %v3539 = vld [vmem:[#allocation13 + $0x410] sm:$0xff]
    %v3540 = vld [vmem:[#allocation13 + $0x418] sm:$0xff]
    %v3541 = vld [vmem:[#allocation13 + $0x420] sm:$0xff]
    %v3542 = vld [vmem:[#allocation13 + $0x428] sm:$0xff]
    %v3543 = vld [vmem:[#allocation13 + $0x430] sm:$0xff]
    %v3544 = vld [vmem:[#allocation13 + $0x438] sm:$0xff]
    %v3545 = vld [vmem:[#allocation13 + $0x440] sm:$0xff]
    %v3546 = vld [vmem:[#allocation13 + $0x448] sm:$0xff]
    %v3547 = vld [vmem:[#allocation13 + $0x450] sm:$0xff]
    %v3548 = vld [vmem:[#allocation13 + $0x458] sm:$0xff]
    %v3549 = vld [vmem:[#allocation13 + $0x460] sm:$0xff]
    %v3550 = vld [vmem:[#allocation13 + $0x468] sm:$0xff]
    %v3551 = vld [vmem:[#allocation13 + $0x470] sm:$0xff]
    %v3552 = vld [vmem:[#allocation13 + $0x478] sm:$0xff]
    %v3553 = vld [vmem:[#allocation13 + $0x480] sm:$0xff]
    %v3554 = vld [vmem:[#allocation13 + $0x488] sm:$0xff]
    %v3555 = vld [vmem:[#allocation13 + $0x490] sm:$0xff]
    %v3556 = vld [vmem:[#allocation13 + $0x498] sm:$0xff]
    %v3557 = vld [vmem:[#allocation13 + $0x4a0] sm:$0xff]
    %v3558 = vld [vmem:[#allocation13 + $0x4a8] sm:$0xff]
    %v3559 = vld [vmem:[#allocation13 + $0x4b0] sm:$0xff]
    %v3560 = vld [vmem:[#allocation13 + $0x4b8] sm:$0xff]
    %v3561 = vld [vmem:[#allocation13 + $0x4c0] sm:$0xff]
    %v3562 = vld [vmem:[#allocation13 + $0x4c8] sm:$0xff]
    %v3563 = vld [vmem:[#allocation13 + $0x4d0] sm:$0xff]
    %v3564 = vld [vmem:[#allocation13 + $0x4d8] sm:$0xff]
    %v3565 = vld [vmem:[#allocation13 + $0x4e0] sm:$0xff]
    %v3566 = vld [vmem:[#allocation13 + $0x4e8] sm:$0xff]
    %v3567 = vld [vmem:[#allocation13 + $0x4f0] sm:$0xff]
    %v3568 = vld [vmem:[#allocation13 + $0x4f8] sm:$0xff]
    %v3569 = vld [vmem:[#allocation13 + $0x500] sm:$0xff]
    %v3570 = vld [vmem:[#allocation13 + $0x508] sm:$0xff]
    %v3571 = vld [vmem:[#allocation13 + $0x510] sm:$0xff]
    %v3572 = vld [vmem:[#allocation13 + $0x518] sm:$0xff]
    %v3573 = vld [vmem:[#allocation13 + $0x520] sm:$0xff]
    %v3574 = vld [vmem:[#allocation13 + $0x528] sm:$0xff]
    %v3575 = vld [vmem:[#allocation13 + $0x530] sm:$0xff]
    %v3576 = vld [vmem:[#allocation13 + $0x538] sm:$0xff]
    %v3577 = vld [vmem:[#allocation13 + $0x540] sm:$0xff]
    %v3578 = vld [vmem:[#allocation13 + $0x548] sm:$0xff]
    %v3579 = vld [vmem:[#allocation13 + $0x550] sm:$0xff]
    %v3580 = vld [vmem:[#allocation13 + $0x558] sm:$0xff]
    %v3581 = vld [vmem:[#allocation13 + $0x560] sm:$0xff]
    %v3582 = vld [vmem:[#allocation13 + $0x568] sm:$0xff]
    %v3583 = vld [vmem:[#allocation13 + $0x570] sm:$0xff]
    %v3584 = vld [vmem:[#allocation13 + $0x578] sm:$0xff]
    %v3585 = vld [vmem:[#allocation13 + $0x580] sm:$0xff]
    %v3586 = vld [vmem:[#allocation13 + $0x588] sm:$0xff]
    %v3587 = vld [vmem:[#allocation13 + $0x590] sm:$0xff]
    %v3588 = vld [vmem:[#allocation13 + $0x598] sm:$0xff]
    %v3589 = vld [vmem:[#allocation13 + $0x5a0] sm:$0xff]
    %v3590 = vld [vmem:[#allocation13 + $0x5a8] sm:$0xff]
    %v3591 = vld [vmem:[#allocation13 + $0x5b0] sm:$0xff]
    %v3592 = vld [vmem:[#allocation13 + $0x5b8] sm:$0xff]
    %v3593 = vld [vmem:[#allocation13 + $0x5c0] sm:$0xff]
    %v3594 = vld [vmem:[#allocation13 + $0x5c8] sm:$0xff]
    %v3595 = vld [vmem:[#allocation13 + $0x5d0] sm:$0xff]
    %v3596 = vld [vmem:[#allocation13 + $0x5d8] sm:$0xff]
    %v3597 = vld [vmem:[#allocation13 + $0x5e0] sm:$0xff]
    %v3598 = vld [vmem:[#allocation13 + $0x5e8] sm:$0xff]
    %v3599 = vld [vmem:[#allocation13 + $0x5f0] sm:$0xff]
    %v3600 = vld [vmem:[#allocation13 + $0x5f8] sm:$0xff]
    %v3601 = vld [vmem:[%s6] sm:$0x1]
    %v3603 = vperm.slane %v3601, 0
    %3605 = vmatpush.msra.mxu0 %v3424
    %3606 = vmatpush.msra.mxu0 %v3423
    %3607 = vmatpush.msra.mxu0 %v3422
    %3608 = vmatpush.msra.mxu0 %v3421
    %3609 = vmatpush.msra.mxu0 %v3420
    %3610 = vmatpush.msra.mxu0 %v3419
    %3611 = vmatpush.msra.mxu0 %v3418
    %3612 = vmatpush.msra.mxu0 %v3417
    %3613 = vmatpush.msra.mxu0 %v3416
    %3614 = vmatpush.msra.mxu0 %v3415
    %3615 = vmatpush.msra.mxu0 %v3414
    %3616 = vmatpush.msra.mxu0 %v3413
    %3617 = vmatpush.msra.mxu0 %v3412
    %3618 = vmatpush.msra.mxu0 %v3411
    %3619 = vmatpush.msra.mxu0 %v3410
    %3620 = vmatpush.msra.mxu0 %v3409
    %3621 = vmatmul.f32.gmra.mxu0 %v1077
    %v3622 = vpop.f32.mrf.mxu0
    %v3623 = vadd.f32 %v3603, %v3622
    %3624 = vdwg.mxu0
    %3625 = vmatpush.msra.mxu0 %v3440
    %3626 = vmatpush.msra.mxu0 %v3439
    %3627 = vmatpush.msra.mxu0 %v3438
    %3628 = vmatpush.msra.mxu0 %v3437
    %3629 = vmatpush.msra.mxu0 %v3436
    %3630 = vmatpush.msra.mxu0 %v3435
    %3631 = vmatpush.msra.mxu0 %v3434
    %3632 = vmatpush.msra.mxu0 %v3433
    %3633 = vmatpush.msra.mxu0 %v3432
    %3634 = vmatpush.msra.mxu0 %v3431
    %3635 = vmatpush.msra.mxu0 %v3430
    %3636 = vmatpush.msra.mxu0 %v3429
    %3637 = vmatpush.msra.mxu0 %v3428
    %3638 = vmatpush.msra.mxu0 %v3427
    %3639 = vmatpush.msra.mxu0 %v3426
    %3640 = vmatpush.msra.mxu0 %v3425
    %3641 = vmatmul.f32.gmra.mxu0 %v1078
    %v3642 = vpop.f32.mrf.mxu0
    %v3643 = vadd.f32 %v3623, %v3642
    %3644 = vdwg.mxu0
    %3645 = vmatpush.msra.mxu0 %v3456
    %3646 = vmatpush.msra.mxu0 %v3455
    %3647 = vmatpush.msra.mxu0 %v3454
    %3648 = vmatpush.msra.mxu0 %v3453
    %3649 = vmatpush.msra.mxu0 %v3452
    %3650 = vmatpush.msra.mxu0 %v3451
    %3651 = vmatpush.msra.mxu0 %v3450
    %3652 = vmatpush.msra.mxu0 %v3449
    %3653 = vmatpush.msra.mxu0 %v3448
    %3654 = vmatpush.msra.mxu0 %v3447
    %3655 = vmatpush.msra.mxu0 %v3446
    %3656 = vmatpush.msra.mxu0 %v3445
    %3657 = vmatpush.msra.mxu0 %v3444
    %3658 = vmatpush.msra.mxu0 %v3443
    %3659 = vmatpush.msra.mxu0 %v3442
    %3660 = vmatpush.msra.mxu0 %v3441
    %3661 = vmatmul.f32.gmra.mxu0 %v1543
    %v3662 = vpop.f32.mrf.mxu0
    %v3663 = vadd.f32 %v3643, %v3662
    %3664 = vdwg.mxu0
    %3665 = vmatpush.msra.mxu0 %v3472
    %3666 = vmatpush.msra.mxu0 %v3471
    %3667 = vmatpush.msra.mxu0 %v3470
    %3668 = vmatpush.msra.mxu0 %v3469
    %3669 = vmatpush.msra.mxu0 %v3468
    %3670 = vmatpush.msra.mxu0 %v3467
    %3671 = vmatpush.msra.mxu0 %v3466
    %3672 = vmatpush.msra.mxu0 %v3465
    %3673 = vmatpush.msra.mxu0 %v3464
    %3674 = vmatpush.msra.mxu0 %v3463
    %3675 = vmatpush.msra.mxu0 %v3462
    %3676 = vmatpush.msra.mxu0 %v3461
    %3677 = vmatpush.msra.mxu0 %v3460
    %3678 = vmatpush.msra.mxu0 %v3459
    %3679 = vmatpush.msra.mxu0 %v3458
    %3680 = vmatpush.msra.mxu0 %v3457
    %3681 = vmatmul.f32.gmra.mxu0 %v1544
    %v3682 = vpop.f32.mrf.mxu0
    %v3683 = vadd.f32 %v3663, %v3682
    %3684 = vdwg.mxu0
    %3685 = vmatpush.msra.mxu0 %v3488
    %3686 = vmatpush.msra.mxu0 %v3487
    %3687 = vmatpush.msra.mxu0 %v3486
    %3688 = vmatpush.msra.mxu0 %v3485
    %3689 = vmatpush.msra.mxu0 %v3484
    %3690 = vmatpush.msra.mxu0 %v3483
    %3691 = vmatpush.msra.mxu0 %v3482
    %3692 = vmatpush.msra.mxu0 %v3481
    %3693 = vmatpush.msra.mxu0 %v3480
    %3694 = vmatpush.msra.mxu0 %v3479
    %3695 = vmatpush.msra.mxu0 %v3478
    %3696 = vmatpush.msra.mxu0 %v3477
    %3697 = vmatpush.msra.mxu0 %v3476
    %3698 = vmatpush.msra.mxu0 %v3475
    %3699 = vmatpush.msra.mxu0 %v3474
    %3700 = vmatpush.msra.mxu0 %v3473
    %3701 = vmatmul.f32.gmra.mxu0 %v2009
    %v3702 = vpop.f32.mrf.mxu0
    %v3703 = vadd.f32 %v3683, %v3702
    %3704 = vdwg.mxu0
    %3705 = vmatpush.msra.mxu0 %v3504
    %3706 = vmatpush.msra.mxu0 %v3503
    %3707 = vmatpush.msra.mxu0 %v3502
    %3708 = vmatpush.msra.mxu0 %v3501
    %3709 = vmatpush.msra.mxu0 %v3500
    %3710 = vmatpush.msra.mxu0 %v3499
    %3711 = vmatpush.msra.mxu0 %v3498
    %3712 = vmatpush.msra.mxu0 %v3497
    %3713 = vmatpush.msra.mxu0 %v3496
    %3714 = vmatpush.msra.mxu0 %v3495
    %3715 = vmatpush.msra.mxu0 %v3494
    %3716 = vmatpush.msra.mxu0 %v3493
    %3717 = vmatpush.msra.mxu0 %v3492
    %3718 = vmatpush.msra.mxu0 %v3491
    %3719 = vmatpush.msra.mxu0 %v3490
    %3720 = vmatpush.msra.mxu0 %v3489
    %3721 = vmatmul.f32.gmra.mxu0 %v2010
    %v3722 = vpop.f32.mrf.mxu0
    %v3723 = vadd.f32 %v3703, %v3722
    %3724 = vdwg.mxu0
    %3725 = vmatpush.msra.mxu0 %v3520
    %3726 = vmatpush.msra.mxu0 %v3519
    %3727 = vmatpush.msra.mxu0 %v3518
    %3728 = vmatpush.msra.mxu0 %v3517
    %3729 = vmatpush.msra.mxu0 %v3516
    %3730 = vmatpush.msra.mxu0 %v3515
    %3731 = vmatpush.msra.mxu0 %v3514
    %3732 = vmatpush.msra.mxu0 %v3513
    %3733 = vmatpush.msra.mxu0 %v3512
    %3734 = vmatpush.msra.mxu0 %v3511
    %3735 = vmatpush.msra.mxu0 %v3510
    %3736 = vmatpush.msra.mxu0 %v3509
    %3737 = vmatpush.msra.mxu0 %v3508
    %3738 = vmatpush.msra.mxu0 %v3507
    %3739 = vmatpush.msra.mxu0 %v3506
    %3740 = vmatpush.msra.mxu0 %v3505
    %3741 = vmatmul.f32.gmra.mxu0 %v2475
    %v3742 = vpop.f32.mrf.mxu0
    %v3743 = vadd.f32 %v3723, %v3742
    %3744 = vdwg.mxu0
    %3745 = vmatpush.msra.mxu0 %v3536
    %3746 = vmatpush.msra.mxu0 %v3535
    %3747 = vmatpush.msra.mxu0 %v3534
    %3748 = vmatpush.msra.mxu0 %v3533
    %3749 = vmatpush.msra.mxu0 %v3532
    %3750 = vmatpush.msra.mxu0 %v3531
    %3751 = vmatpush.msra.mxu0 %v3530
    %3752 = vmatpush.msra.mxu0 %v3529
    %3753 = vmatpush.msra.mxu0 %v3528
    %3754 = vmatpush.msra.mxu0 %v3527
    %3755 = vmatpush.msra.mxu0 %v3526
    %3756 = vmatpush.msra.mxu0 %v3525
    %3757 = vmatpush.msra.mxu0 %v3524
    %3758 = vmatpush.msra.mxu0 %v3523
    %3759 = vmatpush.msra.mxu0 %v3522
    %3760 = vmatpush.msra.mxu0 %v3521
    %3761 = vmatmul.f32.gmra.mxu0 %v2476
    %v3762 = vpop.f32.mrf.mxu0
    %v3763 = vadd.f32 %v3743, %v3762
    %3764 = vdwg.mxu0
    %3765 = vmatpush.msra.mxu0 %v3552
    %3766 = vmatpush.msra.mxu0 %v3551
    %3767 = vmatpush.msra.mxu0 %v3550
    %3768 = vmatpush.msra.mxu0 %v3549
    %3769 = vmatpush.msra.mxu0 %v3548
    %3770 = vmatpush.msra.mxu0 %v3547
    %3771 = vmatpush.msra.mxu0 %v3546
    %3772 = vmatpush.msra.mxu0 %v3545
    %3773 = vmatpush.msra.mxu0 %v3544
    %3774 = vmatpush.msra.mxu0 %v3543
    %3775 = vmatpush.msra.mxu0 %v3542
    %3776 = vmatpush.msra.mxu0 %v3541
    %3777 = vmatpush.msra.mxu0 %v3540
    %3778 = vmatpush.msra.mxu0 %v3539
    %3779 = vmatpush.msra.mxu0 %v3538
    %3780 = vmatpush.msra.mxu0 %v3537
    %3781 = vmatmul.f32.gmra.mxu0 %v2941
    %v3782 = vpop.f32.mrf.mxu0
    %v3783 = vadd.f32 %v3763, %v3782
    %3784 = vdwg.mxu0
    %3785 = vmatpush.msra.mxu0 %v3568
    %3786 = vmatpush.msra.mxu0 %v3567
    %3787 = vmatpush.msra.mxu0 %v3566
    %3788 = vmatpush.msra.mxu0 %v3565
    %3789 = vmatpush.msra.mxu0 %v3564
    %3790 = vmatpush.msra.mxu0 %v3563
    %3791 = vmatpush.msra.mxu0 %v3562
    %3792 = vmatpush.msra.mxu0 %v3561
    %3793 = vmatpush.msra.mxu0 %v3560
    %3794 = vmatpush.msra.mxu0 %v3559
    %3795 = vmatpush.msra.mxu0 %v3558
    %3796 = vmatpush.msra.mxu0 %v3557
    %3797 = vmatpush.msra.mxu0 %v3556
    %3798 = vmatpush.msra.mxu0 %v3555
    %3799 = vmatpush.msra.mxu0 %v3554
    %3800 = vmatpush.msra.mxu0 %v3553
    %3801 = vmatmul.f32.gmra.mxu0 %v2942
    %v3802 = vpop.f32.mrf.mxu0
    %v3803 = vadd.f32 %v3783, %v3802
    %3804 = vdwg.mxu0
    %3805 = vmatpush.msra.mxu0 %v3584
    %3806 = vmatpush.msra.mxu0 %v3583
    %3807 = vmatpush.msra.mxu0 %v3582
    %3808 = vmatpush.msra.mxu0 %v3581
    %3809 = vmatpush.msra.mxu0 %v3580
    %3810 = vmatpush.msra.mxu0 %v3579
    %3811 = vmatpush.msra.mxu0 %v3578
    %3812 = vmatpush.msra.mxu0 %v3577
    %3813 = vmatpush.msra.mxu0 %v3576
    %3814 = vmatpush.msra.mxu0 %v3575
    %3815 = vmatpush.msra.mxu0 %v3574
    %3816 = vmatpush.msra.mxu0 %v3573
    %3817 = vmatpush.msra.mxu0 %v3572
    %3818 = vmatpush.msra.mxu0 %v3571
    %3819 = vmatpush.msra.mxu0 %v3570
    %3820 = vmatpush.msra.mxu0 %v3569
    %3821 = vmatmul.f32.gmra.mxu0 %v3407
    %v3822 = vpop.f32.mrf.mxu0
    %v3823 = vadd.f32 %v3803, %v3822
    %3824 = vdwg.mxu0
    %3825 = vmatpush.msra.mxu0 %v3600
    %3826 = vmatpush.msra.mxu0 %v3599
    %3827 = vmatpush.msra.mxu0 %v3598
    %3828 = vmatpush.msra.mxu0 %v3597
    %3829 = vmatpush.msra.mxu0 %v3596
    %3830 = vmatpush.msra.mxu0 %v3595
    %3831 = vmatpush.msra.mxu0 %v3594
    %3832 = vmatpush.msra.mxu0 %v3593
    %3833 = vmatpush.msra.mxu0 %v3592
    %3834 = vmatpush.msra.mxu0 %v3591
    %3835 = vmatpush.msra.mxu0 %v3590
    %3836 = vmatpush.msra.mxu0 %v3589
    %3837 = vmatpush.msra.mxu0 %v3588
    %3838 = vmatpush.msra.mxu0 %v3587
    %3839 = vmatpush.msra.mxu0 %v3586
    %3840 = vmatpush.msra.mxu0 %v3585
    %3841 = vmatmul.f32.gmra.mxu0 %v3408
    %v3842 = vpop.f32.mrf.mxu0
    %v3843 = vadd.f32 %v3823, %v3842
    %3844 = vdwg.mxu0
    %v3845 = vlaneseq
    %v3846 = vand.u32 %v3845, 127
    %vm3847 = vcmp.ge.s32.totalorder %v3846, 8
    %vm3848 = vcmp.lt.s32.totalorder %v3846, 16
    %vm3849 = vmand %vm3847, %vm3848
    %v3850 = vmul.f32 %v3843, 1.442695
    %v3851 = vpow.pop %v3850
    %v3852 = vsel %vm3849, %v3851, %v3843
    %3853 = vst [vmem:[#allocation15] sm:$0xff] %v3852
    // Predicated region
    $region54: #{tpu_custom_call.1} parent=1 // pred_check
      _
    $region55: #{tpu_custom_call.1} parent=1 // pred_check_branch
      %3855 = sbr.rel (0) target = $region57
    $region56: #{tpu_custom_call.1} parent=1 // pred_region
      %3857 = vsyncadd [#allocation4], 0
      %s3859 = sshll.u32 [#allocation15], 4
      %s3860 = int_to_ptr.vmem [resolvable:$true] %s3859
      %s3861 = sshll.u32 %s7, 4
      %s3862 = int_to_ptr.hbm [resolvable:$true] %s3861
      %3864 = dma.vmem_to_hbm [thread:$0]  %s3860, 128, %s3862, [#allocation4]
    $region57: #{tpu_custom_call.1} parent=1 // pred_fallthru
      _
    // Predicated region
    $region58: #{tpu_custom_call.1} parent=1 // pred_check
      _
    $region59: #{tpu_custom_call.1} parent=1 // pred_check_branch
      %3866 = sbr.rel (0) target = $region61
    $region60: #{tpu_custom_call.1} parent=1 // pred_region
      %3868 = dma.done [#allocation4], 128
    $region61: #{tpu_custom_call.1} parent=1 // pred_fallthru
      _
    %3869 = vsyncpa [#allocation3], 1
    %3870 = vsyncpa [#allocation14], 1
    %3871 = vsyncpa [#allocation4], 1
    %3872 = vsyncpa [#allocation5], 1
    %3873 = vsyncpa [#allocation9], 1
    %3874 = vsyncpa [#allocation6], 1
    %3875 = vsyncpa [#allocation12], 1

</llo_original>
